<compile_context>
chip_gen: v7x
topology: tpu7x:2x2x1
jax: 0.10.0
libtpu: 0.0.40
codegen_flags: <defaults>
</compile_context>

<pallas_src>
import functools
import math

import jax
import jax.numpy as jnp
from jax.experimental import pallas as pl
from jax.experimental.pallas import tpu as pltpu

_STRIDES = (2, 1, 1, 1)            # DrQ pixel encoder: 4 conv3x3 layers
_VMEM_LIMIT = 48 * 1024 * 1024     # safe on v5e/v6e (128 MiB) and v7x (64 MiB)


def _pick_batch_tile(B, pref):
    """Largest tile <= pref that divides B and keeps BlockSpec rules happy
    (tile % 8 == 0 or tile == B, since the tile lands on a second-minor dim)."""
    if B <= pref:
        return B
    for t in range(min(pref, B), 0, -1):
        if B % t == 0 and t % 8 == 0:
            return t
    return B


# --------------------------------------------------------------------------
# Kernel A: fused conv stack (one grid step == B_TILE images)
# --------------------------------------------------------------------------
def _conv_kernel(p_ref, w1_ref, b1_ref, w2_ref, b2_ref, w3_ref, b3_ref,
                 w4_ref, b4_ref, out_ref, hs_ref, hc_ref, *,
                 n1, row_w, b_tile, n4):
    f32 = jnp.float32
    nf = w1_ref.shape[-1]
    shrink = 2 * row_w + 2
    offs = tuple(di * row_w + dj for di in range(3) for dj in range(3))

    # conv1 (stride 2): one matmul on pre-gathered taps (+ReLU). 1/255 is
    # folded into w1 at prep time.  M = b_tile*n1 rows (all images stacked).
    h = jnp.dot(p_ref[...], w1_ref[...], preferred_element_type=f32) + b1_ref[...]
    hs_ref[...] = jnp.maximum(h, 0.0)

    # conv2..conv4 (stride 1): K-concat the 9 shifted row-slices into the hc
    # scratch and do ONE [M, 9*nf] x [9*nf, nf] matmul per layer.  Margin /
    # cross-image garbage rows only ever feed later garbage rows and are
    # zero-weighted by the padded fc weight downstream.
    cur = b_tile * n1
    h_out = None
    layers = ((w2_ref, b2_ref), (w3_ref, b3_ref), (w4_ref, b4_ref))
    for li, (w_ref, b_ref) in enumerate(layers):
        n_out = cur - shrink
        for t, off in enumerate(offs):
            hc_ref[pl.ds(0, n_out), pl.ds(t * nf, nf)] = hs_ref[pl.ds(off, n_out), :]
        acc = jnp.dot(hc_ref[pl.ds(0, n_out), :], w_ref[...],
                      preferred_element_type=f32)
        h_out = jnp.maximum(acc + b_ref[...], 0.0)
        if li != len(layers) - 1:
            hs_ref[pl.ds(0, n_out), :] = h_out
        cur = n_out

    # Per-image extraction of the conv4 slab (valid region + small margin).
    for i in range(b_tile):
        out_ref[i, :, :] = h_out[i * n1:i * n1 + n4, :]


def conv_stack_forward(enc, obs, b_tile_pref=8):
    B, C, H, W = obs.shape
    h1, w1 = (H - 3) // 2 + 1, (W - 3) // 2 + 1
    out_h, out_w = h1 - 6, w1 - 6
    assert out_h >= 1 and out_w >= 1, "observation too small for 4 conv layers"
    n1 = h1 * w1
    shrink = 2 * w1 + 2
    n4 = n1 - 3 * shrink
    nf = enc['conv1_b'].shape[-1]
    bt = _pick_batch_tile(B, b_tile_pref)

    # Tap gather for the stride-2 first conv only (tiny raw obs, once in XLA);
    # downstream everything is channels-last rows inside the fused kernel.
    x = jnp.transpose(obs, (0, 2, 3, 1))                   # NCHW -> NHWC (once)
    taps = [x[:, di:di + 2 * h1 - 1:2, dj:dj + 2 * w1 - 1:2, :]
            for di in range(3) for dj in range(3)]
    patches = jnp.concatenate(taps, axis=-1).reshape(B * n1, 9 * C)

    weights = (enc['conv1_w'], enc['conv1_b'], enc['conv2_w'], enc['conv2_b'],
               enc['conv3_w'], enc['conv3_b'], enc['conv4_w'], enc['conv4_b'])

    out = pl.pallas_call(
        functools.partial(_conv_kernel, n1=n1, row_w=w1, b_tile=bt, n4=n4),
        grid=(B // bt,),
        in_specs=[pl.BlockSpec((bt * n1, 9 * C), lambda t: (t, 0))]
                 + [pl.BlockSpec(w.shape, lambda t: (0, 0)) for w in weights],
        out_specs=pl.BlockSpec((bt, n4, nf), lambda t: (t, 0, 0)),
        out_shape=jax.ShapeDtypeStruct((B, n4, nf), jnp.float32),
        scratch_shapes=[pltpu.VMEM((bt * n1, nf), jnp.float32),
                        pltpu.VMEM((bt * n1, 9 * nf), jnp.float32)],
        compiler_params=pltpu.CompilerParams(
            dimension_semantics=("parallel",),
            vmem_limit_bytes=_VMEM_LIMIT),
    )(patches, *weights)
    return out                                              # [B, n4, nf]


# --------------------------------------------------------------------------
# Kernel B: fc + LayerNorm + tanh + twin-Q head (fused)
# --------------------------------------------------------------------------
def _head_kernel(h_ref, a_ref, fcw_ref, fcb_ref, g_ref, beta_ref,
                 w0z_ref, w0a_ref, b0_ref, w11_ref, b11_ref, w12_ref, b12_ref,
                 w2_ref, b2_ref, q_ref, *, hid):
    f32 = jnp.float32

    # fc: single matmul over the zero-padded flattened conv4 slab.
    z = jnp.dot(h_ref[...], fcw_ref[...], preferred_element_type=f32) + fcb_ref[...]

    # LayerNorm (eps=1e-5, biased variance) + tanh, f32.
    mean = jnp.mean(z, axis=-1, keepdims=True)
    var = jnp.mean((z - mean) ** 2, axis=-1, keepdims=True)
    z = jnp.tanh((z - mean) * jax.lax.rsqrt(var + 1e-5) * g_ref[...] + beta_ref[...])

    # Twin-Q: layer-0 weights of both heads N-concatenated -> [B, 2H].
    h0 = (jnp.dot(z, w0z_ref[...], preferred_element_type=f32)
          + jnp.dot(a_ref[...], w0a_ref[...], preferred_element_type=f32)
          + b0_ref[...])
    h0 = jnp.maximum(h0, 0.0)
    h1a = jnp.maximum(jnp.dot(h0[:, :hid], w11_ref[...],
                              preferred_element_type=f32) + b11_ref[...], 0.0)
    h1b = jnp.maximum(jnp.dot(h0[:, hid:], w12_ref[...],
                              preferred_element_type=f32) + b12_ref[...], 0.0)

    # Final out_dim=1 layers as VPU lane reductions; single [B, 2] store.
    q1 = jnp.sum(h1a * w2_ref[0:1, :], axis=-1, keepdims=True)
    q2 = jnp.sum(h1b * w2_ref[1:2, :], axis=-1, keepdims=True)
    q_ref[...] = jnp.concatenate([q1, q2], axis=-1) + b2_ref[...]


def head_forward(head, hflat, action, b_tile_pref=64):
    B, kfc = hflat.shape
    A = action.shape[-1]
    hid = head['b1_q1'].shape[-1]
    bt = _pick_batch_tile(B, b_tile_pref)

    weights = (head['fc_w'], head['fc_b'], head['ln_g'], head['ln_b'],
               head['w0z'], head['w0a'], head['b0'],
               head['w1_q1'], head['b1_q1'], head['w1_q2'], head['b1_q2'],
               head['w2'], head['b2'])

    q = pl.pallas_call(
        functools.partial(_head_kernel, hid=hid),
        grid=(B // bt,),
        in_specs=[pl.BlockSpec((bt, kfc), lambda t: (t, 0)),
                  pl.BlockSpec((bt, A), lambda t: (t, 0))]
                 + [pl.BlockSpec(w.shape, lambda t: (0, 0)) for w in weights],
        out_specs=pl.BlockSpec((bt, 2), lambda t: (t, 0)),
        out_shape=jax.ShapeDtypeStruct((B, 2), jnp.float32),
        compiler_params=pltpu.CompilerParams(
            dimension_semantics=("parallel",),
            vmem_limit_bytes=_VMEM_LIMIT),
    )(hflat, action, *weights)
    return q                                                # [B, 2]


def critic_forward(prep, obs, action, detach_encoder=False):
    assert obs.shape[0] == action.shape[0]
    B = obs.shape[0]
    feats = conv_stack_forward(prep['encoder'], obs)        # [B, n4, nf]
    if detach_encoder:
        # Forward value identical; kernels are forward-only (no custom VJP).
        feats = jax.lax.stop_gradient(feats)
    hflat = feats.reshape(B, -1)                            # pure bitcast
    q = head_forward(prep['head'], hflat, action)
    return q[:, 0:1], q[:, 1:2]


# --------------------------------------------------------------------------
# Parameters: PyTorch layouts at init, one-time static re-layout for kernels
# --------------------------------------------------------------------------
def _uniform(key, shape, bound):
    return jax.random.uniform(key, shape, jnp.float32, -bound, bound)


def init_params(key, obs_shape, action_dim, feature_dim, hidden_dim, num_filters=32):
    """Parameters in PyTorch layouts (Conv2d OIHW, Linear [out,in], NCHW flatten)."""
    C, H, W = obs_shape
    keys = jax.random.split(key, 12)
    ki = iter(keys)

    convs = []
    in_c, h, w = C, H, W
    for s in _STRIDES:
        bound = 1.0 / math.sqrt(in_c * 9)
        convs.append((_uniform(next(ki), (num_filters, in_c, 3, 3), bound),
                      _uniform(next(ki), (num_filters,), bound)))
        h, w = (h - 3) // s + 1, (w - 3) // s + 1
        in_c = num_filters

    flat_dim = num_filters * h * w
    bound = 1.0 / math.sqrt(flat_dim)
    encoder = dict(convs=convs,
                   fc_w=_uniform(next(ki), (feature_dim, flat_dim), bound),
                   fc_b=_uniform(next(ki), (feature_dim,), bound),
                   ln_g=jnp.ones((feature_dim,), jnp.float32),
                   ln_b=jnp.zeros((feature_dim,), jnp.float32))

    def mlp(k, d_in, d_hid, d_out):
        ks = jax.random.split(k, 6)

        def lin(kw, kb, di, do):
            b = 1.0 / math.sqrt(di)
            return (_uniform(kw, (do, di), b), _uniform(kb, (do,), b))

        return (lin(ks[0], ks[1], d_in, d_hid),
                lin(ks[2], ks[3], d_hid, d_hid),
                lin(ks[4], ks[5], d_hid, d_out))

    q1 = mlp(next(ki), feature_dim + action_dim, hidden_dim, 1)
    q2 = mlp(next(ki), feature_dim + action_dim, hidden_dim, 1)
    return dict(encoder=encoder, Q1=q1, Q2=q2)


def prepare_params(params, obs_shape):
    """Static, one-time re-layout of PyTorch-layout params for the kernels.
    Folds: 1/255 into conv1, per-layer tap K-concat, NCHW flatten order +
    margin zero-padding into fc, twin-Q layer-0 N-concat."""
    C, H, W = obs_shape
    h1, w1 = (H - 3) // 2 + 1, (W - 3) // 2 + 1
    out_h, out_w = h1 - 6, w1 - 6
    n1 = h1 * w1
    shrink = 2 * w1 + 2
    n4 = n1 - 3 * shrink
    enc = params['encoder']
    (cw1, cb1), (cw2, cb2), (cw3, cb3), (cw4, cb4) = enc['convs']
    nf = cw1.shape[0]
    feat = enc['fc_w'].shape[0]

    def kcat(w):  # [OC, IC, 3, 3] -> [9*IC, OC], row = (kh*3 + kw)*IC + ic
        return jnp.transpose(w, (2, 3, 1, 0)).reshape(9 * w.shape[1], w.shape[0])

    p_enc = dict(
        conv1_w=kcat(cw1) * (1.0 / 255.0),
        conv1_b=cb1.reshape(1, nf),
        conv2_w=kcat(cw2), conv2_b=cb2.reshape(1, nf),
        conv3_w=kcat(cw3), conv3_b=cb3.reshape(1, nf),
        conv4_w=kcat(cw4), conv4_b=cb4.reshape(1, nf),
    )

    # fc: [feat, nf*out_h*out_w] (PyTorch NCHW flatten) -> zero-padded over the
    # flattened conv4 slab [n4, nf, feat] (valid pos p = i*w1 + j) -> one
    # [n4*nf, feat] matmul weight.
    w4d = enc['fc_w'].reshape(feat, nf, out_h, out_w).transpose(2, 3, 1, 0)
    pos = (jnp.arange(out_h)[:, None] * w1 + jnp.arange(out_w)[None, :]).reshape(-1)
    fc_pad = jnp.zeros((n4, nf, feat), jnp.float32).at[pos].set(
        w4d.reshape(out_h * out_w, nf, feat))

    (w0_1, b0_1), (w1_1, b1_1), (w2_1, b2_1) = params['Q1']
    (w0_2, b0_2), (w1_2, b1_2), (w2_2, b2_2) = params['Q2']
    hid = b0_1.shape[0]

    head = dict(
        fc_w=fc_pad.reshape(n4 * nf, feat),
        fc_b=enc['fc_b'].reshape(1, feat),
        ln_g=enc['ln_g'].reshape(1, feat),
        ln_b=enc['ln_b'].reshape(1, feat),
        w0z=jnp.concatenate([w0_1[:, :feat].T, w0_2[:, :feat].T], axis=1),  # [feat, 2H]
        w0a=jnp.concatenate([w0_1[:, feat:].T, w0_2[:, feat:].T], axis=1),  # [A, 2H]
        b0=jnp.concatenate([b0_1, b0_2]).reshape(1, 2 * hid),
        w1_q1=w1_1.T, b1_q1=b1_1.reshape(1, hid),
        w1_q2=w1_2.T, b1_q2=b1_2.reshape(1, hid),
        w2=jnp.concatenate([w2_1, w2_2], axis=0),                           # [2, H]
        b2=jnp.concatenate([b2_1, b2_2]).reshape(1, 2),
    )
    return dict(encoder=p_enc, head=head)


# --------------------------------------------------------------------------
# Pure-JAX reference (PyTorch-layout params / PyTorch semantics)
# --------------------------------------------------------------------------
def reference_forward(params, obs, action):
    hp = jax.lax.Precision.HIGHEST
    x = obs / 255.0
    for (w, b), s in zip(params['encoder']['convs'], _STRIDES):
        x = jax.lax.conv_general_dilated(
            x, w, window_strides=(s, s), padding='VALID',
            dimension_numbers=('NCHW', 'OIHW', 'NCHW'), precision=hp)
        x = jnp.maximum(x + b[None, :, None, None], 0.0)
    x = x.reshape(x.shape[0], -1)
    enc = params['encoder']
    z = jnp.dot(x, enc['fc_w'].T, precision=hp) + enc['fc_b']
    mean = jnp.mean(z, -1, keepdims=True)
    var = jnp.mean((z - mean) ** 2, -1, keepdims=True)
    z = jnp.tanh((z - mean) * jax.lax.rsqrt(var + 1e-5) * enc['ln_g'] + enc['ln_b'])
    oa = jnp.concatenate([z, action], axis=-1)

    def mlp(p, x):
        (w0, b0), (w1, b1), (w2, b2) = p
        h = jnp.maximum(jnp.dot(x, w0.T, precision=hp) + b0, 0.0)
        h = jnp.maximum(jnp.dot(h, w1.T, precision=hp) + b1, 0.0)
        return jnp.dot(h, w2.T, precision=hp) + b2

    return mlp(params['Q1'], oa), mlp(params['Q2'], oa)


# --------------------------------------------------------------------------
# demo
# --------------------------------------------------------------------------
if __name__ == "__main__":
    key = jax.random.PRNGKey(0)
    k_obs, k_act, k_par = jax.random.split(key, 3)

    B, C, H, W = 2, 4, 20, 20          # small NCHW pixel observation
    action_dim, feature_dim, hidden_dim = 6, 32, 32

    obs = jax.random.uniform(k_obs, (B, C, H, W), jnp.float32, 0.0, 255.0)
    action = jax.random.uniform(k_act, (B, action_dim), jnp.float32, -1.0, 1.0)

    params = init_params(k_par, (C, H, W), action_dim, feature_dim, hidden_dim)
    prepared = prepare_params(params, (C, H, W))

    fwd = jax.jit(critic_forward)
    q1, q2 = fwd(prepared, obs, action)
    jax.block_until_ready((q1, q2))

    assert q1.shape == (B, 1) and q2.shape == (B, 1)
    assert q1.dtype == jnp.float32 and q2.dtype == jnp.float32

    # Check against a plain-JAX (PyTorch-semantics) reference.  Everything in
    # the kernels is f32, so the tolerance is ~100x tighter than before
    # (f32 accumulation-order noise is ~1e-5 here); any tap-order / flatten-
    # order / padding mistake would blow this up by orders of magnitude.
    q1_ref, q2_ref = reference_forward(params, obs, action)
    assert jnp.allclose(q1, q1_ref, atol=1e-4, rtol=1e-3), (q1, q1_ref)
    assert jnp.allclose(q2, q2_ref, atol=1e-4, rtol=1e-3), (q2, q2_ref)

    print("KERNEL_OK")
</pallas_src>

<mosaic_0001>
module attributes {stable_mosaic.version = 11 : i64} {
  func.func @_conv_kernel(%arg0: i32, %arg1: memref<162x36xf32, #tpu.memory_space<vmem>>, %arg2: memref<36x32xf32, #tpu.memory_space<vmem>>, %arg3: memref<1x32xf32, #tpu.memory_space<vmem>>, %arg4: memref<288x32xf32, #tpu.memory_space<vmem>>, %arg5: memref<1x32xf32, #tpu.memory_space<vmem>>, %arg6: memref<288x32xf32, #tpu.memory_space<vmem>>, %arg7: memref<1x32xf32, #tpu.memory_space<vmem>>, %arg8: memref<288x32xf32, #tpu.memory_space<vmem>>, %arg9: memref<1x32xf32, #tpu.memory_space<vmem>>, %arg10: memref<2x21x32xf32, #tpu.memory_space<vmem>>, %arg11: memref<162x32xf32, #tpu.memory_space<vmem>>, %arg12: memref<162x288xf32, #tpu.memory_space<vmem>>) attributes {dimension_semantics = [#tpu.dimension_semantics<parallel>], iteration_bounds = array<i64: 1>, scalar_prefetch = 0 : i64, scratch_operands = 2 : i64, tpu.core_type = #tpu.core_type<tc>, window_params = [{transform_indices = @transform_0, window_bounds = array<i64: 162, 36>}, {pipeline_mode = #tpu.pipeline_mode<synchronous>, transform_indices = @transform_1, window_bounds = array<i64: 36, 32>}, {pipeline_mode = #tpu.pipeline_mode<synchronous>, transform_indices = @transform_2, window_bounds = array<i64: 1, 32>}, {pipeline_mode = #tpu.pipeline_mode<synchronous>, transform_indices = @transform_3, window_bounds = array<i64: 288, 32>}, {pipeline_mode = #tpu.pipeline_mode<synchronous>, transform_indices = @transform_4, window_bounds = array<i64: 1, 32>}, {pipeline_mode = #tpu.pipeline_mode<synchronous>, transform_indices = @transform_5, window_bounds = array<i64: 288, 32>}, {pipeline_mode = #tpu.pipeline_mode<synchronous>, transform_indices = @transform_6, window_bounds = array<i64: 1, 32>}, {pipeline_mode = #tpu.pipeline_mode<synchronous>, transform_indices = @transform_7, window_bounds = array<i64: 288, 32>}, {pipeline_mode = #tpu.pipeline_mode<synchronous>, transform_indices = @transform_8, window_bounds = array<i64: 1, 32>}, {transform_indices = @transform_9, window_bounds = array<i64: 2, 21, 32>}]} {
    %c0 = arith.constant 0 : index
    %c0_0 = arith.constant 0 : index
    %0 = vector.load %arg1[%c0, %c0_0] : memref<162x36xf32, #tpu.memory_space<vmem>>, vector<162x36xf32>
    %c0_1 = arith.constant 0 : index
    %c0_2 = arith.constant 0 : index
    %1 = vector.load %arg2[%c0_1, %c0_2] : memref<36x32xf32, #tpu.memory_space<vmem>>, vector<36x32xf32>
    %cst = arith.constant dense<0.000000e+00> : vector<162x32xf32>
    %2 = tpu.matmul %0, %1, %cst {dimension_numbers = #tpu.dot_dimension_numbers<[1], [0], [0], [1], [0, 0, 1, 1], [], []>} : vector<162x36xf32>, vector<36x32xf32>, vector<162x32xf32> -> vector<162x32xf32>
    %c0_3 = arith.constant 0 : index
    %c0_4 = arith.constant 0 : index
    %3 = vector.load %arg3[%c0_3, %c0_4] : memref<1x32xf32, #tpu.memory_space<vmem>>, vector<1x32xf32>
    %4 = vector.broadcast %3 : vector<1x32xf32> to vector<162x32xf32>
    %5 = arith.addf %2, %4 : vector<162x32xf32>
    %cst_5 = arith.constant 0.000000e+00 : f32
    %6 = vector.broadcast %cst_5 : f32 to vector<162x32xf32>
    %7 = arith.maximumf %5, %6 : vector<162x32xf32>
    %c0_6 = arith.constant 0 : index
    %c0_7 = arith.constant 0 : index
    %8 = vector.load %arg11[%c0_6, %c0_7] : memref<162x32xf32, #tpu.memory_space<vmem>>, vector<162x32xf32>
    tpu.vector_store %arg11[%c0_6, %c0_7], %7 {strides = array<i32>} : memref<162x32xf32, #tpu.memory_space<vmem>>, vector<162x32xf32>,
    %c0_8 = arith.constant 0 : index
    %c0_9 = arith.constant 0 : index
    %9 = vector.load %arg11[%c0_8, %c0_9] : memref<162x32xf32, #tpu.memory_space<vmem>>, vector<142x32xf32>
    %c0_10 = arith.constant 0 : index
    %c0_11 = arith.constant 0 : index
    %10 = vector.load %arg12[%c0_10, %c0_11] : memref<162x288xf32, #tpu.memory_space<vmem>>, vector<142x32xf32>
    tpu.vector_store %arg12[%c0_10, %c0_11], %9 {strides = array<i32>} : memref<162x288xf32, #tpu.memory_space<vmem>>, vector<142x32xf32>,
    %c1 = arith.constant 1 : index
    %c0_12 = arith.constant 0 : index
    %11 = vector.load %arg11[%c1, %c0_12] : memref<162x32xf32, #tpu.memory_space<vmem>>, vector<142x32xf32>
    %c0_13 = arith.constant 0 : index
    %c32 = arith.constant 32 : index
    %12 = vector.load %arg12[%c0_13, %c32] : memref<162x288xf32, #tpu.memory_space<vmem>>, vector<142x32xf32>
    tpu.vector_store %arg12[%c0_13, %c32], %11 {strides = array<i32>} : memref<162x288xf32, #tpu.memory_space<vmem>>, vector<142x32xf32>,
    %c2 = arith.constant 2 : index
    %c0_14 = arith.constant 0 : index
    %13 = vector.load %arg11[%c2, %c0_14] : memref<162x32xf32, #tpu.memory_space<vmem>>, vector<142x32xf32>
    %c0_15 = arith.constant 0 : index
    %c64 = arith.constant 64 : index
    %14 = vector.load %arg12[%c0_15, %c64] : memref<162x288xf32, #tpu.memory_space<vmem>>, vector<142x32xf32>
    tpu.vector_store %arg12[%c0_15, %c64], %13 {strides = array<i32>} : memref<162x288xf32, #tpu.memory_space<vmem>>, vector<142x32xf32>,
    %c9 = arith.constant 9 : index
    %c0_16 = arith.constant 0 : index
    %15 = vector.load %arg11[%c9, %c0_16] : memref<162x32xf32, #tpu.memory_space<vmem>>, vector<142x32xf32>
    %c0_17 = arith.constant 0 : index
    %c96 = arith.constant 96 : index
    %16 = vector.load %arg12[%c0_17, %c96] : memref<162x288xf32, #tpu.memory_space<vmem>>, vector<142x32xf32>
    tpu.vector_store %arg12[%c0_17, %c96], %15 {strides = array<i32>} : memref<162x288xf32, #tpu.memory_space<vmem>>, vector<142x32xf32>,
    %c10 = arith.constant 10 : index
    %c0_18 = arith.constant 0 : index
    %17 = vector.load %arg11[%c10, %c0_18] : memref<162x32xf32, #tpu.memory_space<vmem>>, vector<142x32xf32>
    %c0_19 = arith.constant 0 : index
    %c128 = arith.constant 128 : index
    %18 = vector.load %arg12[%c0_19, %c128] : memref<162x288xf32, #tpu.memory_space<vmem>>, vector<142x32xf32>
    tpu.vector_store %arg12[%c0_19, %c128], %17 {strides = array<i32>} : memref<162x288xf32, #tpu.memory_space<vmem>>, vector<142x32xf32>,
    %c11 = arith.constant 11 : index
    %c0_20 = arith.constant 0 : index
    %19 = vector.load %arg11[%c11, %c0_20] : memref<162x32xf32, #tpu.memory_space<vmem>>, vector<142x32xf32>
    %c0_21 = arith.constant 0 : index
    %c160 = arith.constant 160 : index
    %20 = vector.load %arg12[%c0_21, %c160] : memref<162x288xf32, #tpu.memory_space<vmem>>, vector<142x32xf32>
    tpu.vector_store %arg12[%c0_21, %c160], %19 {strides = array<i32>} : memref<162x288xf32, #tpu.memory_space<vmem>>, vector<142x32xf32>,
    %c18 = arith.constant 18 : index
    %c0_22 = arith.constant 0 : index
    %21 = vector.load %arg11[%c18, %c0_22] : memref<162x32xf32, #tpu.memory_space<vmem>>, vector<142x32xf32>
    %c0_23 = arith.constant 0 : index
    %c192 = arith.constant 192 : index
    %22 = vector.load %arg12[%c0_23, %c192] : memref<162x288xf32, #tpu.memory_space<vmem>>, vector<142x32xf32>
    tpu.vector_store %arg12[%c0_23, %c192], %21 {strides = array<i32>} : memref<162x288xf32, #tpu.memory_space<vmem>>, vector<142x32xf32>,
    %c19 = arith.constant 19 : index
    %c0_24 = arith.constant 0 : index
    %23 = vector.load %arg11[%c19, %c0_24] : memref<162x32xf32, #tpu.memory_space<vmem>>, vector<142x32xf32>
    %c0_25 = arith.constant 0 : index
    %c224 = arith.constant 224 : index
    %24 = vector.load %arg12[%c0_25, %c224] : memref<162x288xf32, #tpu.memory_space<vmem>>, vector<142x32xf32>
    tpu.vector_store %arg12[%c0_25, %c224], %23 {strides = array<i32>} : memref<162x288xf32, #tpu.memory_space<vmem>>, vector<142x32xf32>,
    %c20 = arith.constant 20 : index
    %c0_26 = arith.constant 0 : index
    %25 = vector.load %arg11[%c20, %c0_26] : memref<162x32xf32, #tpu.memory_space<vmem>>, vector<142x32xf32>
    %c0_27 = arith.constant 0 : index
    %c256 = arith.constant 256 : index
    %26 = vector.load %arg12[%c0_27, %c256] : memref<162x288xf32, #tpu.memory_space<vmem>>, vector<142x32xf32>
    tpu.vector_store %arg12[%c0_27, %c256], %25 {strides = array<i32>} : memref<162x288xf32, #tpu.memory_space<vmem>>, vector<142x32xf32>,
    %c0_28 = arith.constant 0 : index
    %c0_29 = arith.constant 0 : index
    %27 = vector.load %arg12[%c0_28, %c0_29] : memref<162x288xf32, #tpu.memory_space<vmem>>, vector<142x288xf32>
    %c0_30 = arith.constant 0 : index
    %c0_31 = arith.constant 0 : index
    %28 = vector.load %arg4[%c0_30, %c0_31] : memref<288x32xf32, #tpu.memory_space<vmem>>, vector<288x32xf32>
    %cst_32 = arith.constant dense<0.000000e+00> : vector<142x32xf32>
    %29 = tpu.matmul %27, %28, %cst_32 {dimension_numbers = #tpu.dot_dimension_numbers<[1], [0], [0], [1], [0, 0, 1, 1], [], []>} : vector<142x288xf32>, vector<288x32xf32>, vector<142x32xf32> -> vector<142x32xf32>
    %c0_33 = arith.constant 0 : index
    %c0_34 = arith.constant 0 : index
    %30 = vector.load %arg5[%c0_33, %c0_34] : memref<1x32xf32, #tpu.memory_space<vmem>>, vector<1x32xf32>
    %31 = vector.broadcast %30 : vector<1x32xf32> to vector<142x32xf32>
    %32 = arith.addf %29, %31 : vector<142x32xf32>
    %cst_35 = arith.constant 0.000000e+00 : f32
    %33 = vector.broadcast %cst_35 : f32 to vector<142x32xf32>
    %34 = arith.maximumf %32, %33 : vector<142x32xf32>
    %c0_36 = arith.constant 0 : index
    %c0_37 = arith.constant 0 : index
    %35 = vector.load %arg11[%c0_36, %c0_37] : memref<162x32xf32, #tpu.memory_space<vmem>>, vector<142x32xf32>
    tpu.vector_store %arg11[%c0_36, %c0_37], %34 {strides = array<i32>} : memref<162x32xf32, #tpu.memory_space<vmem>>, vector<142x32xf32>,
    %c0_38 = arith.constant 0 : index
    %c0_39 = arith.constant 0 : index
    %36 = vector.load %arg11[%c0_38, %c0_39] : memref<162x32xf32, #tpu.memory_space<vmem>>, vector<122x32xf32>
    %c0_40 = arith.constant 0 : index
    %c0_41 = arith.constant 0 : index
    %37 = vector.load %arg12[%c0_40, %c0_41] : memref<162x288xf32, #tpu.memory_space<vmem>>, vector<122x32xf32>
    tpu.vector_store %arg12[%c0_40, %c0_41], %36 {strides = array<i32>} : memref<162x288xf32, #tpu.memory_space<vmem>>, vector<122x32xf32>,
    %c1_42 = arith.constant 1 : index
    %c0_43 = arith.constant 0 : index
    %38 = vector.load %arg11[%c1_42, %c0_43] : memref<162x32xf32, #tpu.memory_space<vmem>>, vector<122x32xf32>
    %c0_44 = arith.constant 0 : index
    %c32_45 = arith.constant 32 : index
    %39 = vector.load %arg12[%c0_44, %c32_45] : memref<162x288xf32, #tpu.memory_space<vmem>>, vector<122x32xf32>
    tpu.vector_store %arg12[%c0_44, %c32_45], %38 {strides = array<i32>} : memref<162x288xf32, #tpu.memory_space<vmem>>, vector<122x32xf32>,
    %c2_46 = arith.constant 2 : index
    %c0_47 = arith.constant 0 : index
    %40 = vector.load %arg11[%c2_46, %c0_47] : memref<162x32xf32, #tpu.memory_space<vmem>>, vector<122x32xf32>
    %c0_48 = arith.constant 0 : index
    %c64_49 = arith.constant 64 : index
    %41 = vector.load %arg12[%c0_48, %c64_49] : memref<162x288xf32, #tpu.memory_space<vmem>>, vector<122x32xf32>
    tpu.vector_store %arg12[%c0_48, %c64_49], %40 {strides = array<i32>} : memref<162x288xf32, #tpu.memory_space<vmem>>, vector<122x32xf32>,
    %c9_50 = arith.constant 9 : index
    %c0_51 = arith.constant 0 : index
    %42 = vector.load %arg11[%c9_50, %c0_51] : memref<162x32xf32, #tpu.memory_space<vmem>>, vector<122x32xf32>
    %c0_52 = arith.constant 0 : index
    %c96_53 = arith.constant 96 : index
    %43 = vector.load %arg12[%c0_52, %c96_53] : memref<162x288xf32, #tpu.memory_space<vmem>>, vector<122x32xf32>
    tpu.vector_store %arg12[%c0_52, %c96_53], %42 {strides = array<i32>} : memref<162x288xf32, #tpu.memory_space<vmem>>, vector<122x32xf32>,
    %c10_54 = arith.constant 10 : index
    %c0_55 = arith.constant 0 : index
    %44 = vector.load %arg11[%c10_54, %c0_55] : memref<162x32xf32, #tpu.memory_space<vmem>>, vector<122x32xf32>
    %c0_56 = arith.constant 0 : index
    %c128_57 = arith.constant 128 : index
    %45 = vector.load %arg12[%c0_56, %c128_57] : memref<162x288xf32, #tpu.memory_space<vmem>>, vector<122x32xf32>
    tpu.vector_store %arg12[%c0_56, %c128_57], %44 {strides = array<i32>} : memref<162x288xf32, #tpu.memory_space<vmem>>, vector<122x32xf32>,
    %c11_58 = arith.constant 11 : index
    %c0_59 = arith.constant 0 : index
    %46 = vector.load %arg11[%c11_58, %c0_59] : memref<162x32xf32, #tpu.memory_space<vmem>>, vector<122x32xf32>
    %c0_60 = arith.constant 0 : index
    %c160_61 = arith.constant 160 : index
    %47 = vector.load %arg12[%c0_60, %c160_61] : memref<162x288xf32, #tpu.memory_space<vmem>>, vector<122x32xf32>
    tpu.vector_store %arg12[%c0_60, %c160_61], %46 {strides = array<i32>} : memref<162x288xf32, #tpu.memory_space<vmem>>, vector<122x32xf32>,
    %c18_62 = arith.constant 18 : index
    %c0_63 = arith.constant 0 : index
    %48 = vector.load %arg11[%c18_62, %c0_63] : memref<162x32xf32, #tpu.memory_space<vmem>>, vector<122x32xf32>
    %c0_64 = arith.constant 0 : index
    %c192_65 = arith.constant 192 : index
    %49 = vector.load %arg12[%c0_64, %c192_65] : memref<162x288xf32, #tpu.memory_space<vmem>>, vector<122x32xf32>
    tpu.vector_store %arg12[%c0_64, %c192_65], %48 {strides = array<i32>} : memref<162x288xf32, #tpu.memory_space<vmem>>, vector<122x32xf32>,
    %c19_66 = arith.constant 19 : index
    %c0_67 = arith.constant 0 : index
    %50 = vector.load %arg11[%c19_66, %c0_67] : memref<162x32xf32, #tpu.memory_space<vmem>>, vector<122x32xf32>
    %c0_68 = arith.constant 0 : index
    %c224_69 = arith.constant 224 : index
    %51 = vector.load %arg12[%c0_68, %c224_69] : memref<162x288xf32, #tpu.memory_space<vmem>>, vector<122x32xf32>
    tpu.vector_store %arg12[%c0_68, %c224_69], %50 {strides = array<i32>} : memref<162x288xf32, #tpu.memory_space<vmem>>, vector<122x32xf32>,
    %c20_70 = arith.constant 20 : index
    %c0_71 = arith.constant 0 : index
    %52 = vector.load %arg11[%c20_70, %c0_71] : memref<162x32xf32, #tpu.memory_space<vmem>>, vector<122x32xf32>
    %c0_72 = arith.constant 0 : index
    %c256_73 = arith.constant 256 : index
    %53 = vector.load %arg12[%c0_72, %c256_73] : memref<162x288xf32, #tpu.memory_space<vmem>>, vector<122x32xf32>
    tpu.vector_store %arg12[%c0_72, %c256_73], %52 {strides = array<i32>} : memref<162x288xf32, #tpu.memory_space<vmem>>, vector<122x32xf32>,
    %c0_74 = arith.constant 0 : index
    %c0_75 = arith.constant 0 : index
    %54 = vector.load %arg12[%c0_74, %c0_75] : memref<162x288xf32, #tpu.memory_space<vmem>>, vector<122x288xf32>
    %c0_76 = arith.constant 0 : index
    %c0_77 = arith.constant 0 : index
    %55 = vector.load %arg6[%c0_76, %c0_77] : memref<288x32xf32, #tpu.memory_space<vmem>>, vector<288x32xf32>
    %cst_78 = arith.constant dense<0.000000e+00> : vector<122x32xf32>
    %56 = tpu.matmul %54, %55, %cst_78 {dimension_numbers = #tpu.dot_dimension_numbers<[1], [0], [0], [1], [0, 0, 1, 1], [], []>} : vector<122x288xf32>, vector<288x32xf32>, vector<122x32xf32> -> vector<122x32xf32>
    %c0_79 = arith.constant 0 : index
    %c0_80 = arith.constant 0 : index
    %57 = vector.load %arg7[%c0_79, %c0_80] : memref<1x32xf32, #tpu.memory_space<vmem>>, vector<1x32xf32>
    %58 = vector.broadcast %57 : vector<1x32xf32> to vector<122x32xf32>
    %59 = arith.addf %56, %58 : vector<122x32xf32>
    %cst_81 = arith.constant 0.000000e+00 : f32
    %60 = vector.broadcast %cst_81 : f32 to vector<122x32xf32>
    %61 = arith.maximumf %59, %60 : vector<122x32xf32>
    %c0_82 = arith.constant 0 : index
    %c0_83 = arith.constant 0 : index
    %62 = vector.load %arg11[%c0_82, %c0_83] : memref<162x32xf32, #tpu.memory_space<vmem>>, vector<122x32xf32>
    tpu.vector_store %arg11[%c0_82, %c0_83], %61 {strides = array<i32>} : memref<162x32xf32, #tpu.memory_space<vmem>>, vector<122x32xf32>,
    %c0_84 = arith.constant 0 : index
    %c0_85 = arith.constant 0 : index
    %63 = vector.load %arg11[%c0_84, %c0_85] : memref<162x32xf32, #tpu.memory_space<vmem>>, vector<102x32xf32>
    %c0_86 = arith.constant 0 : index
    %c0_87 = arith.constant 0 : index
    %64 = vector.load %arg12[%c0_86, %c0_87] : memref<162x288xf32, #tpu.memory_space<vmem>>, vector<102x32xf32>
    tpu.vector_store %arg12[%c0_86, %c0_87], %63 {strides = array<i32>} : memref<162x288xf32, #tpu.memory_space<vmem>>, vector<102x32xf32>,
    %c1_88 = arith.constant 1 : index
    %c0_89 = arith.constant 0 : index
    %65 = vector.load %arg11[%c1_88, %c0_89] : memref<162x32xf32, #tpu.memory_space<vmem>>, vector<102x32xf32>
    %c0_90 = arith.constant 0 : index
    %c32_91 = arith.constant 32 : index
    %66 = vector.load %arg12[%c0_90, %c32_91] : memref<162x288xf32, #tpu.memory_space<vmem>>, vector<102x32xf32>
    tpu.vector_store %arg12[%c0_90, %c32_91], %65 {strides = array<i32>} : memref<162x288xf32, #tpu.memory_space<vmem>>, vector<102x32xf32>,
    %c2_92 = arith.constant 2 : index
    %c0_93 = arith.constant 0 : index
    %67 = vector.load %arg11[%c2_92, %c0_93] : memref<162x32xf32, #tpu.memory_space<vmem>>, vector<102x32xf32>
    %c0_94 = arith.constant 0 : index
    %c64_95 = arith.constant 64 : index
    %68 = vector.load %arg12[%c0_94, %c64_95] : memref<162x288xf32, #tpu.memory_space<vmem>>, vector<102x32xf32>
    tpu.vector_store %arg12[%c0_94, %c64_95], %67 {strides = array<i32>} : memref<162x288xf32, #tpu.memory_space<vmem>>, vector<102x32xf32>,
    %c9_96 = arith.constant 9 : index
    %c0_97 = arith.constant 0 : index
    %69 = vector.load %arg11[%c9_96, %c0_97] : memref<162x32xf32, #tpu.memory_space<vmem>>, vector<102x32xf32>
    %c0_98 = arith.constant 0 : index
    %c96_99 = arith.constant 96 : index
    %70 = vector.load %arg12[%c0_98, %c96_99] : memref<162x288xf32, #tpu.memory_space<vmem>>, vector<102x32xf32>
    tpu.vector_store %arg12[%c0_98, %c96_99], %69 {strides = array<i32>} : memref<162x288xf32, #tpu.memory_space<vmem>>, vector<102x32xf32>,
    %c10_100 = arith.constant 10 : index
    %c0_101 = arith.constant 0 : index
    %71 = vector.load %arg11[%c10_100, %c0_101] : memref<162x32xf32, #tpu.memory_space<vmem>>, vector<102x32xf32>
    %c0_102 = arith.constant 0 : index
    %c128_103 = arith.constant 128 : index
    %72 = vector.load %arg12[%c0_102, %c128_103] : memref<162x288xf32, #tpu.memory_space<vmem>>, vector<102x32xf32>
    tpu.vector_store %arg12[%c0_102, %c128_103], %71 {strides = array<i32>} : memref<162x288xf32, #tpu.memory_space<vmem>>, vector<102x32xf32>,
    %c11_104 = arith.constant 11 : index
    %c0_105 = arith.constant 0 : index
    %73 = vector.load %arg11[%c11_104, %c0_105] : memref<162x32xf32, #tpu.memory_space<vmem>>, vector<102x32xf32>
    %c0_106 = arith.constant 0 : index
    %c160_107 = arith.constant 160 : index
    %74 = vector.load %arg12[%c0_106, %c160_107] : memref<162x288xf32, #tpu.memory_space<vmem>>, vector<102x32xf32>
    tpu.vector_store %arg12[%c0_106, %c160_107], %73 {strides = array<i32>} : memref<162x288xf32, #tpu.memory_space<vmem>>, vector<102x32xf32>,
    %c18_108 = arith.constant 18 : index
    %c0_109 = arith.constant 0 : index
    %75 = vector.load %arg11[%c18_108, %c0_109] : memref<162x32xf32, #tpu.memory_space<vmem>>, vector<102x32xf32>
    %c0_110 = arith.constant 0 : index
    %c192_111 = arith.constant 192 : index
    %76 = vector.load %arg12[%c0_110, %c192_111] : memref<162x288xf32, #tpu.memory_space<vmem>>, vector<102x32xf32>
    tpu.vector_store %arg12[%c0_110, %c192_111], %75 {strides = array<i32>} : memref<162x288xf32, #tpu.memory_space<vmem>>, vector<102x32xf32>,
    %c19_112 = arith.constant 19 : index
    %c0_113 = arith.constant 0 : index
    %77 = vector.load %arg11[%c19_112, %c0_113] : memref<162x32xf32, #tpu.memory_space<vmem>>, vector<102x32xf32>
    %c0_114 = arith.constant 0 : index
    %c224_115 = arith.constant 224 : index
    %78 = vector.load %arg12[%c0_114, %c224_115] : memref<162x288xf32, #tpu.memory_space<vmem>>, vector<102x32xf32>
    tpu.vector_store %arg12[%c0_114, %c224_115], %77 {strides = array<i32>} : memref<162x288xf32, #tpu.memory_space<vmem>>, vector<102x32xf32>,
    %c20_116 = arith.constant 20 : index
    %c0_117 = arith.constant 0 : index
    %79 = vector.load %arg11[%c20_116, %c0_117] : memref<162x32xf32, #tpu.memory_space<vmem>>, vector<102x32xf32>
    %c0_118 = arith.constant 0 : index
    %c256_119 = arith.constant 256 : index
    %80 = vector.load %arg12[%c0_118, %c256_119] : memref<162x288xf32, #tpu.memory_space<vmem>>, vector<102x32xf32>
    tpu.vector_store %arg12[%c0_118, %c256_119], %79 {strides = array<i32>} : memref<162x288xf32, #tpu.memory_space<vmem>>, vector<102x32xf32>,
    %c0_120 = arith.constant 0 : index
    %c0_121 = arith.constant 0 : index
    %81 = vector.load %arg12[%c0_120, %c0_121] : memref<162x288xf32, #tpu.memory_space<vmem>>, vector<102x288xf32>
    %c0_122 = arith.constant 0 : index
    %c0_123 = arith.constant 0 : index
    %82 = vector.load %arg8[%c0_122, %c0_123] : memref<288x32xf32, #tpu.memory_space<vmem>>, vector<288x32xf32>
    %cst_124 = arith.constant dense<0.000000e+00> : vector<102x32xf32>
    %83 = tpu.matmul %81, %82, %cst_124 {dimension_numbers = #tpu.dot_dimension_numbers<[1], [0], [0], [1], [0, 0, 1, 1], [], []>} : vector<102x288xf32>, vector<288x32xf32>, vector<102x32xf32> -> vector<102x32xf32>
    %c0_125 = arith.constant 0 : index
    %c0_126 = arith.constant 0 : index
    %84 = vector.load %arg9[%c0_125, %c0_126] : memref<1x32xf32, #tpu.memory_space<vmem>>, vector<1x32xf32>
    %85 = vector.broadcast %84 : vector<1x32xf32> to vector<102x32xf32>
    %86 = arith.addf %83, %85 : vector<102x32xf32>
    %cst_127 = arith.constant 0.000000e+00 : f32
    %87 = vector.broadcast %cst_127 : f32 to vector<102x32xf32>
    %88 = arith.maximumf %86, %87 : vector<102x32xf32>
    %89 = vector.extract_strided_slice %88 {offsets = [0, 0], sizes = [21, 32], strides = [1, 1]} : vector<102x32xf32> to vector<21x32xf32>
    %c0_128 = arith.constant 0 : index
    %c0_129 = arith.constant 0 : index
    %c0_130 = arith.constant 0 : index
    %90 = vector.load %arg10[%c0_128, %c0_129, %c0_130] : memref<2x21x32xf32, #tpu.memory_space<vmem>>, vector<1x21x32xf32>
    %91 = vector.shape_cast %90 : vector<1x21x32xf32> to vector<21x32xf32>
    %92 = vector.shape_cast %89 : vector<21x32xf32> to vector<1x21x32xf32>
    tpu.vector_store %arg10[%c0_128, %c0_129, %c0_130], %92 {strides = array<i32>} : memref<2x21x32xf32, #tpu.memory_space<vmem>>, vector<1x21x32xf32>,
    %93 = vector.extract_strided_slice %88 {offsets = [81, 0], sizes = [21, 32], strides = [1, 1]} : vector<102x32xf32> to vector<21x32xf32>
    %c1_131 = arith.constant 1 : index
    %c0_132 = arith.constant 0 : index
    %c0_133 = arith.constant 0 : index
    %94 = vector.load %arg10[%c1_131, %c0_132, %c0_133] : memref<2x21x32xf32, #tpu.memory_space<vmem>>, vector<1x21x32xf32>
    %95 = vector.shape_cast %94 : vector<1x21x32xf32> to vector<21x32xf32>
    %96 = vector.shape_cast %93 : vector<21x32xf32> to vector<1x21x32xf32>
    tpu.vector_store %arg10[%c1_131, %c0_132, %c0_133], %96 {strides = array<i32>} : memref<2x21x32xf32, #tpu.memory_space<vmem>>, vector<1x21x32xf32>,
    return
  }
  func.func @transform_0(%arg0: i32) -> (i32, i32) {
    %c0_i32 = arith.constant 0 : i32
    %c0_i32_0 = arith.constant 0 : i32
    return %arg0, %c0_i32 : i32, i32
  }
  func.func @transform_1(%arg0: i32) -> (i32, i32) {
    %c0_i32 = arith.constant 0 : i32
    %c0_i32_0 = arith.constant 0 : i32
    %c0_i32_1 = arith.constant 0 : i32
    return %c0_i32, %c0_i32_0 : i32, i32
  }
  func.func @transform_2(%arg0: i32) -> (i32, i32) {
    %c0_i32 = arith.constant 0 : i32
    %c0_i32_0 = arith.constant 0 : i32
    %c0_i32_1 = arith.constant 0 : i32
    return %c0_i32, %c0_i32_0 : i32, i32
  }
  func.func @transform_3(%arg0: i32) -> (i32, i32) {
    %c0_i32 = arith.constant 0 : i32
    %c0_i32_0 = arith.constant 0 : i32
    %c0_i32_1 = arith.constant 0 : i32
    return %c0_i32, %c0_i32_0 : i32, i32
  }
  func.func @transform_4(%arg0: i32) -> (i32, i32) {
    %c0_i32 = arith.constant 0 : i32
    %c0_i32_0 = arith.constant 0 : i32
    %c0_i32_1 = arith.constant 0 : i32
    return %c0_i32, %c0_i32_0 : i32, i32
  }
  func.func @transform_5(%arg0: i32) -> (i32, i32) {
    %c0_i32 = arith.constant 0 : i32
    %c0_i32_0 = arith.constant 0 : i32
    %c0_i32_1 = arith.constant 0 : i32
    return %c0_i32, %c0_i32_0 : i32, i32
  }
  func.func @transform_6(%arg0: i32) -> (i32, i32) {
    %c0_i32 = arith.constant 0 : i32
    %c0_i32_0 = arith.constant 0 : i32
    %c0_i32_1 = arith.constant 0 : i32
    return %c0_i32, %c0_i32_0 : i32, i32
  }
  func.func @transform_7(%arg0: i32) -> (i32, i32) {
    %c0_i32 = arith.constant 0 : i32
    %c0_i32_0 = arith.constant 0 : i32
    %c0_i32_1 = arith.constant 0 : i32
    return %c0_i32, %c0_i32_0 : i32, i32
  }
  func.func @transform_8(%arg0: i32) -> (i32, i32) {
    %c0_i32 = arith.constant 0 : i32
    %c0_i32_0 = arith.constant 0 : i32
    %c0_i32_1 = arith.constant 0 : i32
    return %c0_i32, %c0_i32_0 : i32, i32
  }
  func.func @transform_9(%arg0: i32) -> (i32, i32, i32) {
    %c0_i32 = arith.constant 0 : i32
    %c0_i32_0 = arith.constant 0 : i32
    %c0_i32_1 = arith.constant 0 : i32
    return %arg0, %c0_i32, %c0_i32_0 : i32, i32, i32
  }
}

module attributes {stable_mosaic.version = 11 : i64} {
  func.func @_head_kernel(%arg0: i32, %arg1: memref<2x672xf32, #tpu.memory_space<vmem>>, %arg2: memref<2x6xf32, #tpu.memory_space<vmem>>, %arg3: memref<672x32xf32, #tpu.memory_space<vmem>>, %arg4: memref<1x32xf32, #tpu.memory_space<vmem>>, %arg5: memref<1x32xf32, #tpu.memory_space<vmem>>, %arg6: memref<1x32xf32, #tpu.memory_space<vmem>>, %arg7: memref<32x64xf32, #tpu.memory_space<vmem>>, %arg8: memref<6x64xf32, #tpu.memory_space<vmem>>, %arg9: memref<1x64xf32, #tpu.memory_space<vmem>>, %arg10: memref<32x32xf32, #tpu.memory_space<vmem>>, %arg11: memref<1x32xf32, #tpu.memory_space<vmem>>, %arg12: memref<32x32xf32, #tpu.memory_space<vmem>>, %arg13: memref<1x32xf32, #tpu.memory_space<vmem>>, %arg14: memref<2x32xf32, #tpu.memory_space<vmem>>, %arg15: memref<1x2xf32, #tpu.memory_space<vmem>>, %arg16: memref<2x2xf32, #tpu.memory_space<vmem>>) attributes {dimension_semantics = [#tpu.dimension_semantics<parallel>], iteration_bounds = array<i64: 1>, scalar_prefetch = 0 : i64, scratch_operands = 0 : i64, tpu.core_type = #tpu.core_type<tc>, window_params = [{transform_indices = @transform_0, window_bounds = array<i64: 2, 672>}, {transform_indices = @transform_1, window_bounds = array<i64: 2, 6>}, {pipeline_mode = #tpu.pipeline_mode<synchronous>, transform_indices = @transform_2, window_bounds = array<i64: 672, 32>}, {pipeline_mode = #tpu.pipeline_mode<synchronous>, transform_indices = @transform_3, window_bounds = array<i64: 1, 32>}, {pipeline_mode = #tpu.pipeline_mode<synchronous>, transform_indices = @transform_4, window_bounds = array<i64: 1, 32>}, {pipeline_mode = #tpu.pipeline_mode<synchronous>, transform_indices = @transform_5, window_bounds = array<i64: 1, 32>}, {pipeline_mode = #tpu.pipeline_mode<synchronous>, transform_indices = @transform_6, window_bounds = array<i64: 32, 64>}, {pipeline_mode = #tpu.pipeline_mode<synchronous>, transform_indices = @transform_7, window_bounds = array<i64: 6, 64>}, {pipeline_mode = #tpu.pipeline_mode<synchronous>, transform_indices = @transform_8, window_bounds = array<i64: 1, 64>}, {pipeline_mode = #tpu.pipeline_mode<synchronous>, transform_indices = @transform_9, window_bounds = array<i64: 32, 32>}, {pipeline_mode = #tpu.pipeline_mode<synchronous>, transform_indices = @transform_10, window_bounds = array<i64: 1, 32>}, {pipeline_mode = #tpu.pipeline_mode<synchronous>, transform_indices = @transform_11, window_bounds = array<i64: 32, 32>}, {pipeline_mode = #tpu.pipeline_mode<synchronous>, transform_indices = @transform_12, window_bounds = array<i64: 1, 32>}, {pipeline_mode = #tpu.pipeline_mode<synchronous>, transform_indices = @transform_13, window_bounds = array<i64: 2, 32>}, {pipeline_mode = #tpu.pipeline_mode<synchronous>, transform_indices = @transform_14, window_bounds = array<i64: 1, 2>}, {transform_indices = @transform_15, window_bounds = array<i64: 2, 2>}]} {
    %c0 = arith.constant 0 : index
    %c0_0 = arith.constant 0 : index
    %0 = vector.load %arg1[%c0, %c0_0] : memref<2x672xf32, #tpu.memory_space<vmem>>, vector<2x672xf32>
    %c0_1 = arith.constant 0 : index
    %c0_2 = arith.constant 0 : index
    %1 = vector.load %arg3[%c0_1, %c0_2] : memref<672x32xf32, #tpu.memory_space<vmem>>, vector<672x32xf32>
    %cst = arith.constant dense<0.000000e+00> : vector<2x32xf32>
    %2 = tpu.matmul %0, %1, %cst {dimension_numbers = #tpu.dot_dimension_numbers<[1], [0], [0], [1], [0, 0, 1, 1], [], []>} : vector<2x672xf32>, vector<672x32xf32>, vector<2x32xf32> -> vector<2x32xf32>
    %c0_3 = arith.constant 0 : index
    %c0_4 = arith.constant 0 : index
    %3 = vector.load %arg4[%c0_3, %c0_4] : memref<1x32xf32, #tpu.memory_space<vmem>>, vector<1x32xf32>
    %4 = vector.broadcast %3 : vector<1x32xf32> to vector<2x32xf32>
    %5 = arith.addf %2, %4 : vector<2x32xf32>
    %cst_5 = arith.constant dense<0.000000e+00> : vector<2xf32>
    %6 = vector.multi_reduction <add>, %5, %cst_5 [1] : vector<2x32xf32> to vector<2xf32>
    %7 = vector.shape_cast %6 : vector<2xf32> to vector<2x1xf32>
    %cst_6 = arith.constant 3.200000e+01 : f32
    %8 = vector.broadcast %cst_6 : f32 to vector<2x1xf32>
    %9 = arith.divf %7, %8 : vector<2x1xf32>
    %10 = vector.broadcast %9 : vector<2x1xf32> to vector<2x32xf32>
    %11 = arith.subf %5, %10 : vector<2x32xf32>
    %12 = arith.mulf %11, %11 : vector<2x32xf32>
    %cst_7 = arith.constant dense<0.000000e+00> : vector<2xf32>
    %13 = vector.multi_reduction <add>, %12, %cst_7 [1] : vector<2x32xf32> to vector<2xf32>
    %14 = vector.shape_cast %13 : vector<2xf32> to vector<2x1xf32>
    %cst_8 = arith.constant 3.200000e+01 : f32
    %15 = vector.broadcast %cst_8 : f32 to vector<2x1xf32>
    %16 = arith.divf %14, %15 : vector<2x1xf32>
    %17 = vector.broadcast %9 : vector<2x1xf32> to vector<2x32xf32>
    %18 = arith.subf %5, %17 : vector<2x32xf32>
    %cst_9 = arith.constant 9.99999974E-6 : f32
    %19 = vector.broadcast %cst_9 : f32 to vector<2x1xf32>
    %20 = arith.addf %16, %19 : vector<2x1xf32>
    %21 = math.rsqrt %20 : vector<2x1xf32>
    %22 = vector.broadcast %21 : vector<2x1xf32> to vector<2x32xf32>
    %23 = arith.mulf %18, %22 : vector<2x32xf32>
    %c0_10 = arith.constant 0 : index
    %c0_11 = arith.constant 0 : index
    %24 = vector.load %arg5[%c0_10, %c0_11] : memref<1x32xf32, #tpu.memory_space<vmem>>, vector<1x32xf32>
    %25 = vector.broadcast %24 : vector<1x32xf32> to vector<2x32xf32>
    %26 = arith.mulf %23, %25 : vector<2x32xf32>
    %c0_12 = arith.constant 0 : index
    %c0_13 = arith.constant 0 : index
    %27 = vector.load %arg6[%c0_12, %c0_13] : memref<1x32xf32, #tpu.memory_space<vmem>>, vector<1x32xf32>
    %28 = vector.broadcast %27 : vector<1x32xf32> to vector<2x32xf32>
    %29 = arith.addf %26, %28 : vector<2x32xf32>
    %30 = math.tanh %29 : vector<2x32xf32>
    %c0_14 = arith.constant 0 : index
    %c0_15 = arith.constant 0 : index
    %31 = vector.load %arg7[%c0_14, %c0_15] : memref<32x64xf32, #tpu.memory_space<vmem>>, vector<32x64xf32>
    %cst_16 = arith.constant dense<0.000000e+00> : vector<2x64xf32>
    %32 = tpu.matmul %30, %31, %cst_16 {dimension_numbers = #tpu.dot_dimension_numbers<[1], [0], [0], [1], [0, 0, 1, 1], [], []>} : vector<2x32xf32>, vector<32x64xf32>, vector<2x64xf32> -> vector<2x64xf32>
    %c0_17 = arith.constant 0 : index
    %c0_18 = arith.constant 0 : index
    %33 = vector.load %arg2[%c0_17, %c0_18] : memref<2x6xf32, #tpu.memory_space<vmem>>, vector<2x6xf32>
    %c0_19 = arith.constant 0 : index
    %c0_20 = arith.constant 0 : index
    %34 = vector.load %arg8[%c0_19, %c0_20] : memref<6x64xf32, #tpu.memory_space<vmem>>, vector<6x64xf32>
    %cst_21 = arith.constant dense<0.000000e+00> : vector<2x64xf32>
    %35 = tpu.matmul %33, %34, %cst_21 {dimension_numbers = #tpu.dot_dimension_numbers<[1], [0], [0], [1], [0, 0, 1, 1], [], []>} : vector<2x6xf32>, vector<6x64xf32>, vector<2x64xf32> -> vector<2x64xf32>
    %36 = arith.addf %32, %35 : vector<2x64xf32>
    %c0_22 = arith.constant 0 : index
    %c0_23 = arith.constant 0 : index
    %37 = vector.load %arg9[%c0_22, %c0_23] : memref<1x64xf32, #tpu.memory_space<vmem>>, vector<1x64xf32>
    %38 = vector.broadcast %37 : vector<1x64xf32> to vector<2x64xf32>
    %39 = arith.addf %36, %38 : vector<2x64xf32>
    %cst_24 = arith.constant 0.000000e+00 : f32
    %40 = vector.broadcast %cst_24 : f32 to vector<2x64xf32>
    %41 = arith.maximumf %39, %40 : vector<2x64xf32>
    %42 = vector.extract_strided_slice %41 {offsets = [0, 0], sizes = [2, 32], strides = [1, 1]} : vector<2x64xf32> to vector<2x32xf32>
    %c0_25 = arith.constant 0 : index
    %c0_26 = arith.constant 0 : index
    %43 = vector.load %arg10[%c0_25, %c0_26] : memref<32x32xf32, #tpu.memory_space<vmem>>, vector<32x32xf32>
    %cst_27 = arith.constant dense<0.000000e+00> : vector<2x32xf32>
    %44 = tpu.matmul %42, %43, %cst_27 {dimension_numbers = #tpu.dot_dimension_numbers<[1], [0], [0], [1], [0, 0, 1, 1], [], []>} : vector<2x32xf32>, vector<32x32xf32>, vector<2x32xf32> -> vector<2x32xf32>
    %c0_28 = arith.constant 0 : index
    %c0_29 = arith.constant 0 : index
    %45 = vector.load %arg11[%c0_28, %c0_29] : memref<1x32xf32, #tpu.memory_space<vmem>>, vector<1x32xf32>
    %46 = vector.broadcast %45 : vector<1x32xf32> to vector<2x32xf32>
    %47 = arith.addf %44, %46 : vector<2x32xf32>
    %cst_30 = arith.constant 0.000000e+00 : f32
    %48 = vector.broadcast %cst_30 : f32 to vector<2x32xf32>
    %49 = arith.maximumf %47, %48 : vector<2x32xf32>
    %50 = vector.extract_strided_slice %41 {offsets = [0, 32], sizes = [2, 32], strides = [1, 1]} : vector<2x64xf32> to vector<2x32xf32>
    %c0_31 = arith.constant 0 : index
    %c0_32 = arith.constant 0 : index
    %51 = vector.load %arg12[%c0_31, %c0_32] : memref<32x32xf32, #tpu.memory_space<vmem>>, vector<32x32xf32>
    %cst_33 = arith.constant dense<0.000000e+00> : vector<2x32xf32>
    %52 = tpu.matmul %50, %51, %cst_33 {dimension_numbers = #tpu.dot_dimension_numbers<[1], [0], [0], [1], [0, 0, 1, 1], [], []>} : vector<2x32xf32>, vector<32x32xf32>, vector<2x32xf32> -> vector<2x32xf32>
    %c0_34 = arith.constant 0 : index
    %c0_35 = arith.constant 0 : index
    %53 = vector.load %arg13[%c0_34, %c0_35] : memref<1x32xf32, #tpu.memory_space<vmem>>, vector<1x32xf32>
    %54 = vector.broadcast %53 : vector<1x32xf32> to vector<2x32xf32>
    %55 = arith.addf %52, %54 : vector<2x32xf32>
    %cst_36 = arith.constant 0.000000e+00 : f32
    %56 = vector.broadcast %cst_36 : f32 to vector<2x32xf32>
    %57 = arith.maximumf %55, %56 : vector<2x32xf32>
    %c0_37 = arith.constant 0 : index
    %c0_38 = arith.constant 0 : index
    %58 = vector.load %arg14[%c0_37, %c0_38] : memref<2x32xf32, #tpu.memory_space<vmem>>, vector<1x32xf32>
    %59 = vector.broadcast %58 : vector<1x32xf32> to vector<2x32xf32>
    %60 = arith.mulf %49, %59 : vector<2x32xf32>
    %cst_39 = arith.constant dense<0.000000e+00> : vector<2xf32>
    %61 = vector.multi_reduction <add>, %60, %cst_39 [1] : vector<2x32xf32> to vector<2xf32>
    %62 = vector.shape_cast %61 : vector<2xf32> to vector<2x1xf32>
    %c1 = arith.constant 1 : index
    %c0_40 = arith.constant 0 : index
    %63 = vector.load %arg14[%c1, %c0_40] : memref<2x32xf32, #tpu.memory_space<vmem>>, vector<1x32xf32>
    %64 = vector.broadcast %63 : vector<1x32xf32> to vector<2x32xf32>
    %65 = arith.mulf %57, %64 : vector<2x32xf32>
    %cst_41 = arith.constant dense<0.000000e+00> : vector<2xf32>
    %66 = vector.multi_reduction <add>, %65, %cst_41 [1] : vector<2x32xf32> to vector<2xf32>
    %67 = vector.shape_cast %66 : vector<2xf32> to vector<2x1xf32>
    %68 = tpu.concatenate %62, %67 in 1 : vector<2x1xf32>, vector<2x1xf32> -> vector<2x2xf32>
    %c0_42 = arith.constant 0 : index
    %c0_43 = arith.constant 0 : index
    %69 = vector.load %arg15[%c0_42, %c0_43] : memref<1x2xf32, #tpu.memory_space<vmem>>, vector<1x2xf32>
    %70 = vector.broadcast %69 : vector<1x2xf32> to vector<2x2xf32>
    %71 = arith.addf %68, %70 : vector<2x2xf32>
    %c0_44 = arith.constant 0 : index
    %c0_45 = arith.constant 0 : index
    %72 = vector.load %arg16[%c0_44, %c0_45] : memref<2x2xf32, #tpu.memory_space<vmem>>, vector<2x2xf32>
    tpu.vector_store %arg16[%c0_44, %c0_45], %71 {strides = array<i32>} : memref<2x2xf32, #tpu.memory_space<vmem>>, vector<2x2xf32>,
    return
  }
  func.func @transform_0(%arg0: i32) -> (i32, i32) {
    %c0_i32 = arith.constant 0 : i32
    %c0_i32_0 = arith.constant 0 : i32
    return %arg0, %c0_i32 : i32, i32
  }
  func.func @transform_1(%arg0: i32) -> (i32, i32) {
    %c0_i32 = arith.constant 0 : i32
    %c0_i32_0 = arith.constant 0 : i32
    return %arg0, %c0_i32 : i32, i32
  }
  func.func @transform_2(%arg0: i32) -> (i32, i32) {
    %c0_i32 = arith.constant 0 : i32
    %c0_i32_0 = arith.constant 0 : i32
    %c0_i32_1 = arith.constant 0 : i32
    return %c0_i32, %c0_i32_0 : i32, i32
  }
  func.func @transform_3(%arg0: i32) -> (i32, i32) {
    %c0_i32 = arith.constant 0 : i32
    %c0_i32_0 = arith.constant 0 : i32
    %c0_i32_1 = arith.constant 0 : i32
    return %c0_i32, %c0_i32_0 : i32, i32
  }
  func.func @transform_4(%arg0: i32) -> (i32, i32) {
    %c0_i32 = arith.constant 0 : i32
    %c0_i32_0 = arith.constant 0 : i32
    %c0_i32_1 = arith.constant 0 : i32
    return %c0_i32, %c0_i32_0 : i32, i32
  }
  func.func @transform_5(%arg0: i32) -> (i32, i32) {
    %c0_i32 = arith.constant 0 : i32
    %c0_i32_0 = arith.constant 0 : i32
    %c0_i32_1 = arith.constant 0 : i32
    return %c0_i32, %c0_i32_0 : i32, i32
  }
  func.func @transform_6(%arg0: i32) -> (i32, i32) {
    %c0_i32 = arith.constant 0 : i32
    %c0_i32_0 = arith.constant 0 : i32
    %c0_i32_1 = arith.constant 0 : i32
    return %c0_i32, %c0_i32_0 : i32, i32
  }
  func.func @transform_7(%arg0: i32) -> (i32, i32) {
    %c0_i32 = arith.constant 0 : i32
    %c0_i32_0 = arith.constant 0 : i32
    %c0_i32_1 = arith.constant 0 : i32
    return %c0_i32, %c0_i32_0 : i32, i32
  }
  func.func @transform_8(%arg0: i32) -> (i32, i32) {
    %c0_i32 = arith.constant 0 : i32
    %c0_i32_0 = arith.constant 0 : i32
    %c0_i32_1 = arith.constant 0 : i32
    return %c0_i32, %c0_i32_0 : i32, i32
  }
  func.func @transform_9(%arg0: i32) -> (i32, i32) {
    %c0_i32 = arith.constant 0 : i32
    %c0_i32_0 = arith.constant 0 : i32
    %c0_i32_1 = arith.constant 0 : i32
    return %c0_i32, %c0_i32_0 : i32, i32
  }
  func.func @transform_10(%arg0: i32) -> (i32, i32) {
    %c0_i32 = arith.constant 0 : i32
    %c0_i32_0 = arith.constant 0 : i32
    %c0_i32_1 = arith.constant 0 : i32
    return %c0_i32, %c0_i32_0 : i32, i32
  }
  func.func @transform_11(%arg0: i32) -> (i32, i32) {
    %c0_i32 = arith.constant 0 : i32
    %c0_i32_0 = arith.constant 0 : i32
    %c0_i32_1 = arith.constant 0 : i32
    return %c0_i32, %c0_i32_0 : i32, i32
  }
  func.func @transform_12(%arg0: i32) -> (i32, i32) {
    %c0_i32 = arith.constant 0 : i32
    %c0_i32_0 = arith.constant 0 : i32
    %c0_i32_1 = arith.constant 0 : i32
    return %c0_i32, %c0_i32_0 : i32, i32
  }
  func.func @transform_13(%arg0: i32) -> (i32, i32) {
    %c0_i32 = arith.constant 0 : i32
    %c0_i32_0 = arith.constant 0 : i32
    %c0_i32_1 = arith.constant 0 : i32
    return %c0_i32, %c0_i32_0 : i32, i32
  }
  func.func @transform_14(%arg0: i32) -> (i32, i32) {
    %c0_i32 = arith.constant 0 : i32
    %c0_i32_0 = arith.constant 0 : i32
    %c0_i32_1 = arith.constant 0 : i32
    return %c0_i32, %c0_i32_0 : i32, i32
  }
  func.func @transform_15(%arg0: i32) -> (i32, i32) {
    %c0_i32 = arith.constant 0 : i32
    %c0_i32_0 = arith.constant 0 : i32
    return %arg0, %c0_i32 : i32, i32
  }
}

</mosaic_0001>

<llo_original>
// kernel: critic_forward.3
$region0: #{critic_forward.3}
  #allocation0 [shape = 'u32[]', space=smem, size = 0x4, offset = 0x4, fixed_abs, tag = 'smem constant byte address 0x4 - core index']
  #allocation1 [shape = 'u32[144,128]{1,0:T(1,128)}', space=vmem, size = 0x12000, scoped, tag = 'internal scratch']
  %s0 = inlined_call_operand.vmem [shape: f32[2,672], index: 0, kind: input, shape index: {}]
  %s1 = inlined_call_operand.vmem [shape: f32[2,6], index: 1, kind: input, shape index: {}]
  %s2 = inlined_call_operand.vmem [shape: f32[672,32], index: 2, kind: input, shape index: {}]
  %s3 = inlined_call_operand.vmem [shape: f32[1,32], index: 3, kind: input, shape index: {}]
  %s4 = inlined_call_operand.vmem [shape: f32[1,32], index: 4, kind: input, shape index: {}]
  %s5 = inlined_call_operand.vmem [shape: f32[1,32], index: 5, kind: input, shape index: {}]
  %s6 = inlined_call_operand.vmem [shape: f32[32,64], index: 6, kind: input, shape index: {}]
  %s7 = inlined_call_operand.vmem [shape: f32[6,64], index: 7, kind: input, shape index: {}]
  %s8 = inlined_call_operand.vmem [shape: f32[1,64], index: 8, kind: input, shape index: {}]
  %s9 = inlined_call_operand.vmem [shape: f32[32,32], index: 9, kind: input, shape index: {}]
  %s10 = inlined_call_operand.vmem [shape: f32[1,32], index: 10, kind: input, shape index: {}]
  %s11 = inlined_call_operand.vmem [shape: f32[32,32], index: 11, kind: input, shape index: {}]
  %s12 = inlined_call_operand.vmem [shape: f32[1,32], index: 12, kind: input, shape index: {}]
  %s13 = inlined_call_operand.vmem [shape: f32[2,32], index: 13, kind: input, shape index: {}]
  %s14 = inlined_call_operand.vmem [shape: f32[1,2], index: 14, kind: input, shape index: {}]
  %s15 = inlined_call_operand.vmem [shape: f32[2,2], index: 15, kind: output, shape index: {}]
  %s16 = sld [smem:[#allocation0]]
  $region70: #{critic_forward.3} parent=0
    _
  %s18 = ssub.s32 1, %s16
  %s19 = scalar_select 0, %s18, %s16
  // Predicated region
  $region2: #{critic_forward.3} parent=0 // pred_check
    _
  $region3: #{critic_forward.3} parent=0 // pred_check_branch
    %21 = sbr.rel (0) target = $region5
  $region4: #{critic_forward.3} parent=0 // pred_region
    _
  $region5: #{critic_forward.3} parent=0 // pred_fallthru
    _
  // Predicated region
  $region6: #{critic_forward.3} parent=0 // pred_check
    _
  $region7: #{critic_forward.3} parent=0 // pred_check_branch
    %23 = sbr.rel (0) target = $region9
  $region8: #{critic_forward.3} parent=0 // pred_region
    _
  $region9: #{critic_forward.3} parent=0 // pred_fallthru
    _
  // Predicated region
  $region10: #{critic_forward.3} parent=0 // pred_check
    _
  $region11: #{critic_forward.3} parent=0 // pred_check_branch
    %25 = sbr.rel (0) target = $region13
  $region12: #{critic_forward.3} parent=0 // pred_region
    _
  $region13: #{critic_forward.3} parent=0 // pred_fallthru
    _
  // Predicated region
  $region14: #{critic_forward.3} parent=0 // pred_check
    _
  $region15: #{critic_forward.3} parent=0 // pred_check_branch
    %27 = sbr.rel (0) target = $region17
  $region16: #{critic_forward.3} parent=0 // pred_region
    _
  $region17: #{critic_forward.3} parent=0 // pred_fallthru
    _
  // Predicated region
  $region18: #{critic_forward.3} parent=0 // pred_check
    _
  $region19: #{critic_forward.3} parent=0 // pred_check_branch
    %29 = sbr.rel (0) target = $region21
  $region20: #{critic_forward.3} parent=0 // pred_region
    _
  $region21: #{critic_forward.3} parent=0 // pred_fallthru
    _
  // Predicated region
  $region22: #{critic_forward.3} parent=0 // pred_check
    _
  $region23: #{critic_forward.3} parent=0 // pred_check_branch
    %31 = sbr.rel (0) target = $region25
  $region24: #{critic_forward.3} parent=0 // pred_region
    _
  $region25: #{critic_forward.3} parent=0 // pred_fallthru
    _
  // Predicated region
  $region26: #{critic_forward.3} parent=0 // pred_check
    _
  $region27: #{critic_forward.3} parent=0 // pred_check_branch
    %33 = sbr.rel (0) target = $region29
  $region28: #{critic_forward.3} parent=0 // pred_region
    _
  $region29: #{critic_forward.3} parent=0 // pred_fallthru
    _
  // Predicated region
  $region30: #{critic_forward.3} parent=0 // pred_check
    _
  $region31: #{critic_forward.3} parent=0 // pred_check_branch
    %35 = sbr.rel (0) target = $region33
  $region32: #{critic_forward.3} parent=0 // pred_region
    _
  $region33: #{critic_forward.3} parent=0 // pred_fallthru
    _
  // Predicated region
  $region34: #{critic_forward.3} parent=0 // pred_check
    _
  $region35: #{critic_forward.3} parent=0 // pred_check_branch
    %37 = sbr.rel (0) target = $region37
  $region36: #{critic_forward.3} parent=0 // pred_region
    _
  $region37: #{critic_forward.3} parent=0 // pred_fallthru
    _
  // Predicated region
  $region38: #{critic_forward.3} parent=0 // pred_check
    _
  $region39: #{critic_forward.3} parent=0 // pred_check_branch
    %39 = sbr.rel (0) target = $region41
  $region40: #{critic_forward.3} parent=0 // pred_region
    _
  $region41: #{critic_forward.3} parent=0 // pred_fallthru
    _
  // Predicated region
  $region42: #{critic_forward.3} parent=0 // pred_check
    _
  $region43: #{critic_forward.3} parent=0 // pred_check_branch
    %41 = sbr.rel (0) target = $region45
  $region44: #{critic_forward.3} parent=0 // pred_region
    _
  $region45: #{critic_forward.3} parent=0 // pred_fallthru
    _
  // Predicated region
  $region46: #{critic_forward.3} parent=0 // pred_check
    _
  $region47: #{critic_forward.3} parent=0 // pred_check_branch
    %43 = sbr.rel (0) target = $region49
  $region48: #{critic_forward.3} parent=0 // pred_region
    _
  $region49: #{critic_forward.3} parent=0 // pred_fallthru
    _
  // Predicated region
  $region50: #{critic_forward.3} parent=0 // pred_check
    _
  $region51: #{critic_forward.3} parent=0 // pred_check_branch
    %45 = sbr.rel (0) target = $region53
  $region52: #{critic_forward.3} parent=0 // pred_region
    _
  $region53: #{critic_forward.3} parent=0 // pred_fallthru
    _
  // Predicated region
  $region54: #{critic_forward.3} parent=0 // pred_check
    _
  $region55: #{critic_forward.3} parent=0 // pred_check_branch
    %47 = sbr.rel (0) target = $region57
  $region56: #{critic_forward.3} parent=0 // pred_region
    _
  $region57: #{critic_forward.3} parent=0 // pred_fallthru
    _
  // Predicated region
  $region58: #{critic_forward.3} parent=0 // pred_check
    _
  $region59: #{critic_forward.3} parent=0 // pred_check_branch
    %49 = sbr.rel (0) target = $region61
  $region60: #{critic_forward.3} parent=0 // pred_region
    _
  $region61: #{critic_forward.3} parent=0 // pred_fallthru
    _
  %v50 = vld [vmem:[%s0] sm:$0xff]
  %v51 = vld [vmem:[%s0 + $0x8] sm:$0xf]
  %v52 = vld [vmem:[%s2] sm:$0xff]
  %v53 = vld [vmem:[%s2 + $0x8] sm:$0xff]
  %v54 = vld [vmem:[%s2 + $0x10] sm:$0xff]
  %v55 = vld [vmem:[%s2 + $0x18] sm:$0xff]
  %v56 = vld [vmem:[%s2 + $0x20] sm:$0xff]
  %v57 = vld [vmem:[%s2 + $0x28] sm:$0xff]
  %v58 = vld [vmem:[%s2 + $0x30] sm:$0xff]
  %v59 = vld [vmem:[%s2 + $0x38] sm:$0xff]
  %v60 = vld [vmem:[%s2 + $0x40] sm:$0xff]
  %v61 = vld [vmem:[%s2 + $0x48] sm:$0xff]
  %v62 = vld [vmem:[%s2 + $0x50] sm:$0xff]
  %v63 = vld [vmem:[%s2 + $0x58] sm:$0xff]
  %v64 = vld [vmem:[%s2 + $0x60] sm:$0xff]
  %v65 = vld [vmem:[%s2 + $0x68] sm:$0xff]
  %v66 = vld [vmem:[%s2 + $0x70] sm:$0xff]
  %v67 = vld [vmem:[%s2 + $0x78] sm:$0xff]
  %v68 = vld [vmem:[%s2 + $0x80] sm:$0xff]
  %v69 = vld [vmem:[%s2 + $0x88] sm:$0xff]
  %v70 = vld [vmem:[%s2 + $0x90] sm:$0xff]
  %v71 = vld [vmem:[%s2 + $0x98] sm:$0xff]
  %v72 = vld [vmem:[%s2 + $0xa0] sm:$0xff]
  %v73 = vld [vmem:[%s2 + $0xa8] sm:$0xff]
  %v74 = vld [vmem:[%s2 + $0xb0] sm:$0xff]
  %v75 = vld [vmem:[%s2 + $0xb8] sm:$0xff]
  %v76 = vld [vmem:[%s2 + $0xc0] sm:$0xff]
  %v77 = vld [vmem:[%s2 + $0xc8] sm:$0xff]
  %v78 = vld [vmem:[%s2 + $0xd0] sm:$0xff]
  %v79 = vld [vmem:[%s2 + $0xd8] sm:$0xff]
  %v80 = vld [vmem:[%s2 + $0xe0] sm:$0xff]
  %v81 = vld [vmem:[%s2 + $0xe8] sm:$0xff]
  %v82 = vld [vmem:[%s2 + $0xf0] sm:$0xff]
  %v83 = vld [vmem:[%s2 + $0xf8] sm:$0xff]
  %v84 = vld [vmem:[%s2 + $0x100] sm:$0xff]
  %v85 = vld [vmem:[%s2 + $0x108] sm:$0xff]
  %v86 = vld [vmem:[%s2 + $0x110] sm:$0xff]
  %v87 = vld [vmem:[%s2 + $0x118] sm:$0xff]
  %v88 = vld [vmem:[%s2 + $0x120] sm:$0xff]
  %v89 = vld [vmem:[%s2 + $0x128] sm:$0xff]
  %v90 = vld [vmem:[%s2 + $0x130] sm:$0xff]
  %v91 = vld [vmem:[%s2 + $0x138] sm:$0xff]
  %v92 = vld [vmem:[%s2 + $0x140] sm:$0xff]
  %v93 = vld [vmem:[%s2 + $0x148] sm:$0xff]
  %v94 = vld [vmem:[%s2 + $0x150] sm:$0xff]
  %v95 = vld [vmem:[%s2 + $0x158] sm:$0xff]
  %v96 = vld [vmem:[%s2 + $0x160] sm:$0xff]
  %v97 = vld [vmem:[%s2 + $0x168] sm:$0xff]
  %v98 = vld [vmem:[%s2 + $0x170] sm:$0xff]
  %v99 = vld [vmem:[%s2 + $0x178] sm:$0xff]
  %v100 = vld [vmem:[%s2 + $0x180] sm:$0xff]
  %v101 = vld [vmem:[%s2 + $0x188] sm:$0xff]
  %v102 = vld [vmem:[%s2 + $0x190] sm:$0xff]
  %v103 = vld [vmem:[%s2 + $0x198] sm:$0xff]
  %v104 = vld [vmem:[%s2 + $0x1a0] sm:$0xff]
  %v105 = vld [vmem:[%s2 + $0x1a8] sm:$0xff]
  %v106 = vld [vmem:[%s2 + $0x1b0] sm:$0xff]
  %v107 = vld [vmem:[%s2 + $0x1b8] sm:$0xff]
  %v108 = vld [vmem:[%s2 + $0x1c0] sm:$0xff]
  %v109 = vld [vmem:[%s2 + $0x1c8] sm:$0xff]
  %v110 = vld [vmem:[%s2 + $0x1d0] sm:$0xff]
  %v111 = vld [vmem:[%s2 + $0x1d8] sm:$0xff]
  %v112 = vld [vmem:[%s2 + $0x1e0] sm:$0xff]
  %v113 = vld [vmem:[%s2 + $0x1e8] sm:$0xff]
  %v114 = vld [vmem:[%s2 + $0x1f0] sm:$0xff]
  %v115 = vld [vmem:[%s2 + $0x1f8] sm:$0xff]
  %v116 = vld [vmem:[%s2 + $0x200] sm:$0xff]
  %v117 = vld [vmem:[%s2 + $0x208] sm:$0xff]
  %v118 = vld [vmem:[%s2 + $0x210] sm:$0xff]
  %v119 = vld [vmem:[%s2 + $0x218] sm:$0xff]
  %v120 = vld [vmem:[%s2 + $0x220] sm:$0xff]
  %v121 = vld [vmem:[%s2 + $0x228] sm:$0xff]
  %v122 = vld [vmem:[%s2 + $0x230] sm:$0xff]
  %v123 = vld [vmem:[%s2 + $0x238] sm:$0xff]
  %v124 = vld [vmem:[%s2 + $0x240] sm:$0xff]
  %v125 = vld [vmem:[%s2 + $0x248] sm:$0xff]
  %v126 = vld [vmem:[%s2 + $0x250] sm:$0xff]
  %v127 = vld [vmem:[%s2 + $0x258] sm:$0xff]
  %v128 = vld [vmem:[%s2 + $0x260] sm:$0xff]
  %v129 = vld [vmem:[%s2 + $0x268] sm:$0xff]
  %v130 = vld [vmem:[%s2 + $0x270] sm:$0xff]
  %v131 = vld [vmem:[%s2 + $0x278] sm:$0xff]
  %v132 = vld [vmem:[%s2 + $0x280] sm:$0xff]
  %v133 = vld [vmem:[%s2 + $0x288] sm:$0xff]
  %v134 = vld [vmem:[%s2 + $0x290] sm:$0xff]
  %v135 = vld [vmem:[%s2 + $0x298] sm:$0xff]
  %v136 = vld [vmem:[%s3] sm:$0x1]
  %v138 = vlaneseq
  %v139 = vshrl.u32 %v138, 7
  %v140 = vsub.s32 0, %v139
  %v141 = vrot.slane %v136, %v140
  %v145 = vcombine.high %v50, %v50
  %v147 = vunpack.c.l.s4 1983009808
  %v148 = vunpack.c.0.s8 %v147
  %v149 = vlaneseq
  %v150 = vshrl.u32 %v149, 7
  %v151 = vsub.s32 %v148, %v150
  %v152 = vrot.slane %v50, %v151
  %v154 = vunpack.c.l.s4 1983009808
  %v155 = vunpack.c.0.s8 %v154
  %v156 = vlaneseq
  %v157 = vshrl.u32 %v156, 7
  %v158 = vsub.s32 %v155, %v157
  %v159 = vrot.slane %v145, %v158
  %v160 = vcombine.high %v152, %v152
  %v161 = vcombine.high %v159, %v159
  %v163 = vunpack.c.l.s4 1983009808
  %v164 = vunpack.c.0.s8 %v163
  %v165 = vlaneseq
  %v166 = vshrl.u32 %v165, 7
  %v167 = vsub.s32 %v164, %v166
  %v168 = vrot.slane %v51, %v167
  %v169 = vcombine.high %v168, %v168
  %vm175 = vcmask 261120
  %v176 = vsel %vm175, %v169, 0
  %178 = vmatprep.subr.mxu0 0.0
  %179 = vmatpush1.msra.mxu0 %v52
  %180 = vmatprep.subr.mxu0 0.0
  %181 = vmatpush1.msra.mxu0 %v53
  %182 = vmatprep.subr.mxu0 0.0
  %183 = vmatpush1.msra.mxu0 %v54
  %184 = vmatprep.subr.mxu0 0.0
  %185 = vmatpush1.msra.mxu0 %v55
  %186 = vmatprep.subr.mxu0 0.0
  %187 = vmatpush1.msra.mxu0 %v56
  %188 = vmatprep.subr.mxu0 0.0
  %189 = vmatpush1.msra.mxu0 %v57
  %190 = vmatprep.subr.mxu0 0.0
  %191 = vmatpush1.msra.mxu0 %v58
  %192 = vmatprep.subr.mxu0 0.0
  %193 = vmatpush1.msra.mxu0 %v59
  %194 = vmatprep.subr.mxu0 0.0
  %195 = vmatpush1.msra.mxu0 %v60
  %196 = vmatprep.subr.mxu0 0.0
  %197 = vmatpush1.msra.mxu0 %v61
  %198 = vmatprep.subr.mxu0 0.0
  %199 = vmatpush1.msra.mxu0 %v62
  %200 = vmatprep.subr.mxu0 0.0
  %201 = vmatpush1.msra.mxu0 %v63
  %202 = vmatprep.subr.mxu0 0.0
  %203 = vmatpush1.msra.mxu0 %v64
  %204 = vmatprep.subr.mxu0 0.0
  %205 = vmatpush1.msra.mxu0 %v65
  %206 = vmatprep.subr.mxu0 0.0
  %207 = vmatpush1.msra.mxu0 %v66
  %208 = vmatprep.subr.mxu0 0.0
  %209 = vmatpush1.msra.mxu0 %v67
  %210 = vmatprep.subr.mxu0 0.0
  %211 = vmatpush1.msra.mxu0 %v68
  %212 = vmatprep.subr.mxu0 0.0
  %213 = vmatpush1.msra.mxu0 %v69
  %214 = vmatprep.subr.mxu0 0.0
  %215 = vmatpush1.msra.mxu0 %v70
  %216 = vmatprep.subr.mxu0 0.0
  %217 = vmatpush1.msra.mxu0 %v71
  %218 = vmatprep.subr.mxu0 0.0
  %219 = vmatpush1.msra.mxu0 %v72
  %220 = vmatprep.subr.mxu0 0.0
  %221 = vmatpush1.msra.mxu0 %v73
  %222 = vmatprep.subr.mxu0 0.0
  %223 = vmatpush1.msra.mxu0 %v74
  %224 = vmatprep.subr.mxu0 0.0
  %225 = vmatpush1.msra.mxu0 %v75
  %226 = vmatprep.subr.mxu0 0.0
  %227 = vmatpush1.msra.mxu0 %v76
  %228 = vmatprep.subr.mxu0 0.0
  %229 = vmatpush1.msra.mxu0 %v77
  %230 = vmatprep.subr.mxu0 0.0
  %231 = vmatpush1.msra.mxu0 %v78
  %232 = vmatprep.subr.mxu0 0.0
  %233 = vmatpush1.msra.mxu0 %v79
  %234 = vmatprep.subr.mxu0 0.0
  %235 = vmatpush1.msra.mxu0 %v80
  %236 = vmatprep.subr.mxu0 0.0
  %237 = vmatpush1.msra.mxu0 %v81
  %238 = vmatprep.subr.mxu0 0.0
  %239 = vmatpush1.msra.mxu0 %v82
  %240 = vmatprep.subr.mxu0 0.0
  %241 = vmatpush1.msra.mxu0 %v83
  %242 = vmatprep.mubr.f32.mxu0 %v160
  %243 = vmatmul.mubr.f32.gmra.mrb[0].mxu0 %v152
  %v244 = vpop.f32.mrb[0].mxu0
  %v245 = vadd.f32 %v141, %v244
  %v246 = vpop.f32.mrb[0].mxu0
  %247 = vdwg.mxu0
  %248 = vmatprep.subr.mxu0 0.0
  %249 = vmatpush1.msra.mxu0 %v84
  %250 = vmatprep.subr.mxu0 0.0
  %251 = vmatpush1.msra.mxu0 %v85
  %252 = vmatprep.subr.mxu0 0.0
  %253 = vmatpush1.msra.mxu0 %v86
  %254 = vmatprep.subr.mxu0 0.0
  %255 = vmatpush1.msra.mxu0 %v87
  %256 = vmatprep.subr.mxu0 0.0
  %257 = vmatpush1.msra.mxu0 %v88
  %258 = vmatprep.subr.mxu0 0.0
  %259 = vmatpush1.msra.mxu0 %v89
  %260 = vmatprep.subr.mxu0 0.0
  %261 = vmatpush1.msra.mxu0 %v90
  %262 = vmatprep.subr.mxu0 0.0
  %263 = vmatpush1.msra.mxu0 %v91
  %264 = vmatprep.subr.mxu0 0.0
  %265 = vmatpush1.msra.mxu0 %v92
  %266 = vmatprep.subr.mxu0 0.0
  %267 = vmatpush1.msra.mxu0 %v93
  %268 = vmatprep.subr.mxu0 0.0
  %269 = vmatpush1.msra.mxu0 %v94
  %270 = vmatprep.subr.mxu0 0.0
  %271 = vmatpush1.msra.mxu0 %v95
  %272 = vmatprep.subr.mxu0 0.0
  %273 = vmatpush1.msra.mxu0 %v96
  %274 = vmatprep.subr.mxu0 0.0
  %275 = vmatpush1.msra.mxu0 %v97
  %276 = vmatprep.subr.mxu0 0.0
  %277 = vmatpush1.msra.mxu0 %v98
  %278 = vmatprep.subr.mxu0 0.0
  %279 = vmatpush1.msra.mxu0 %v99
  %280 = vmatprep.subr.mxu0 0.0
  %281 = vmatpush1.msra.mxu0 %v100
  %282 = vmatprep.subr.mxu0 0.0
  %283 = vmatpush1.msra.mxu0 %v101
  %284 = vmatprep.subr.mxu0 0.0
  %285 = vmatpush1.msra.mxu0 %v102
  %286 = vmatprep.subr.mxu0 0.0
  %287 = vmatpush1.msra.mxu0 %v103
  %288 = vmatprep.subr.mxu0 0.0
  %289 = vmatpush1.msra.mxu0 %v104
  %290 = vmatprep.subr.mxu0 0.0
  %291 = vmatpush1.msra.mxu0 %v105
  %292 = vmatprep.subr.mxu0 0.0
  %293 = vmatpush1.msra.mxu0 %v106
  %294 = vmatprep.subr.mxu0 0.0
  %295 = vmatpush1.msra.mxu0 %v107
  %296 = vmatprep.subr.mxu0 0.0
  %297 = vmatpush1.msra.mxu0 %v108
  %298 = vmatprep.subr.mxu0 0.0
  %299 = vmatpush1.msra.mxu0 %v109
  %300 = vmatprep.subr.mxu0 0.0
  %301 = vmatpush1.msra.mxu0 %v110
  %302 = vmatprep.subr.mxu0 0.0
  %303 = vmatpush1.msra.mxu0 %v111
  %304 = vmatprep.subr.mxu0 0.0
  %305 = vmatpush1.msra.mxu0 %v112
  %306 = vmatprep.subr.mxu0 0.0
  %307 = vmatpush1.msra.mxu0 %v113
  %308 = vmatprep.subr.mxu0 0.0
  %309 = vmatpush1.msra.mxu0 %v114
  %310 = vmatprep.subr.mxu0 0.0
  %311 = vmatpush1.msra.mxu0 %v115
  %312 = vmatprep.mubr.f32.mxu0 %v161
  %313 = vmatmul.mubr.f32.gmra.mrb[0].mxu0 %v159
  %v314 = vpop.f32.mrb[0].mxu0
  %v315 = vadd.f32 %v245, %v314
  %v316 = vpop.f32.mrb[0].mxu0
  %317 = vdwg.mxu0
  %318 = vmatprep.subr.mxu0 0.0
  %319 = vmatpush1.msra.mxu0 %v116
  %320 = vmatprep.subr.mxu0 0.0
  %321 = vmatpush1.msra.mxu0 %v117
  %322 = vmatprep.subr.mxu0 0.0
  %323 = vmatpush1.msra.mxu0 %v118
  %324 = vmatprep.subr.mxu0 0.0
  %325 = vmatpush1.msra.mxu0 %v119
  %326 = vmatprep.subr.mxu0 0.0
  %327 = vmatpush1.msra.mxu0 %v120
  %328 = vmatprep.subr.mxu0 0.0
  %329 = vmatpush1.msra.mxu0 %v121
  %330 = vmatprep.subr.mxu0 0.0
  %331 = vmatpush1.msra.mxu0 %v122
  %332 = vmatprep.subr.mxu0 0.0
  %333 = vmatpush1.msra.mxu0 %v123
  %334 = vmatprep.subr.mxu0 0.0
  %335 = vmatpush1.msra.mxu0 %v124
  %336 = vmatprep.subr.mxu0 0.0
  %337 = vmatpush1.msra.mxu0 %v125
  %338 = vmatprep.subr.mxu0 0.0
  %339 = vmatpush1.msra.mxu0 %v126
  %340 = vmatprep.subr.mxu0 0.0
  %341 = vmatpush1.msra.mxu0 %v127
  %342 = vmatprep.subr.mxu0 0.0
  %343 = vmatpush1.msra.mxu0 %v128
  %344 = vmatprep.subr.mxu0 0.0
  %345 = vmatpush1.msra.mxu0 %v129
  %346 = vmatprep.subr.mxu0 0.0
  %347 = vmatpush1.msra.mxu0 %v130
  %348 = vmatprep.subr.mxu0 0.0
  %349 = vmatpush1.msra.mxu0 %v131
  %350 = vmatprep.subr.mxu0 0.0
  %351 = vmatpush1.msra.mxu0 %v132
  %352 = vmatprep.subr.mxu0 0.0
  %353 = vmatpush1.msra.mxu0 %v133
  %354 = vmatprep.subr.mxu0 0.0
  %355 = vmatpush1.msra.mxu0 %v134
  %356 = vmatprep.subr.mxu0 0.0
  %357 = vmatpush1.msra.mxu0 %v135
  %358 = vmatprep.subr.mxu0 0.0
  %359 = vmatpush1.msra.mxu0 0.0
  %360 = vmatprep.subr.mxu0 0.0
  %361 = vmatpush1.msra.mxu0 0.0
  %362 = vmatprep.subr.mxu0 0.0
  %363 = vmatpush1.msra.mxu0 0.0
  %364 = vmatprep.subr.mxu0 0.0
  %365 = vmatpush1.msra.mxu0 0.0
  %366 = vmatprep.subr.mxu0 0.0
  %367 = vmatpush1.msra.mxu0 0.0
  %368 = vmatprep.subr.mxu0 0.0
  %369 = vmatpush1.msra.mxu0 0.0
  %370 = vmatprep.subr.mxu0 0.0
  %371 = vmatpush1.msra.mxu0 0.0
  %372 = vmatprep.subr.mxu0 0.0
  %373 = vmatpush1.msra.mxu0 0.0
  %374 = vmatprep.subr.mxu0 0.0
  %375 = vmatpush1.msra.mxu0 0.0
  %376 = vmatprep.subr.mxu0 0.0
  %377 = vmatpush1.msra.mxu0 0.0
  %378 = vmatprep.subr.mxu0 0.0
  %379 = vmatpush1.msra.mxu0 0.0
  %380 = vmatprep.subr.mxu0 0.0
  %381 = vmatpush1.msra.mxu0 0.0
  %382 = vmatprep.mubr.f32.mxu0 %v176
  %383 = vmatmul.mubr.f32.gmra.mrb[0].mxu0 %v168
  %v384 = vpop.f32.mrb[0].mxu0
  %v385 = vadd.f32 %v315, %v384
  %v386 = vpop.f32.mrb[0].mxu0
  %387 = vdwg.mxu0
  %vm388 = vcmask 254976
  %v389 = vsel %vm388, %v385, 0.0
  %390 = vadd.xlane.f32.xlu0 %v389
  %v391 = vpop.xlane.xlu0 %390
  %v392 = vrcp.pop 32.0
  %v393 = vmul.f32 %v391, %v392
  %v394 = vsub.f32 %v385, %v393
  %v395 = vmul.f32 %v394, %v394
  %v396 = vsel %vm388, %v395, 0.0
  %397 = vadd.xlane.f32.xlu0 %v396
  %v398 = vpop.xlane.xlu0 %397
  %v399 = vmul.f32 %v398, %v392
  %v400 = vadd.f32 %v399, 1e-05
  %v401 = vrsqrt.pop %v400
  %v402 = vmul.f32 %v394, %v401
  %v403 = vld [vmem:[%s4] sm:$0x1]
  %v405 = vlaneseq
  %v406 = vshrl.u32 %v405, 7
  %v407 = vsub.s32 0, %v406
  %v408 = vrot.slane %v403, %v407
  %v410 = vmul.f32 %v402, %v408
  %v411 = vld [vmem:[%s5] sm:$0x1]
  %v413 = vlaneseq
  %v414 = vshrl.u32 %v413, 7
  %v415 = vsub.s32 0, %v414
  %v416 = vrot.slane %v411, %v415
  %v418 = vadd.f32 %v410, %v416
  %v419 = vtanh.pop %v418
  %v420 = vld [vmem:[%s6] sm:$0xff]
  %v421 = vld [vmem:[%s6 + $0x8] sm:$0xff]
  %v422 = vld [vmem:[%s6 + $0x10] sm:$0xff]
  %v423 = vld [vmem:[%s6 + $0x18] sm:$0xff]
  %v424 = vld [vmem:[%s1] sm:$0x3]
  %v425 = vld [vmem:[%s7] sm:$0x3f]
  %vm426 = vcmask 48128
  %v428 = vsel %vm426, %v424, 0
  %vm430 = vcmask 1045504
  %v432 = vsel %vm430, %v425, 0
  %434 = vmatprep.subr.mxu0 0.0
  %435 = vmatpush1.msra.mxu0 %v432
  %436 = vmatprep.subr.mxu0 0.0
  %437 = vmatpush1.msra.mxu0 0.0
  %438 = vmatprep.subr.mxu0 0.0
  %439 = vmatpush1.msra.mxu0 0.0
  %440 = vmatprep.subr.mxu0 0.0
  %441 = vmatpush1.msra.mxu0 0.0
  %442 = vmatprep.subr.mxu0 0.0
  %443 = vmatpush1.msra.mxu0 0.0
  %444 = vmatprep.subr.mxu0 0.0
  %445 = vmatpush1.msra.mxu0 0.0
  %446 = vmatprep.subr.mxu0 0.0
  %447 = vmatpush1.msra.mxu0 0.0
  %448 = vmatprep.subr.mxu0 0.0
  %449 = vmatpush1.msra.mxu0 0.0
  %450 = vmatprep.subr.mxu0 0.0
  %451 = vmatpush1.msra.mxu0 0.0
  %452 = vmatprep.subr.mxu0 0.0
  %453 = vmatpush1.msra.mxu0 0.0
  %454 = vmatprep.subr.mxu0 0.0
  %455 = vmatpush1.msra.mxu0 0.0
  %456 = vmatprep.subr.mxu0 0.0
  %457 = vmatpush1.msra.mxu0 0.0
  %458 = vmatprep.subr.mxu0 0.0
  %459 = vmatpush1.msra.mxu0 0.0
  %460 = vmatprep.subr.mxu0 0.0
  %461 = vmatpush1.msra.mxu0 0.0
  %462 = vmatprep.subr.mxu0 0.0
  %463 = vmatpush1.msra.mxu0 0.0
  %464 = vmatprep.subr.mxu0 0.0
  %465 = vmatpush1.msra.mxu0 0.0
  %466 = vmatprep.subr.mxu0 0.0
  %467 = vmatpush1.msra.mxu0 0.0
  %468 = vmatprep.subr.mxu0 0.0
  %469 = vmatpush1.msra.mxu0 0.0
  %470 = vmatprep.subr.mxu0 0.0
  %471 = vmatpush1.msra.mxu0 0.0
  %472 = vmatprep.subr.mxu0 0.0
  %473 = vmatpush1.msra.mxu0 0.0
  %474 = vmatprep.subr.mxu0 0.0
  %475 = vmatpush1.msra.mxu0 0.0
  %476 = vmatprep.subr.mxu0 0.0
  %477 = vmatpush1.msra.mxu0 0.0
  %478 = vmatprep.subr.mxu0 0.0
  %479 = vmatpush1.msra.mxu0 0.0
  %480 = vmatprep.subr.mxu0 0.0
  %481 = vmatpush1.msra.mxu0 0.0
  %482 = vmatprep.subr.mxu0 0.0
  %483 = vmatpush1.msra.mxu0 0.0
  %484 = vmatprep.subr.mxu0 0.0
  %485 = vmatpush1.msra.mxu0 0.0
  %486 = vmatprep.subr.mxu0 0.0
  %487 = vmatpush1.msra.mxu0 0.0
  %488 = vmatprep.subr.mxu0 0.0
  %489 = vmatpush1.msra.mxu0 0.0
  %490 = vmatprep.subr.mxu0 0.0
  %491 = vmatpush1.msra.mxu0 0.0
  %492 = vmatprep.subr.mxu0 0.0
  %493 = vmatpush1.msra.mxu0 0.0
  %494 = vmatprep.subr.mxu0 0.0
  %495 = vmatpush1.msra.mxu0 0.0
  %496 = vmatprep.subr.mxu0 0.0
  %497 = vmatpush1.msra.mxu0 0.0
  %498 = vmatprep.mubr.f32.mxu0 0.0
  %499 = vmatmul.mubr.f32.gmra.mrb[0].mxu0 %v428
  %v500 = vpop.f32.mrb[0].mxu0
  %v501 = vadd.f32 0.0, %v500
  %v502 = vpop.f32.mrb[0].mxu0
  %503 = vdwg.mxu0
  %v505 = vsel %vm175, %v419, 0
  %507 = vmatprep.subr.mxu0 0.0
  %508 = vmatpush1.msra.mxu0 %v420
  %509 = vmatprep.subr.mxu0 0.0
  %510 = vmatpush1.msra.mxu0 %v421
  %511 = vmatprep.subr.mxu0 0.0
  %512 = vmatpush1.msra.mxu0 %v422
  %513 = vmatprep.subr.mxu0 0.0
  %514 = vmatpush1.msra.mxu0 %v423
  %515 = vmatprep.subr.mxu0 0.0
  %516 = vmatpush1.msra.mxu0 0.0
  %517 = vmatprep.subr.mxu0 0.0
  %518 = vmatpush1.msra.mxu0 0.0
  %519 = vmatprep.subr.mxu0 0.0
  %520 = vmatpush1.msra.mxu0 0.0
  %521 = vmatprep.subr.mxu0 0.0
  %522 = vmatpush1.msra.mxu0 0.0
  %523 = vmatprep.subr.mxu0 0.0
  %524 = vmatpush1.msra.mxu0 0.0
  %525 = vmatprep.subr.mxu0 0.0
  %526 = vmatpush1.msra.mxu0 0.0
  %527 = vmatprep.subr.mxu0 0.0
  %528 = vmatpush1.msra.mxu0 0.0
  %529 = vmatprep.subr.mxu0 0.0
  %530 = vmatpush1.msra.mxu0 0.0
  %531 = vmatprep.subr.mxu0 0.0
  %532 = vmatpush1.msra.mxu0 0.0
  %533 = vmatprep.subr.mxu0 0.0
  %534 = vmatpush1.msra.mxu0 0.0
  %535 = vmatprep.subr.mxu0 0.0
  %536 = vmatpush1.msra.mxu0 0.0
  %537 = vmatprep.subr.mxu0 0.0
  %538 = vmatpush1.msra.mxu0 0.0
  %539 = vmatprep.subr.mxu0 0.0
  %540 = vmatpush1.msra.mxu0 0.0
  %541 = vmatprep.subr.mxu0 0.0
  %542 = vmatpush1.msra.mxu0 0.0
  %543 = vmatprep.subr.mxu0 0.0
  %544 = vmatpush1.msra.mxu0 0.0
  %545 = vmatprep.subr.mxu0 0.0
  %546 = vmatpush1.msra.mxu0 0.0
  %547 = vmatprep.subr.mxu0 0.0
  %548 = vmatpush1.msra.mxu0 0.0
  %549 = vmatprep.subr.mxu0 0.0
  %550 = vmatpush1.msra.mxu0 0.0
  %551 = vmatprep.subr.mxu0 0.0
  %552 = vmatpush1.msra.mxu0 0.0
  %553 = vmatprep.subr.mxu0 0.0
  %554 = vmatpush1.msra.mxu0 0.0
  %555 = vmatprep.subr.mxu0 0.0
  %556 = vmatpush1.msra.mxu0 0.0
  %557 = vmatprep.subr.mxu0 0.0
  %558 = vmatpush1.msra.mxu0 0.0
  %559 = vmatprep.subr.mxu0 0.0
  %560 = vmatpush1.msra.mxu0 0.0
  %561 = vmatprep.subr.mxu0 0.0
  %562 = vmatpush1.msra.mxu0 0.0
  %563 = vmatprep.subr.mxu0 0.0
  %564 = vmatpush1.msra.mxu0 0.0
  %565 = vmatprep.subr.mxu0 0.0
  %566 = vmatpush1.msra.mxu0 0.0
  %567 = vmatprep.subr.mxu0 0.0
  %568 = vmatpush1.msra.mxu0 0.0
  %569 = vmatprep.subr.mxu0 0.0
  %570 = vmatpush1.msra.mxu0 0.0
  %571 = vmatprep.mubr.f32.mxu0 0.0
  %572 = vmatmul.mubr.f32.gmra.mrb[0].mxu0 %v505
  %v573 = vpop.f32.mrb[0].mxu0
  %v574 = vadd.f32 %v501, %v573
  %v575 = vpop.f32.mrb[0].mxu0
  %576 = vdwg.mxu0
  %v577 = vld [vmem:[%s8] sm:$0x1]
  %v579 = vlaneseq
  %v580 = vshrl.u32 %v579, 7
  %v581 = vsub.s32 0, %v580
  %v582 = vrot.slane %v577, %v581
  %v584 = vadd.f32 %v574, %v582
  %v585 = vmax.f32 %v584, 0.0
  %v586 = vld [vmem:[%s9] sm:$0xff]
  %v587 = vld [vmem:[%s9 + $0x8] sm:$0xff]
  %v588 = vld [vmem:[%s9 + $0x10] sm:$0xff]
  %v589 = vld [vmem:[%s9 + $0x18] sm:$0xff]
  %v590 = vld [vmem:[%s10] sm:$0x1]
  %v592 = vlaneseq
  %v593 = vshrl.u32 %v592, 7
  %v594 = vsub.s32 0, %v593
  %v595 = vrot.slane %v590, %v594
  %v598 = vsel %vm175, %v585, 0
  %600 = vmatprep.subr.mxu0 0.0
  %601 = vmatpush1.msra.mxu0 %v586
  %602 = vmatprep.subr.mxu0 0.0
  %603 = vmatpush1.msra.mxu0 %v587
  %604 = vmatprep.subr.mxu0 0.0
  %605 = vmatpush1.msra.mxu0 %v588
  %606 = vmatprep.subr.mxu0 0.0
  %607 = vmatpush1.msra.mxu0 %v589
  %608 = vmatprep.subr.mxu0 0.0
  %609 = vmatpush1.msra.mxu0 0.0
  %610 = vmatprep.subr.mxu0 0.0
  %611 = vmatpush1.msra.mxu0 0.0
  %612 = vmatprep.subr.mxu0 0.0
  %613 = vmatpush1.msra.mxu0 0.0
  %614 = vmatprep.subr.mxu0 0.0
  %615 = vmatpush1.msra.mxu0 0.0
  %616 = vmatprep.subr.mxu0 0.0
  %617 = vmatpush1.msra.mxu0 0.0
  %618 = vmatprep.subr.mxu0 0.0
  %619 = vmatpush1.msra.mxu0 0.0
  %620 = vmatprep.subr.mxu0 0.0
  %621 = vmatpush1.msra.mxu0 0.0
  %622 = vmatprep.subr.mxu0 0.0
  %623 = vmatpush1.msra.mxu0 0.0
  %624 = vmatprep.subr.mxu0 0.0
  %625 = vmatpush1.msra.mxu0 0.0
  %626 = vmatprep.subr.mxu0 0.0
  %627 = vmatpush1.msra.mxu0 0.0
  %628 = vmatprep.subr.mxu0 0.0
  %629 = vmatpush1.msra.mxu0 0.0
  %630 = vmatprep.subr.mxu0 0.0
  %631 = vmatpush1.msra.mxu0 0.0
  %632 = vmatprep.subr.mxu0 0.0
  %633 = vmatpush1.msra.mxu0 0.0
  %634 = vmatprep.subr.mxu0 0.0
  %635 = vmatpush1.msra.mxu0 0.0
  %636 = vmatprep.subr.mxu0 0.0
  %637 = vmatpush1.msra.mxu0 0.0
  %638 = vmatprep.subr.mxu0 0.0
  %639 = vmatpush1.msra.mxu0 0.0
  %640 = vmatprep.subr.mxu0 0.0
  %641 = vmatpush1.msra.mxu0 0.0
  %642 = vmatprep.subr.mxu0 0.0
  %643 = vmatpush1.msra.mxu0 0.0
  %644 = vmatprep.subr.mxu0 0.0
  %645 = vmatpush1.msra.mxu0 0.0
  %646 = vmatprep.subr.mxu0 0.0
  %647 = vmatpush1.msra.mxu0 0.0
  %648 = vmatprep.subr.mxu0 0.0
  %649 = vmatpush1.msra.mxu0 0.0
  %650 = vmatprep.subr.mxu0 0.0
  %651 = vmatpush1.msra.mxu0 0.0
  %652 = vmatprep.subr.mxu0 0.0
  %653 = vmatpush1.msra.mxu0 0.0
  %654 = vmatprep.subr.mxu0 0.0
  %655 = vmatpush1.msra.mxu0 0.0
  %656 = vmatprep.subr.mxu0 0.0
  %657 = vmatpush1.msra.mxu0 0.0
  %658 = vmatprep.subr.mxu0 0.0
  %659 = vmatpush1.msra.mxu0 0.0
  %660 = vmatprep.subr.mxu0 0.0
  %661 = vmatpush1.msra.mxu0 0.0
  %662 = vmatprep.subr.mxu0 0.0
  %663 = vmatpush1.msra.mxu0 0.0
  %664 = vmatprep.mubr.f32.mxu0 0.0
  %665 = vmatmul.mubr.f32.gmra.mrb[0].mxu0 %v598
  %v666 = vpop.f32.mrb[0].mxu0
  %v667 = vadd.f32 %v595, %v666
  %v668 = vpop.f32.mrb[0].mxu0
  %669 = vdwg.mxu0
  %v670 = vmax.f32 %v667, 0.0
  %v671 = vld [vmem:[%s11] sm:$0xff]
  %v672 = vld [vmem:[%s11 + $0x8] sm:$0xff]
  %v673 = vld [vmem:[%s11 + $0x10] sm:$0xff]
  %v674 = vld [vmem:[%s11 + $0x18] sm:$0xff]
  %v675 = vld [vmem:[%s12] sm:$0x1]
  %v677 = vlaneseq
  %v678 = vshrl.u32 %v677, 7
  %v679 = vsub.s32 0, %v678
  %v680 = vrot.slane %v675, %v679
  %682 = vrot.lane.b32.xlu0 %v585, 96
  %v683 = vpop.permute.xlu0 %682
  %v684 = vsel %vm175, %v683, 0
  %686 = vmatprep.subr.mxu0 0.0
  %687 = vmatpush1.msra.mxu0 %v671
  %688 = vmatprep.subr.mxu0 0.0
  %689 = vmatpush1.msra.mxu0 %v672
  %690 = vmatprep.subr.mxu0 0.0
  %691 = vmatpush1.msra.mxu0 %v673
  %692 = vmatprep.subr.mxu0 0.0
  %693 = vmatpush1.msra.mxu0 %v674
  %694 = vmatprep.subr.mxu0 0.0
  %695 = vmatpush1.msra.mxu0 0.0
  %696 = vmatprep.subr.mxu0 0.0
  %697 = vmatpush1.msra.mxu0 0.0
  %698 = vmatprep.subr.mxu0 0.0
  %699 = vmatpush1.msra.mxu0 0.0
  %700 = vmatprep.subr.mxu0 0.0
  %701 = vmatpush1.msra.mxu0 0.0
  %702 = vmatprep.subr.mxu0 0.0
  %703 = vmatpush1.msra.mxu0 0.0
  %704 = vmatprep.subr.mxu0 0.0
  %705 = vmatpush1.msra.mxu0 0.0
  %706 = vmatprep.subr.mxu0 0.0
  %707 = vmatpush1.msra.mxu0 0.0
  %708 = vmatprep.subr.mxu0 0.0
  %709 = vmatpush1.msra.mxu0 0.0
  %710 = vmatprep.subr.mxu0 0.0
  %711 = vmatpush1.msra.mxu0 0.0
  %712 = vmatprep.subr.mxu0 0.0
  %713 = vmatpush1.msra.mxu0 0.0
  %714 = vmatprep.subr.mxu0 0.0
  %715 = vmatpush1.msra.mxu0 0.0
  %716 = vmatprep.subr.mxu0 0.0
  %717 = vmatpush1.msra.mxu0 0.0
  %718 = vmatprep.subr.mxu0 0.0
  %719 = vmatpush1.msra.mxu0 0.0
  %720 = vmatprep.subr.mxu0 0.0
  %721 = vmatpush1.msra.mxu0 0.0
  %722 = vmatprep.subr.mxu0 0.0
  %723 = vmatpush1.msra.mxu0 0.0
  %724 = vmatprep.subr.mxu0 0.0
  %725 = vmatpush1.msra.mxu0 0.0
  %726 = vmatprep.subr.mxu0 0.0
  %727 = vmatpush1.msra.mxu0 0.0
  %728 = vmatprep.subr.mxu0 0.0
  %729 = vmatpush1.msra.mxu0 0.0
  %730 = vmatprep.subr.mxu0 0.0
  %731 = vmatpush1.msra.mxu0 0.0
  %732 = vmatprep.subr.mxu0 0.0
  %733 = vmatpush1.msra.mxu0 0.0
  %734 = vmatprep.subr.mxu0 0.0
  %735 = vmatpush1.msra.mxu0 0.0
  %736 = vmatprep.subr.mxu0 0.0
  %737 = vmatpush1.msra.mxu0 0.0
  %738 = vmatprep.subr.mxu0 0.0
  %739 = vmatpush1.msra.mxu0 0.0
  %740 = vmatprep.subr.mxu0 0.0
  %741 = vmatpush1.msra.mxu0 0.0
  %742 = vmatprep.subr.mxu0 0.0
  %743 = vmatpush1.msra.mxu0 0.0
  %744 = vmatprep.subr.mxu0 0.0
  %745 = vmatpush1.msra.mxu0 0.0
  %746 = vmatprep.subr.mxu0 0.0
  %747 = vmatpush1.msra.mxu0 0.0
  %748 = vmatprep.subr.mxu0 0.0
  %749 = vmatpush1.msra.mxu0 0.0
  %750 = vmatprep.mubr.f32.mxu0 0.0
  %751 = vmatmul.mubr.f32.gmra.mrb[0].mxu0 %v684
  %v752 = vpop.f32.mrb[0].mxu0
  %v753 = vadd.f32 %v680, %v752
  %v754 = vpop.f32.mrb[0].mxu0
  %755 = vdwg.mxu0
  %v756 = vmax.f32 %v753, 0.0
  %v757 = vld [vmem:[%s13] sm:$0x1]
  %v758 = vlaneseq
  %v759 = vshrl.u32 %v758, 7
  %v760 = vsub.s32 0, %v759
  %v761 = vrot.slane %v757, %v760
  %v762 = vmul.f32 %v670, %v761
  %v763 = vsel %vm388, %v762, 0.0
  %764 = vadd.xlane.f32.xlu0 %v763
  %v765 = vpop.xlane.xlu0 %764
  %v766 = vld [vmem:[%s13 + $0x1] sm:$0x1]
  %v767 = vlaneseq
  %v768 = vshrl.u32 %v767, 7
  %v769 = vsub.s32 0, %v768
  %v770 = vrot.slane %v766, %v769
  %v771 = vmul.f32 %v756, %v770
  %v772 = vsel %vm388, %v771, 0.0
  %773 = vadd.xlane.f32.xlu0 %v772
  %v774 = vpop.xlane.xlu0 %773
  %vm775 = vcmask 7168
  %v776 = vsel %vm775, %v765, %v774
  %v777 = vld [vmem:[%s14] sm:$0x1]
  %v779 = vlaneseq
  %v780 = vshrl.u32 %v779, 7
  %v781 = vsub.s32 0, %v780
  %v782 = vrot.slane %v777, %v781
  %v784 = vadd.f32 %v776, %v782
  %vm785 = vcmask 9216
  %786 = vst.msk [vmem:[%s15] sm:$0x3] %vm785, %v784
  // Predicated region
  $region62: #{critic_forward.3} parent=0 // pred_check
    _
  $region63: #{critic_forward.3} parent=0 // pred_check_branch
    %788 = sbr.rel (0) target = $region65
  $region64: #{critic_forward.3} parent=0 // pred_region
    _
  $region65: #{critic_forward.3} parent=0 // pred_fallthru
    _
  // Predicated region
  $region66: #{critic_forward.3} parent=0 // pred_check
    _
  $region67: #{critic_forward.3} parent=0 // pred_check_branch
    %790 = sbr.rel (0) target = $region69
  $region68: #{critic_forward.3} parent=0 // pred_region
    _
  $region69: #{critic_forward.3} parent=0 // pred_fallthru
    _

// kernel: critic_forward.2
$region0: #{critic_forward.2}
  #allocation0 [shape = 'u32[]', space=smem, size = 0x4, offset = 0x4, fixed_abs, tag = 'smem constant byte address 0x4 - core index']
  #allocation1 [shape = 'u32[144,128]{1,0:T(1,128)}', space=vmem, size = 0x12000, scoped, tag = 'internal scratch']
  #allocation2 [shape = 'f32[162,32]{1,0:T(8,128)}', space=vmem, size = 0x15000, scoped, tag = 'scratch operand']
  #allocation3 [shape = 'f32[162,288]{1,0:T(8,128)}', space=vmem, size = 0x3f000, scoped, tag = 'scratch operand']
  %s0 = inlined_call_operand.vmem [shape: f32[162,36], index: 0, kind: input, shape index: {}]
  %s1 = inlined_call_operand.vmem [shape: f32[36,32], index: 1, kind: input, shape index: {}]
  %s2 = inlined_call_operand.vmem [shape: f32[1,32], index: 2, kind: input, shape index: {}]
  %s3 = inlined_call_operand.vmem [shape: f32[288,32], index: 3, kind: input, shape index: {}]
  %s4 = inlined_call_operand.vmem [shape: f32[1,32], index: 4, kind: input, shape index: {}]
  %s5 = inlined_call_operand.vmem [shape: f32[288,32], index: 5, kind: input, shape index: {}]
  %s6 = inlined_call_operand.vmem [shape: f32[1,32], index: 6, kind: input, shape index: {}]
  %s7 = inlined_call_operand.vmem [shape: f32[288,32], index: 7, kind: input, shape index: {}]
  %s8 = inlined_call_operand.vmem [shape: f32[1,32], index: 8, kind: input, shape index: {}]
  %s9 = inlined_call_operand.vmem [shape: f32[2,21,32], index: 9, kind: output, shape index: {}]
  %s10 = sld [smem:[#allocation0]]
  $region46: #{critic_forward.2} parent=0
    _
  %s12 = ssub.s32 1, %s10
  %s13 = scalar_select 0, %s12, %s10
  // Predicated region
  $region2: #{critic_forward.2} parent=0 // pred_check
    _
  $region3: #{critic_forward.2} parent=0 // pred_check_branch
    %15 = sbr.rel (0) target = $region5
  $region4: #{critic_forward.2} parent=0 // pred_region
    _
  $region5: #{critic_forward.2} parent=0 // pred_fallthru
    _
  // Predicated region
  $region6: #{critic_forward.2} parent=0 // pred_check
    _
  $region7: #{critic_forward.2} parent=0 // pred_check_branch
    %17 = sbr.rel (0) target = $region9
  $region8: #{critic_forward.2} parent=0 // pred_region
    _
  $region9: #{critic_forward.2} parent=0 // pred_fallthru
    _
  // Predicated region
  $region10: #{critic_forward.2} parent=0 // pred_check
    _
  $region11: #{critic_forward.2} parent=0 // pred_check_branch
    %19 = sbr.rel (0) target = $region13
  $region12: #{critic_forward.2} parent=0 // pred_region
    _
  $region13: #{critic_forward.2} parent=0 // pred_fallthru
    _
  // Predicated region
  $region14: #{critic_forward.2} parent=0 // pred_check
    _
  $region15: #{critic_forward.2} parent=0 // pred_check_branch
    %21 = sbr.rel (0) target = $region17
  $region16: #{critic_forward.2} parent=0 // pred_region
    _
  $region17: #{critic_forward.2} parent=0 // pred_fallthru
    _
  // Predicated region
  $region18: #{critic_forward.2} parent=0 // pred_check
    _
  $region19: #{critic_forward.2} parent=0 // pred_check_branch
    %23 = sbr.rel (0) target = $region21
  $region20: #{critic_forward.2} parent=0 // pred_region
    _
  $region21: #{critic_forward.2} parent=0 // pred_fallthru
    _
  // Predicated region
  $region22: #{critic_forward.2} parent=0 // pred_check
    _
  $region23: #{critic_forward.2} parent=0 // pred_check_branch
    %25 = sbr.rel (0) target = $region25
  $region24: #{critic_forward.2} parent=0 // pred_region
    _
  $region25: #{critic_forward.2} parent=0 // pred_fallthru
    _
  // Predicated region
  $region26: #{critic_forward.2} parent=0 // pred_check
    _
  $region27: #{critic_forward.2} parent=0 // pred_check_branch
    %27 = sbr.rel (0) target = $region29
  $region28: #{critic_forward.2} parent=0 // pred_region
    _
  $region29: #{critic_forward.2} parent=0 // pred_fallthru
    _
  // Predicated region
  $region30: #{critic_forward.2} parent=0 // pred_check
    _
  $region31: #{critic_forward.2} parent=0 // pred_check_branch
    %29 = sbr.rel (0) target = $region33
  $region32: #{critic_forward.2} parent=0 // pred_region
    _
  $region33: #{critic_forward.2} parent=0 // pred_fallthru
    _
  // Predicated region
  $region34: #{critic_forward.2} parent=0 // pred_check
    _
  $region35: #{critic_forward.2} parent=0 // pred_check_branch
    %31 = sbr.rel (0) target = $region37
  $region36: #{critic_forward.2} parent=0 // pred_region
    _
  $region37: #{critic_forward.2} parent=0 // pred_fallthru
    _
  %v32 = vld [vmem:[%s0] sm:$0xff]
  %v33 = vld [vmem:[%s0 + $0x8] sm:$0xff]
  %v34 = vld [vmem:[%s0 + $0x10] sm:$0xff]
  %v35 = vld [vmem:[%s0 + $0x18] sm:$0xff]
  %v36 = vld [vmem:[%s0 + $0x20] sm:$0xff]
  %v37 = vld [vmem:[%s0 + $0x28] sm:$0xff]
  %v38 = vld [vmem:[%s0 + $0x30] sm:$0xff]
  %v39 = vld [vmem:[%s0 + $0x38] sm:$0xff]
  %v40 = vld [vmem:[%s0 + $0x40] sm:$0xff]
  %v41 = vld [vmem:[%s0 + $0x48] sm:$0xff]
  %v42 = vld [vmem:[%s0 + $0x50] sm:$0xff]
  %v43 = vld [vmem:[%s0 + $0x58] sm:$0xff]
  %v44 = vld [vmem:[%s0 + $0x60] sm:$0xff]
  %v45 = vld [vmem:[%s0 + $0x68] sm:$0xff]
  %v46 = vld [vmem:[%s0 + $0x70] sm:$0xff]
  %v47 = vld [vmem:[%s0 + $0x78] sm:$0xff]
  %v48 = vld [vmem:[%s0 + $0x80] sm:$0xff]
  %v49 = vld [vmem:[%s0 + $0x88] sm:$0xff]
  %v50 = vld [vmem:[%s0 + $0x90] sm:$0xff]
  %v51 = vld [vmem:[%s0 + $0x98] sm:$0xff]
  %v52 = vld [vmem:[%s0 + $0xa0] sm:$0x3]
  %v53 = vld [vmem:[%s1] sm:$0xff]
  %v54 = vld [vmem:[%s1 + $0x8] sm:$0xff]
  %v55 = vld [vmem:[%s1 + $0x10] sm:$0xff]
  %v56 = vld [vmem:[%s1 + $0x18] sm:$0xff]
  %v57 = vld [vmem:[%s1 + $0x20] sm:$0xf]
  %v58 = vld [vmem:[%s2] sm:$0x1]
  %v60 = vlaneseq
  %v61 = vshrl.u32 %v60, 7
  %v62 = vsub.s32 0, %v61
  %v63 = vrot.slane %v58, %v62
  %vm65 = vcmask 293888
  %v67 = vsel %vm65, %v32, 0
  %v70 = vsel %vm65, %v33, 0
  %v73 = vsel %vm65, %v34, 0
  %v76 = vsel %vm65, %v35, 0
  %v79 = vsel %vm65, %v36, 0
  %v82 = vsel %vm65, %v37, 0
  %v85 = vsel %vm65, %v38, 0
  %v88 = vsel %vm65, %v39, 0
  %v91 = vsel %vm65, %v40, 0
  %v94 = vsel %vm65, %v41, 0
  %v97 = vsel %vm65, %v42, 0
  %v100 = vsel %vm65, %v43, 0
  %v103 = vsel %vm65, %v44, 0
  %v106 = vsel %vm65, %v45, 0
  %v109 = vsel %vm65, %v46, 0
  %v112 = vsel %vm65, %v47, 0
  %v115 = vsel %vm65, %v48, 0
  %v118 = vsel %vm65, %v49, 0
  %v121 = vsel %vm65, %v50, 0
  %v124 = vsel %vm65, %v51, 0
  %v127 = vsel %vm65, %v52, 0
  %vm129 = vcmask 1043456
  %v131 = vsel %vm129, %v57, 0
  %133 = vmatprep.subr.mxu0 0.0
  %134 = vmatpush1.msra.mxu0 %v53
  %135 = vmatprep.subr.mxu0 0.0
  %136 = vmatpush1.msra.mxu0 %v54
  %137 = vmatprep.subr.mxu0 0.0
  %138 = vmatpush1.msra.mxu0 %v55
  %139 = vmatprep.subr.mxu0 0.0
  %140 = vmatpush1.msra.mxu0 %v56
  %141 = vmatprep.subr.mxu0 0.0
  %142 = vmatpush1.msra.mxu0 %v131
  %143 = vmatprep.subr.mxu0 0.0
  %144 = vmatpush1.msra.mxu0 0.0
  %145 = vmatprep.subr.mxu0 0.0
  %146 = vmatpush1.msra.mxu0 0.0
  %147 = vmatprep.subr.mxu0 0.0
  %148 = vmatpush1.msra.mxu0 0.0
  %149 = vmatprep.subr.mxu0 0.0
  %150 = vmatpush1.msra.mxu0 0.0
  %151 = vmatprep.subr.mxu0 0.0
  %152 = vmatpush1.msra.mxu0 0.0
  %153 = vmatprep.subr.mxu0 0.0
  %154 = vmatpush1.msra.mxu0 0.0
  %155 = vmatprep.subr.mxu0 0.0
  %156 = vmatpush1.msra.mxu0 0.0
  %157 = vmatprep.subr.mxu0 0.0
  %158 = vmatpush1.msra.mxu0 0.0
  %159 = vmatprep.subr.mxu0 0.0
  %160 = vmatpush1.msra.mxu0 0.0
  %161 = vmatprep.subr.mxu0 0.0
  %162 = vmatpush1.msra.mxu0 0.0
  %163 = vmatprep.subr.mxu0 0.0
  %164 = vmatpush1.msra.mxu0 0.0
  %165 = vmatprep.subr.mxu0 0.0
  %166 = vmatpush1.msra.mxu0 0.0
  %167 = vmatprep.subr.mxu0 0.0
  %168 = vmatpush1.msra.mxu0 0.0
  %169 = vmatprep.subr.mxu0 0.0
  %170 = vmatpush1.msra.mxu0 0.0
  %171 = vmatprep.subr.mxu0 0.0
  %172 = vmatpush1.msra.mxu0 0.0
  %173 = vmatprep.subr.mxu0 0.0
  %174 = vmatpush1.msra.mxu0 0.0
  %175 = vmatprep.subr.mxu0 0.0
  %176 = vmatpush1.msra.mxu0 0.0
  %177 = vmatprep.subr.mxu0 0.0
  %178 = vmatpush1.msra.mxu0 0.0
  %179 = vmatprep.subr.mxu0 0.0
  %180 = vmatpush1.msra.mxu0 0.0
  %181 = vmatprep.subr.mxu0 0.0
  %182 = vmatpush1.msra.mxu0 0.0
  %183 = vmatprep.subr.mxu0 0.0
  %184 = vmatpush1.msra.mxu0 0.0
  %185 = vmatprep.subr.mxu0 0.0
  %186 = vmatpush1.msra.mxu0 0.0
  %187 = vmatprep.subr.mxu0 0.0
  %188 = vmatpush1.msra.mxu0 0.0
  %189 = vmatprep.subr.mxu0 0.0
  %190 = vmatpush1.msra.mxu0 0.0
  %191 = vmatprep.subr.mxu0 0.0
  %192 = vmatpush1.msra.mxu0 0.0
  %193 = vmatprep.subr.mxu0 0.0
  %194 = vmatpush1.msra.mxu0 0.0
  %195 = vmatprep.subr.mxu0 0.0
  %196 = vmatpush1.msra.mxu0 0.0
  %197 = vmatprep.mubr.f32.mxu0 0.0
  %198 = vmatmul.mubr.f32.gmra.mrb[0].mxu0 %v67
  %v199 = vpop.f32.mrb[0].mxu0
  %v200 = vadd.f32 %v63, %v199
  %v201 = vpop.f32.mrb[0].mxu0
  %202 = vmatprep.mubr.f32.mxu0 0.0
  %203 = vmatmul.mubr.f32.gmra.mrb[0].mxu0 %v70
  %v204 = vpop.f32.mrb[0].mxu0
  %v205 = vadd.f32 %v63, %v204
  %v206 = vpop.f32.mrb[0].mxu0
  %207 = vmatprep.mubr.f32.mxu0 0.0
  %208 = vmatmul.mubr.f32.gmra.mrb[0].mxu0 %v73
  %v209 = vpop.f32.mrb[0].mxu0
  %v210 = vadd.f32 %v63, %v209
  %v211 = vpop.f32.mrb[0].mxu0
  %212 = vmatprep.mubr.f32.mxu0 0.0
  %213 = vmatmul.mubr.f32.gmra.mrb[0].mxu0 %v76
  %v214 = vpop.f32.mrb[0].mxu0
  %v215 = vadd.f32 %v63, %v214
  %v216 = vpop.f32.mrb[0].mxu0
  %217 = vmatprep.mubr.f32.mxu0 0.0
  %218 = vmatmul.mubr.f32.gmra.mrb[0].mxu0 %v79
  %v219 = vpop.f32.mrb[0].mxu0
  %v220 = vadd.f32 %v63, %v219
  %v221 = vpop.f32.mrb[0].mxu0
  %222 = vmatprep.mubr.f32.mxu0 0.0
  %223 = vmatmul.mubr.f32.gmra.mrb[0].mxu0 %v82
  %v224 = vpop.f32.mrb[0].mxu0
  %v225 = vadd.f32 %v63, %v224
  %v226 = vpop.f32.mrb[0].mxu0
  %227 = vmatprep.mubr.f32.mxu0 0.0
  %228 = vmatmul.mubr.f32.gmra.mrb[0].mxu0 %v85
  %v229 = vpop.f32.mrb[0].mxu0
  %v230 = vadd.f32 %v63, %v229
  %v231 = vpop.f32.mrb[0].mxu0
  %232 = vmatprep.mubr.f32.mxu0 0.0
  %233 = vmatmul.mubr.f32.gmra.mrb[0].mxu0 %v88
  %v234 = vpop.f32.mrb[0].mxu0
  %v235 = vadd.f32 %v63, %v234
  %v236 = vpop.f32.mrb[0].mxu0
  %237 = vmatprep.mubr.f32.mxu0 0.0
  %238 = vmatmul.mubr.f32.gmra.mrb[0].mxu0 %v91
  %v239 = vpop.f32.mrb[0].mxu0
  %v240 = vadd.f32 %v63, %v239
  %v241 = vpop.f32.mrb[0].mxu0
  %242 = vmatprep.mubr.f32.mxu0 0.0
  %243 = vmatmul.mubr.f32.gmra.mrb[0].mxu0 %v94
  %v244 = vpop.f32.mrb[0].mxu0
  %v245 = vadd.f32 %v63, %v244
  %v246 = vpop.f32.mrb[0].mxu0
  %247 = vmatprep.mubr.f32.mxu0 0.0
  %248 = vmatmul.mubr.f32.gmra.mrb[0].mxu0 %v97
  %v249 = vpop.f32.mrb[0].mxu0
  %v250 = vadd.f32 %v63, %v249
  %v251 = vpop.f32.mrb[0].mxu0
  %252 = vmatprep.mubr.f32.mxu0 0.0
  %253 = vmatmul.mubr.f32.gmra.mrb[0].mxu0 %v100
  %v254 = vpop.f32.mrb[0].mxu0
  %v255 = vadd.f32 %v63, %v254
  %v256 = vpop.f32.mrb[0].mxu0
  %257 = vmatprep.mubr.f32.mxu0 0.0
  %258 = vmatmul.mubr.f32.gmra.mrb[0].mxu0 %v103
  %v259 = vpop.f32.mrb[0].mxu0
  %v260 = vadd.f32 %v63, %v259
  %v261 = vpop.f32.mrb[0].mxu0
  %262 = vmatprep.mubr.f32.mxu0 0.0
  %263 = vmatmul.mubr.f32.gmra.mrb[0].mxu0 %v106
  %v264 = vpop.f32.mrb[0].mxu0
  %v265 = vadd.f32 %v63, %v264
  %v266 = vpop.f32.mrb[0].mxu0
  %267 = vmatprep.mubr.f32.mxu0 0.0
  %268 = vmatmul.mubr.f32.gmra.mrb[0].mxu0 %v109
  %v269 = vpop.f32.mrb[0].mxu0
  %v270 = vadd.f32 %v63, %v269
  %v271 = vpop.f32.mrb[0].mxu0
  %272 = vmatprep.mubr.f32.mxu0 0.0
  %273 = vmatmul.mubr.f32.gmra.mrb[0].mxu0 %v112
  %v274 = vpop.f32.mrb[0].mxu0
  %v275 = vadd.f32 %v63, %v274
  %v276 = vpop.f32.mrb[0].mxu0
  %277 = vmatprep.mubr.f32.mxu0 0.0
  %278 = vmatmul.mubr.f32.gmra.mrb[0].mxu0 %v115
  %v279 = vpop.f32.mrb[0].mxu0
  %v280 = vadd.f32 %v63, %v279
  %v281 = vpop.f32.mrb[0].mxu0
  %282 = vmatprep.mubr.f32.mxu0 0.0
  %283 = vmatmul.mubr.f32.gmra.mrb[0].mxu0 %v118
  %v284 = vpop.f32.mrb[0].mxu0
  %v285 = vadd.f32 %v63, %v284
  %v286 = vpop.f32.mrb[0].mxu0
  %287 = vmatprep.mubr.f32.mxu0 0.0
  %288 = vmatmul.mubr.f32.gmra.mrb[0].mxu0 %v121
  %v289 = vpop.f32.mrb[0].mxu0
  %v290 = vadd.f32 %v63, %v289
  %v291 = vpop.f32.mrb[0].mxu0
  %292 = vmatprep.mubr.f32.mxu0 0.0
  %293 = vmatmul.mubr.f32.gmra.mrb[0].mxu0 %v124
  %v294 = vpop.f32.mrb[0].mxu0
  %v295 = vadd.f32 %v63, %v294
  %v296 = vpop.f32.mrb[0].mxu0
  %297 = vmatprep.mubr.f32.mxu0 0.0
  %298 = vmatmul.mubr.f32.gmra.mrb[0].mxu0 %v127
  %v299 = vpop.f32.mrb[0].mxu0
  %v300 = vadd.f32 %v63, %v299
  %v301 = vpop.f32.mrb[0].mxu0
  %302 = vdwg.mxu0
  %v303 = vmax.f32 %v200, 0.0
  %v304 = vmax.f32 %v205, 0.0
  %v305 = vmax.f32 %v210, 0.0
  %v306 = vmax.f32 %v215, 0.0
  %v307 = vmax.f32 %v220, 0.0
  %v308 = vmax.f32 %v225, 0.0
  %v309 = vmax.f32 %v230, 0.0
  %v310 = vmax.f32 %v235, 0.0
  %v311 = vmax.f32 %v240, 0.0
  %v312 = vmax.f32 %v245, 0.0
  %v313 = vmax.f32 %v250, 0.0
  %v314 = vmax.f32 %v255, 0.0
  %v315 = vmax.f32 %v260, 0.0
  %v316 = vmax.f32 %v265, 0.0
  %v317 = vmax.f32 %v270, 0.0
  %v318 = vmax.f32 %v275, 0.0
  %v319 = vmax.f32 %v280, 0.0
  %v320 = vmax.f32 %v285, 0.0
  %v321 = vmax.f32 %v290, 0.0
  %v322 = vmax.f32 %v295, 0.0
  %v323 = vmax.f32 %v300, 0.0
  %vm324 = vcmask 261120
  %325 = vst.msk [vmem:[#allocation2] sm:$0xff] %vm324, %v303
  %326 = vst.msk [vmem:[#allocation2 + $0x8] sm:$0xff] %vm324, %v304
  %327 = vst.msk [vmem:[#allocation2 + $0x10] sm:$0xff] %vm324, %v305
  %328 = vst.msk [vmem:[#allocation2 + $0x18] sm:$0xff] %vm324, %v306
  %329 = vst.msk [vmem:[#allocation2 + $0x20] sm:$0xff] %vm324, %v307
  %330 = vst.msk [vmem:[#allocation2 + $0x28] sm:$0xff] %vm324, %v308
  %331 = vst.msk [vmem:[#allocation2 + $0x30] sm:$0xff] %vm324, %v309
  %332 = vst.msk [vmem:[#allocation2 + $0x38] sm:$0xff] %vm324, %v310
  %333 = vst.msk [vmem:[#allocation2 + $0x40] sm:$0xff] %vm324, %v311
  %334 = vst.msk [vmem:[#allocation2 + $0x48] sm:$0xff] %vm324, %v312
  %335 = vst.msk [vmem:[#allocation2 + $0x50] sm:$0xff] %vm324, %v313
  %336 = vst.msk [vmem:[#allocation2 + $0x58] sm:$0xff] %vm324, %v314
  %337 = vst.msk [vmem:[#allocation2 + $0x60] sm:$0xff] %vm324, %v315
  %338 = vst.msk [vmem:[#allocation2 + $0x68] sm:$0xff] %vm324, %v316
  %339 = vst.msk [vmem:[#allocation2 + $0x70] sm:$0xff] %vm324, %v317
  %340 = vst.msk [vmem:[#allocation2 + $0x78] sm:$0xff] %vm324, %v318
  %341 = vst.msk [vmem:[#allocation2 + $0x80] sm:$0xff] %vm324, %v319
  %342 = vst.msk [vmem:[#allocation2 + $0x88] sm:$0xff] %vm324, %v320
  %343 = vst.msk [vmem:[#allocation2 + $0x90] sm:$0xff] %vm324, %v321
  %344 = vst.msk [vmem:[#allocation2 + $0x98] sm:$0xff] %vm324, %v322
  %vm345 = vcmask 254976
  %346 = vst.msk [vmem:[#allocation2 + $0xa0] sm:$0x3] %vm345, %v323
  %v347 = vld [vmem:[#allocation2] sm:$0xff]
  %v348 = vld [vmem:[#allocation2 + $0x8] sm:$0xff]
  %v349 = vld [vmem:[#allocation2 + $0x10] sm:$0xff]
  %v350 = vld [vmem:[#allocation2 + $0x18] sm:$0xff]
  %v351 = vld [vmem:[#allocation2 + $0x20] sm:$0xff]
  %v352 = vld [vmem:[#allocation2 + $0x28] sm:$0xff]
  %v353 = vld [vmem:[#allocation2 + $0x30] sm:$0xff]
  %v354 = vld [vmem:[#allocation2 + $0x38] sm:$0xff]
  %v355 = vld [vmem:[#allocation2 + $0x40] sm:$0xff]
  %v356 = vld [vmem:[#allocation2 + $0x48] sm:$0xff]
  %v357 = vld [vmem:[#allocation2 + $0x50] sm:$0xff]
  %v358 = vld [vmem:[#allocation2 + $0x58] sm:$0xff]
  %v359 = vld [vmem:[#allocation2 + $0x60] sm:$0xff]
  %v360 = vld [vmem:[#allocation2 + $0x68] sm:$0xff]
  %v361 = vld [vmem:[#allocation2 + $0x70] sm:$0xff]
  %v362 = vld [vmem:[#allocation2 + $0x78] sm:$0xff]
  %v363 = vld [vmem:[#allocation2 + $0x80] sm:$0xff]
  %v364 = vld [vmem:[#allocation2 + $0x88] sm:$0x3f]
  %365 = vst.msk [vmem:[#allocation3] sm:$0xff] %vm324, %v347
  %366 = vst.msk [vmem:[#allocation3 + $0x18] sm:$0xff] %vm324, %v348
  %367 = vst.msk [vmem:[#allocation3 + $0x30] sm:$0xff] %vm324, %v349
  %368 = vst.msk [vmem:[#allocation3 + $0x48] sm:$0xff] %vm324, %v350
  %369 = vst.msk [vmem:[#allocation3 + $0x60] sm:$0xff] %vm324, %v351
  %370 = vst.msk [vmem:[#allocation3 + $0x78] sm:$0xff] %vm324, %v352
  %371 = vst.msk [vmem:[#allocation3 + $0x90] sm:$0xff] %vm324, %v353
  %372 = vst.msk [vmem:[#allocation3 + $0xa8] sm:$0xff] %vm324, %v354
  %373 = vst.msk [vmem:[#allocation3 + $0xc0] sm:$0xff] %vm324, %v355
  %374 = vst.msk [vmem:[#allocation3 + $0xd8] sm:$0xff] %vm324, %v356
  %375 = vst.msk [vmem:[#allocation3 + $0xf0] sm:$0xff] %vm324, %v357
  %376 = vst.msk [vmem:[#allocation3 + $0x108] sm:$0xff] %vm324, %v358
  %377 = vst.msk [vmem:[#allocation3 + $0x120] sm:$0xff] %vm324, %v359
  %378 = vst.msk [vmem:[#allocation3 + $0x138] sm:$0xff] %vm324, %v360
  %379 = vst.msk [vmem:[#allocation3 + $0x150] sm:$0xff] %vm324, %v361
  %380 = vst.msk [vmem:[#allocation3 + $0x168] sm:$0xff] %vm324, %v362
  %381 = vst.msk [vmem:[#allocation3 + $0x180] sm:$0xff] %vm324, %v363
  %vm382 = vcmask 259072
  %383 = vst.msk [vmem:[#allocation3 + $0x198] sm:$0x3f] %vm382, %v364
  %v384 = vld [vmem:[#allocation2 + $0x1] sm:$0xff]
  %v385 = vld [vmem:[#allocation2 + $0x9] sm:$0xff]
  %v386 = vld [vmem:[#allocation2 + $0x11] sm:$0xff]
  %v387 = vld [vmem:[#allocation2 + $0x19] sm:$0xff]
  %v388 = vld [vmem:[#allocation2 + $0x21] sm:$0xff]
  %v389 = vld [vmem:[#allocation2 + $0x29] sm:$0xff]
  %v390 = vld [vmem:[#allocation2 + $0x31] sm:$0xff]
  %v391 = vld [vmem:[#allocation2 + $0x39] sm:$0xff]
  %v392 = vld [vmem:[#allocation2 + $0x41] sm:$0xff]
  %v393 = vld [vmem:[#allocation2 + $0x49] sm:$0xff]
  %v394 = vld [vmem:[#allocation2 + $0x51] sm:$0xff]
  %v395 = vld [vmem:[#allocation2 + $0x59] sm:$0xff]
  %v396 = vld [vmem:[#allocation2 + $0x61] sm:$0xff]
  %v397 = vld [vmem:[#allocation2 + $0x69] sm:$0xff]
  %v398 = vld [vmem:[#allocation2 + $0x71] sm:$0xff]
  %v399 = vld [vmem:[#allocation2 + $0x79] sm:$0xff]
  %v400 = vld [vmem:[#allocation2 + $0x81] sm:$0xff]
  %v401 = vld [vmem:[#allocation2 + $0x89] sm:$0x3f]
  %420 = vrot.lane.b32.xlu0 %v384, 32
  %v421 = vpop.permute.xlu0 %420
  %422 = vrot.lane.b32.xlu0 %v385, 32
  %v423 = vpop.permute.xlu0 %422
  %424 = vrot.lane.b32.xlu0 %v386, 32
  %v425 = vpop.permute.xlu0 %424
  %426 = vrot.lane.b32.xlu0 %v387, 32
  %v427 = vpop.permute.xlu0 %426
  %428 = vrot.lane.b32.xlu0 %v388, 32
  %v429 = vpop.permute.xlu0 %428
  %430 = vrot.lane.b32.xlu0 %v389, 32
  %v431 = vpop.permute.xlu0 %430
  %432 = vrot.lane.b32.xlu0 %v390, 32
  %v433 = vpop.permute.xlu0 %432
  %434 = vrot.lane.b32.xlu0 %v391, 32
  %v435 = vpop.permute.xlu0 %434
  %436 = vrot.lane.b32.xlu0 %v392, 32
  %v437 = vpop.permute.xlu0 %436
  %438 = vrot.lane.b32.xlu0 %v393, 32
  %v439 = vpop.permute.xlu0 %438
  %440 = vrot.lane.b32.xlu0 %v394, 32
  %v441 = vpop.permute.xlu0 %440
  %442 = vrot.lane.b32.xlu0 %v395, 32
  %v443 = vpop.permute.xlu0 %442
  %444 = vrot.lane.b32.xlu0 %v396, 32
  %v445 = vpop.permute.xlu0 %444
  %446 = vrot.lane.b32.xlu0 %v397, 32
  %v447 = vpop.permute.xlu0 %446
  %448 = vrot.lane.b32.xlu0 %v398, 32
  %v449 = vpop.permute.xlu0 %448
  %450 = vrot.lane.b32.xlu0 %v399, 32
  %v451 = vpop.permute.xlu0 %450
  %452 = vrot.lane.b32.xlu0 %v400, 32
  %v453 = vpop.permute.xlu0 %452
  %454 = vrot.lane.b32.xlu0 %v401, 32
  %v455 = vpop.permute.xlu0 %454
  %vm474 = vcmask 523520
  %475 = vst.msk [vmem:[#allocation3] sm:$0xff] %vm474, %v421
  %476 = vst.msk [vmem:[#allocation3 + $0x18] sm:$0xff] %vm474, %v423
  %477 = vst.msk [vmem:[#allocation3 + $0x30] sm:$0xff] %vm474, %v425
  %478 = vst.msk [vmem:[#allocation3 + $0x48] sm:$0xff] %vm474, %v427
  %479 = vst.msk [vmem:[#allocation3 + $0x60] sm:$0xff] %vm474, %v429
  %480 = vst.msk [vmem:[#allocation3 + $0x78] sm:$0xff] %vm474, %v431
  %481 = vst.msk [vmem:[#allocation3 + $0x90] sm:$0xff] %vm474, %v433
  %482 = vst.msk [vmem:[#allocation3 + $0xa8] sm:$0xff] %vm474, %v435
  %483 = vst.msk [vmem:[#allocation3 + $0xc0] sm:$0xff] %vm474, %v437
  %484 = vst.msk [vmem:[#allocation3 + $0xd8] sm:$0xff] %vm474, %v439
  %485 = vst.msk [vmem:[#allocation3 + $0xf0] sm:$0xff] %vm474, %v441
  %486 = vst.msk [vmem:[#allocation3 + $0x108] sm:$0xff] %vm474, %v443
  %487 = vst.msk [vmem:[#allocation3 + $0x120] sm:$0xff] %vm474, %v445
  %488 = vst.msk [vmem:[#allocation3 + $0x138] sm:$0xff] %vm474, %v447
  %489 = vst.msk [vmem:[#allocation3 + $0x150] sm:$0xff] %vm474, %v449
  %490 = vst.msk [vmem:[#allocation3 + $0x168] sm:$0xff] %vm474, %v451
  %491 = vst.msk [vmem:[#allocation3 + $0x180] sm:$0xff] %vm474, %v453
  %vm492 = vcmask 521472
  %493 = vst.msk [vmem:[#allocation3 + $0x198] sm:$0x3f] %vm492, %v455
  %v494 = vld [vmem:[#allocation2 + $0x2] sm:$0xff]
  %v495 = vld [vmem:[#allocation2 + $0xa] sm:$0xff]
  %v496 = vld [vmem:[#allocation2 + $0x12] sm:$0xff]
  %v497 = vld [vmem:[#allocation2 + $0x1a] sm:$0xff]
  %v498 = vld [vmem:[#allocation2 + $0x22] sm:$0xff]
  %v499 = vld [vmem:[#allocation2 + $0x2a] sm:$0xff]
  %v500 = vld [vmem:[#allocation2 + $0x32] sm:$0xff]
  %v501 = vld [vmem:[#allocation2 + $0x3a] sm:$0xff]
  %v502 = vld [vmem:[#allocation2 + $0x42] sm:$0xff]
  %v503 = vld [vmem:[#allocation2 + $0x4a] sm:$0xff]
  %v504 = vld [vmem:[#allocation2 + $0x52] sm:$0xff]
  %v505 = vld [vmem:[#allocation2 + $0x5a] sm:$0xff]
  %v506 = vld [vmem:[#allocation2 + $0x62] sm:$0xff]
  %v507 = vld [vmem:[#allocation2 + $0x6a] sm:$0xff]
  %v508 = vld [vmem:[#allocation2 + $0x72] sm:$0xff]
  %v509 = vld [vmem:[#allocation2 + $0x7a] sm:$0xff]
  %v510 = vld [vmem:[#allocation2 + $0x82] sm:$0xff]
  %v511 = vld [vmem:[#allocation2 + $0x8a] sm:$0x3f]
  %530 = vrot.lane.b32.xlu0 %v494, 64
  %v531 = vpop.permute.xlu0 %530
  %532 = vrot.lane.b32.xlu0 %v495, 64
  %v533 = vpop.permute.xlu0 %532
  %534 = vrot.lane.b32.xlu0 %v496, 64
  %v535 = vpop.permute.xlu0 %534
  %536 = vrot.lane.b32.xlu0 %v497, 64
  %v537 = vpop.permute.xlu0 %536
  %538 = vrot.lane.b32.xlu0 %v498, 64
  %v539 = vpop.permute.xlu0 %538
  %540 = vrot.lane.b32.xlu0 %v499, 64
  %v541 = vpop.permute.xlu0 %540
  %542 = vrot.lane.b32.xlu0 %v500, 64
  %v543 = vpop.permute.xlu0 %542
  %544 = vrot.lane.b32.xlu0 %v501, 64
  %v545 = vpop.permute.xlu0 %544
  %546 = vrot.lane.b32.xlu0 %v502, 64
  %v547 = vpop.permute.xlu0 %546
  %548 = vrot.lane.b32.xlu0 %v503, 64
  %v549 = vpop.permute.xlu0 %548
  %550 = vrot.lane.b32.xlu0 %v504, 64
  %v551 = vpop.permute.xlu0 %550
  %552 = vrot.lane.b32.xlu0 %v505, 64
  %v553 = vpop.permute.xlu0 %552
  %554 = vrot.lane.b32.xlu0 %v506, 64
  %v555 = vpop.permute.xlu0 %554
  %556 = vrot.lane.b32.xlu0 %v507, 64
  %v557 = vpop.permute.xlu0 %556
  %558 = vrot.lane.b32.xlu0 %v508, 64
  %v559 = vpop.permute.xlu0 %558
  %560 = vrot.lane.b32.xlu0 %v509, 64
  %v561 = vpop.permute.xlu0 %560
  %562 = vrot.lane.b32.xlu0 %v510, 64
  %v563 = vpop.permute.xlu0 %562
  %564 = vrot.lane.b32.xlu0 %v511, 64
  %v565 = vpop.permute.xlu0 %564
  %vm584 = vcmask 785920
  %585 = vst.msk [vmem:[#allocation3] sm:$0xff] %vm584, %v531
  %586 = vst.msk [vmem:[#allocation3 + $0x18] sm:$0xff] %vm584, %v533
  %587 = vst.msk [vmem:[#allocation3 + $0x30] sm:$0xff] %vm584, %v535
  %588 = vst.msk [vmem:[#allocation3 + $0x48] sm:$0xff] %vm584, %v537
  %589 = vst.msk [vmem:[#allocation3 + $0x60] sm:$0xff] %vm584, %v539
  %590 = vst.msk [vmem:[#allocation3 + $0x78] sm:$0xff] %vm584, %v541
  %591 = vst.msk [vmem:[#allocation3 + $0x90] sm:$0xff] %vm584, %v543
  %592 = vst.msk [vmem:[#allocation3 + $0xa8] sm:$0xff] %vm584, %v545
  %593 = vst.msk [vmem:[#allocation3 + $0xc0] sm:$0xff] %vm584, %v547
  %594 = vst.msk [vmem:[#allocation3 + $0xd8] sm:$0xff] %vm584, %v549
  %595 = vst.msk [vmem:[#allocation3 + $0xf0] sm:$0xff] %vm584, %v551
  %596 = vst.msk [vmem:[#allocation3 + $0x108] sm:$0xff] %vm584, %v553
  %597 = vst.msk [vmem:[#allocation3 + $0x120] sm:$0xff] %vm584, %v555
  %598 = vst.msk [vmem:[#allocation3 + $0x138] sm:$0xff] %vm584, %v557
  %599 = vst.msk [vmem:[#allocation3 + $0x150] sm:$0xff] %vm584, %v559
  %600 = vst.msk [vmem:[#allocation3 + $0x168] sm:$0xff] %vm584, %v561
  %601 = vst.msk [vmem:[#allocation3 + $0x180] sm:$0xff] %vm584, %v563
  %vm602 = vcmask 783872
  %603 = vst.msk [vmem:[#allocation3 + $0x198] sm:$0x3f] %vm602, %v565
  %v604 = vld [vmem:[#allocation2 + $0x9] sm:$0xff]
  %v605 = vld [vmem:[#allocation2 + $0x11] sm:$0xff]
  %v606 = vld [vmem:[#allocation2 + $0x19] sm:$0xff]
  %v607 = vld [vmem:[#allocation2 + $0x21] sm:$0xff]
  %v608 = vld [vmem:[#allocation2 + $0x29] sm:$0xff]
  %v609 = vld [vmem:[#allocation2 + $0x31] sm:$0xff]
  %v610 = vld [vmem:[#allocation2 + $0x39] sm:$0xff]
  %v611 = vld [vmem:[#allocation2 + $0x41] sm:$0xff]
  %v612 = vld [vmem:[#allocation2 + $0x49] sm:$0xff]
  %v613 = vld [vmem:[#allocation2 + $0x51] sm:$0xff]
  %v614 = vld [vmem:[#allocation2 + $0x59] sm:$0xff]
  %v615 = vld [vmem:[#allocation2 + $0x61] sm:$0xff]
  %v616 = vld [vmem:[#allocation2 + $0x69] sm:$0xff]
  %v617 = vld [vmem:[#allocation2 + $0x71] sm:$0xff]
  %v618 = vld [vmem:[#allocation2 + $0x79] sm:$0xff]
  %v619 = vld [vmem:[#allocation2 + $0x81] sm:$0xff]
  %v620 = vld [vmem:[#allocation2 + $0x89] sm:$0xff]
  %v621 = vld [vmem:[#allocation2 + $0x91] sm:$0x3f]
  %640 = vrot.lane.b32.xlu0 %v604, 96
  %v641 = vpop.permute.xlu0 %640
  %642 = vrot.lane.b32.xlu0 %v605, 96
  %v643 = vpop.permute.xlu0 %642
  %644 = vrot.lane.b32.xlu0 %v606, 96
  %v645 = vpop.permute.xlu0 %644
  %646 = vrot.lane.b32.xlu0 %v607, 96
  %v647 = vpop.permute.xlu0 %646
  %648 = vrot.lane.b32.xlu0 %v608, 96
  %v649 = vpop.permute.xlu0 %648
  %650 = vrot.lane.b32.xlu0 %v609, 96
  %v651 = vpop.permute.xlu0 %650
  %652 = vrot.lane.b32.xlu0 %v610, 96
  %v653 = vpop.permute.xlu0 %652
  %654 = vrot.lane.b32.xlu0 %v611, 96
  %v655 = vpop.permute.xlu0 %654
  %656 = vrot.lane.b32.xlu0 %v612, 96
  %v657 = vpop.permute.xlu0 %656
  %658 = vrot.lane.b32.xlu0 %v613, 96
  %v659 = vpop.permute.xlu0 %658
  %660 = vrot.lane.b32.xlu0 %v614, 96
  %v661 = vpop.permute.xlu0 %660
  %662 = vrot.lane.b32.xlu0 %v615, 96
  %v663 = vpop.permute.xlu0 %662
  %664 = vrot.lane.b32.xlu0 %v616, 96
  %v665 = vpop.permute.xlu0 %664
  %666 = vrot.lane.b32.xlu0 %v617, 96
  %v667 = vpop.permute.xlu0 %666
  %668 = vrot.lane.b32.xlu0 %v618, 96
  %v669 = vpop.permute.xlu0 %668
  %670 = vrot.lane.b32.xlu0 %v619, 96
  %v671 = vpop.permute.xlu0 %670
  %672 = vrot.lane.b32.xlu0 %v620, 96
  %v673 = vpop.permute.xlu0 %672
  %674 = vrot.lane.b32.xlu0 %v621, 96
  %v675 = vpop.permute.xlu0 %674
  %vm694 = vcmask 1048320
  %695 = vst.msk [vmem:[#allocation3] sm:$0xff] %vm694, %v641
  %696 = vst.msk [vmem:[#allocation3 + $0x18] sm:$0xff] %vm694, %v643
  %697 = vst.msk [vmem:[#allocation3 + $0x30] sm:$0xff] %vm694, %v645
  %698 = vst.msk [vmem:[#allocation3 + $0x48] sm:$0xff] %vm694, %v647
  %699 = vst.msk [vmem:[#allocation3 + $0x60] sm:$0xff] %vm694, %v649
  %700 = vst.msk [vmem:[#allocation3 + $0x78] sm:$0xff] %vm694, %v651
  %701 = vst.msk [vmem:[#allocation3 + $0x90] sm:$0xff] %vm694, %v653
  %702 = vst.msk [vmem:[#allocation3 + $0xa8] sm:$0xff] %vm694, %v655
  %703 = vst.msk [vmem:[#allocation3 + $0xc0] sm:$0xff] %vm694, %v657
  %704 = vst.msk [vmem:[#allocation3 + $0xd8] sm:$0xff] %vm694, %v659
  %705 = vst.msk [vmem:[#allocation3 + $0xf0] sm:$0xff] %vm694, %v661
  %706 = vst.msk [vmem:[#allocation3 + $0x108] sm:$0xff] %vm694, %v663
  %707 = vst.msk [vmem:[#allocation3 + $0x120] sm:$0xff] %vm694, %v665
  %708 = vst.msk [vmem:[#allocation3 + $0x138] sm:$0xff] %vm694, %v667
  %709 = vst.msk [vmem:[#allocation3 + $0x150] sm:$0xff] %vm694, %v669
  %710 = vst.msk [vmem:[#allocation3 + $0x168] sm:$0xff] %vm694, %v671
  %711 = vst.msk [vmem:[#allocation3 + $0x180] sm:$0xff] %vm694, %v673
  %vm712 = vcmask 1046272
  %713 = vst.msk [vmem:[#allocation3 + $0x198] sm:$0x3f] %vm712, %v675
  %v714 = vld [vmem:[#allocation2 + $0xa] sm:$0xff]
  %v715 = vld [vmem:[#allocation2 + $0x12] sm:$0xff]
  %v716 = vld [vmem:[#allocation2 + $0x1a] sm:$0xff]
  %v717 = vld [vmem:[#allocation2 + $0x22] sm:$0xff]
  %v718 = vld [vmem:[#allocation2 + $0x2a] sm:$0xff]
  %v719 = vld [vmem:[#allocation2 + $0x32] sm:$0xff]
  %v720 = vld [vmem:[#allocation2 + $0x3a] sm:$0xff]
  %v721 = vld [vmem:[#allocation2 + $0x42] sm:$0xff]
  %v722 = vld [vmem:[#allocation2 + $0x4a] sm:$0xff]
  %v723 = vld [vmem:[#allocation2 + $0x52] sm:$0xff]
  %v724 = vld [vmem:[#allocation2 + $0x5a] sm:$0xff]
  %v725 = vld [vmem:[#allocation2 + $0x62] sm:$0xff]
  %v726 = vld [vmem:[#allocation2 + $0x6a] sm:$0xff]
  %v727 = vld [vmem:[#allocation2 + $0x72] sm:$0xff]
  %v728 = vld [vmem:[#allocation2 + $0x7a] sm:$0xff]
  %v729 = vld [vmem:[#allocation2 + $0x82] sm:$0xff]
  %v730 = vld [vmem:[#allocation2 + $0x8a] sm:$0xff]
  %v731 = vld [vmem:[#allocation2 + $0x92] sm:$0x3f]
  %732 = vst.msk [vmem:[#allocation3 + $0x8] sm:$0xff] %vm324, %v714
  %733 = vst.msk [vmem:[#allocation3 + $0x20] sm:$0xff] %vm324, %v715
  %734 = vst.msk [vmem:[#allocation3 + $0x38] sm:$0xff] %vm324, %v716
  %735 = vst.msk [vmem:[#allocation3 + $0x50] sm:$0xff] %vm324, %v717
  %736 = vst.msk [vmem:[#allocation3 + $0x68] sm:$0xff] %vm324, %v718
  %737 = vst.msk [vmem:[#allocation3 + $0x80] sm:$0xff] %vm324, %v719
  %738 = vst.msk [vmem:[#allocation3 + $0x98] sm:$0xff] %vm324, %v720
  %739 = vst.msk [vmem:[#allocation3 + $0xb0] sm:$0xff] %vm324, %v721
  %740 = vst.msk [vmem:[#allocation3 + $0xc8] sm:$0xff] %vm324, %v722
  %741 = vst.msk [vmem:[#allocation3 + $0xe0] sm:$0xff] %vm324, %v723
  %742 = vst.msk [vmem:[#allocation3 + $0xf8] sm:$0xff] %vm324, %v724
  %743 = vst.msk [vmem:[#allocation3 + $0x110] sm:$0xff] %vm324, %v725
  %744 = vst.msk [vmem:[#allocation3 + $0x128] sm:$0xff] %vm324, %v726
  %745 = vst.msk [vmem:[#allocation3 + $0x140] sm:$0xff] %vm324, %v727
  %746 = vst.msk [vmem:[#allocation3 + $0x158] sm:$0xff] %vm324, %v728
  %747 = vst.msk [vmem:[#allocation3 + $0x170] sm:$0xff] %vm324, %v729
  %748 = vst.msk [vmem:[#allocation3 + $0x188] sm:$0xff] %vm324, %v730
  %749 = vst.msk [vmem:[#allocation3 + $0x1a0] sm:$0x3f] %vm382, %v731
  %v750 = vld [vmem:[#allocation2 + $0xb] sm:$0xff]
  %v751 = vld [vmem:[#allocation2 + $0x13] sm:$0xff]
  %v752 = vld [vmem:[#allocation2 + $0x1b] sm:$0xff]
  %v753 = vld [vmem:[#allocation2 + $0x23] sm:$0xff]
  %v754 = vld [vmem:[#allocation2 + $0x2b] sm:$0xff]
  %v755 = vld [vmem:[#allocation2 + $0x33] sm:$0xff]
  %v756 = vld [vmem:[#allocation2 + $0x3b] sm:$0xff]
  %v757 = vld [vmem:[#allocation2 + $0x43] sm:$0xff]
  %v758 = vld [vmem:[#allocation2 + $0x4b] sm:$0xff]
  %v759 = vld [vmem:[#allocation2 + $0x53] sm:$0xff]
  %v760 = vld [vmem:[#allocation2 + $0x5b] sm:$0xff]
  %v761 = vld [vmem:[#allocation2 + $0x63] sm:$0xff]
  %v762 = vld [vmem:[#allocation2 + $0x6b] sm:$0xff]
  %v763 = vld [vmem:[#allocation2 + $0x73] sm:$0xff]
  %v764 = vld [vmem:[#allocation2 + $0x7b] sm:$0xff]
  %v765 = vld [vmem:[#allocation2 + $0x83] sm:$0xff]
  %v766 = vld [vmem:[#allocation2 + $0x8b] sm:$0xff]
  %v767 = vld [vmem:[#allocation2 + $0x93] sm:$0x3f]
  %786 = vrot.lane.b32.xlu0 %v750, 32
  %v787 = vpop.permute.xlu0 %786
  %788 = vrot.lane.b32.xlu0 %v751, 32
  %v789 = vpop.permute.xlu0 %788
  %790 = vrot.lane.b32.xlu0 %v752, 32
  %v791 = vpop.permute.xlu0 %790
  %792 = vrot.lane.b32.xlu0 %v753, 32
  %v793 = vpop.permute.xlu0 %792
  %794 = vrot.lane.b32.xlu0 %v754, 32
  %v795 = vpop.permute.xlu0 %794
  %796 = vrot.lane.b32.xlu0 %v755, 32
  %v797 = vpop.permute.xlu0 %796
  %798 = vrot.lane.b32.xlu0 %v756, 32
  %v799 = vpop.permute.xlu0 %798
  %800 = vrot.lane.b32.xlu0 %v757, 32
  %v801 = vpop.permute.xlu0 %800
  %802 = vrot.lane.b32.xlu0 %v758, 32
  %v803 = vpop.permute.xlu0 %802
  %804 = vrot.lane.b32.xlu0 %v759, 32
  %v805 = vpop.permute.xlu0 %804
  %806 = vrot.lane.b32.xlu0 %v760, 32
  %v807 = vpop.permute.xlu0 %806
  %808 = vrot.lane.b32.xlu0 %v761, 32
  %v809 = vpop.permute.xlu0 %808
  %810 = vrot.lane.b32.xlu0 %v762, 32
  %v811 = vpop.permute.xlu0 %810
  %812 = vrot.lane.b32.xlu0 %v763, 32
  %v813 = vpop.permute.xlu0 %812
  %814 = vrot.lane.b32.xlu0 %v764, 32
  %v815 = vpop.permute.xlu0 %814
  %816 = vrot.lane.b32.xlu0 %v765, 32
  %v817 = vpop.permute.xlu0 %816
  %818 = vrot.lane.b32.xlu0 %v766, 32
  %v819 = vpop.permute.xlu0 %818
  %820 = vrot.lane.b32.xlu0 %v767, 32
  %v821 = vpop.permute.xlu0 %820
  %840 = vst.msk [vmem:[#allocation3 + $0x8] sm:$0xff] %vm474, %v787
  %841 = vst.msk [vmem:[#allocation3 + $0x20] sm:$0xff] %vm474, %v789
  %842 = vst.msk [vmem:[#allocation3 + $0x38] sm:$0xff] %vm474, %v791
  %843 = vst.msk [vmem:[#allocation3 + $0x50] sm:$0xff] %vm474, %v793
  %844 = vst.msk [vmem:[#allocation3 + $0x68] sm:$0xff] %vm474, %v795
  %845 = vst.msk [vmem:[#allocation3 + $0x80] sm:$0xff] %vm474, %v797
  %846 = vst.msk [vmem:[#allocation3 + $0x98] sm:$0xff] %vm474, %v799
  %847 = vst.msk [vmem:[#allocation3 + $0xb0] sm:$0xff] %vm474, %v801
  %848 = vst.msk [vmem:[#allocation3 + $0xc8] sm:$0xff] %vm474, %v803
  %849 = vst.msk [vmem:[#allocation3 + $0xe0] sm:$0xff] %vm474, %v805
  %850 = vst.msk [vmem:[#allocation3 + $0xf8] sm:$0xff] %vm474, %v807
  %851 = vst.msk [vmem:[#allocation3 + $0x110] sm:$0xff] %vm474, %v809
  %852 = vst.msk [vmem:[#allocation3 + $0x128] sm:$0xff] %vm474, %v811
  %853 = vst.msk [vmem:[#allocation3 + $0x140] sm:$0xff] %vm474, %v813
  %854 = vst.msk [vmem:[#allocation3 + $0x158] sm:$0xff] %vm474, %v815
  %855 = vst.msk [vmem:[#allocation3 + $0x170] sm:$0xff] %vm474, %v817
  %856 = vst.msk [vmem:[#allocation3 + $0x188] sm:$0xff] %vm474, %v819
  %857 = vst.msk [vmem:[#allocation3 + $0x1a0] sm:$0x3f] %vm492, %v821
  %v858 = vld [vmem:[#allocation2 + $0x12] sm:$0xff]
  %v859 = vld [vmem:[#allocation2 + $0x1a] sm:$0xff]
  %v860 = vld [vmem:[#allocation2 + $0x22] sm:$0xff]
  %v861 = vld [vmem:[#allocation2 + $0x2a] sm:$0xff]
  %v862 = vld [vmem:[#allocation2 + $0x32] sm:$0xff]
  %v863 = vld [vmem:[#allocation2 + $0x3a] sm:$0xff]
  %v864 = vld [vmem:[#allocation2 + $0x42] sm:$0xff]
  %v865 = vld [vmem:[#allocation2 + $0x4a] sm:$0xff]
  %v866 = vld [vmem:[#allocation2 + $0x52] sm:$0xff]
  %v867 = vld [vmem:[#allocation2 + $0x5a] sm:$0xff]
  %v868 = vld [vmem:[#allocation2 + $0x62] sm:$0xff]
  %v869 = vld [vmem:[#allocation2 + $0x6a] sm:$0xff]
  %v870 = vld [vmem:[#allocation2 + $0x72] sm:$0xff]
  %v871 = vld [vmem:[#allocation2 + $0x7a] sm:$0xff]
  %v872 = vld [vmem:[#allocation2 + $0x82] sm:$0xff]
  %v873 = vld [vmem:[#allocation2 + $0x8a] sm:$0xff]
  %v874 = vld [vmem:[#allocation2 + $0x92] sm:$0xff]
  %v875 = vld [vmem:[#allocation2 + $0x9a] sm:$0x3f]
  %894 = vrot.lane.b32.xlu0 %v858, 64
  %v895 = vpop.permute.xlu0 %894
  %896 = vrot.lane.b32.xlu0 %v859, 64
  %v897 = vpop.permute.xlu0 %896
  %898 = vrot.lane.b32.xlu0 %v860, 64
  %v899 = vpop.permute.xlu0 %898
  %900 = vrot.lane.b32.xlu0 %v861, 64
  %v901 = vpop.permute.xlu0 %900
  %902 = vrot.lane.b32.xlu0 %v862, 64
  %v903 = vpop.permute.xlu0 %902
  %904 = vrot.lane.b32.xlu0 %v863, 64
  %v905 = vpop.permute.xlu0 %904
  %906 = vrot.lane.b32.xlu0 %v864, 64
  %v907 = vpop.permute.xlu0 %906
  %908 = vrot.lane.b32.xlu0 %v865, 64
  %v909 = vpop.permute.xlu0 %908
  %910 = vrot.lane.b32.xlu0 %v866, 64
  %v911 = vpop.permute.xlu0 %910
  %912 = vrot.lane.b32.xlu0 %v867, 64
  %v913 = vpop.permute.xlu0 %912
  %914 = vrot.lane.b32.xlu0 %v868, 64
  %v915 = vpop.permute.xlu0 %914
  %916 = vrot.lane.b32.xlu0 %v869, 64
  %v917 = vpop.permute.xlu0 %916
  %918 = vrot.lane.b32.xlu0 %v870, 64
  %v919 = vpop.permute.xlu0 %918
  %920 = vrot.lane.b32.xlu0 %v871, 64
  %v921 = vpop.permute.xlu0 %920
  %922 = vrot.lane.b32.xlu0 %v872, 64
  %v923 = vpop.permute.xlu0 %922
  %924 = vrot.lane.b32.xlu0 %v873, 64
  %v925 = vpop.permute.xlu0 %924
  %926 = vrot.lane.b32.xlu0 %v874, 64
  %v927 = vpop.permute.xlu0 %926
  %928 = vrot.lane.b32.xlu0 %v875, 64
  %v929 = vpop.permute.xlu0 %928
  %948 = vst.msk [vmem:[#allocation3 + $0x8] sm:$0xff] %vm584, %v895
  %949 = vst.msk [vmem:[#allocation3 + $0x20] sm:$0xff] %vm584, %v897
  %950 = vst.msk [vmem:[#allocation3 + $0x38] sm:$0xff] %vm584, %v899
  %951 = vst.msk [vmem:[#allocation3 + $0x50] sm:$0xff] %vm584, %v901
  %952 = vst.msk [vmem:[#allocation3 + $0x68] sm:$0xff] %vm584, %v903
  %953 = vst.msk [vmem:[#allocation3 + $0x80] sm:$0xff] %vm584, %v905
  %954 = vst.msk [vmem:[#allocation3 + $0x98] sm:$0xff] %vm584, %v907
  %955 = vst.msk [vmem:[#allocation3 + $0xb0] sm:$0xff] %vm584, %v909
  %956 = vst.msk [vmem:[#allocation3 + $0xc8] sm:$0xff] %vm584, %v911
  %957 = vst.msk [vmem:[#allocation3 + $0xe0] sm:$0xff] %vm584, %v913
  %958 = vst.msk [vmem:[#allocation3 + $0xf8] sm:$0xff] %vm584, %v915
  %959 = vst.msk [vmem:[#allocation3 + $0x110] sm:$0xff] %vm584, %v917
  %960 = vst.msk [vmem:[#allocation3 + $0x128] sm:$0xff] %vm584, %v919
  %961 = vst.msk [vmem:[#allocation3 + $0x140] sm:$0xff] %vm584, %v921
  %962 = vst.msk [vmem:[#allocation3 + $0x158] sm:$0xff] %vm584, %v923
  %963 = vst.msk [vmem:[#allocation3 + $0x170] sm:$0xff] %vm584, %v925
  %964 = vst.msk [vmem:[#allocation3 + $0x188] sm:$0xff] %vm584, %v927
  %965 = vst.msk [vmem:[#allocation3 + $0x1a0] sm:$0x3f] %vm602, %v929
  %v966 = vld [vmem:[#allocation2 + $0x13] sm:$0xff]
  %v967 = vld [vmem:[#allocation2 + $0x1b] sm:$0xff]
  %v968 = vld [vmem:[#allocation2 + $0x23] sm:$0xff]
  %v969 = vld [vmem:[#allocation2 + $0x2b] sm:$0xff]
  %v970 = vld [vmem:[#allocation2 + $0x33] sm:$0xff]
  %v971 = vld [vmem:[#allocation2 + $0x3b] sm:$0xff]
  %v972 = vld [vmem:[#allocation2 + $0x43] sm:$0xff]
  %v973 = vld [vmem:[#allocation2 + $0x4b] sm:$0xff]
  %v974 = vld [vmem:[#allocation2 + $0x53] sm:$0xff]
  %v975 = vld [vmem:[#allocation2 + $0x5b] sm:$0xff]
  %v976 = vld [vmem:[#allocation2 + $0x63] sm:$0xff]
  %v977 = vld [vmem:[#allocation2 + $0x6b] sm:$0xff]
  %v978 = vld [vmem:[#allocation2 + $0x73] sm:$0xff]
  %v979 = vld [vmem:[#allocation2 + $0x7b] sm:$0xff]
  %v980 = vld [vmem:[#allocation2 + $0x83] sm:$0xff]
  %v981 = vld [vmem:[#allocation2 + $0x8b] sm:$0xff]
  %v982 = vld [vmem:[#allocation2 + $0x93] sm:$0xff]
  %v983 = vld [vmem:[#allocation2 + $0x9b] sm:$0x3f]
  %1002 = vrot.lane.b32.xlu0 %v966, 96
  %v1003 = vpop.permute.xlu0 %1002
  %1004 = vrot.lane.b32.xlu0 %v967, 96
  %v1005 = vpop.permute.xlu0 %1004
  %1006 = vrot.lane.b32.xlu0 %v968, 96
  %v1007 = vpop.permute.xlu0 %1006
  %1008 = vrot.lane.b32.xlu0 %v969, 96
  %v1009 = vpop.permute.xlu0 %1008
  %1010 = vrot.lane.b32.xlu0 %v970, 96
  %v1011 = vpop.permute.xlu0 %1010
  %1012 = vrot.lane.b32.xlu0 %v971, 96
  %v1013 = vpop.permute.xlu0 %1012
  %1014 = vrot.lane.b32.xlu0 %v972, 96
  %v1015 = vpop.permute.xlu0 %1014
  %1016 = vrot.lane.b32.xlu0 %v973, 96
  %v1017 = vpop.permute.xlu0 %1016
  %1018 = vrot.lane.b32.xlu0 %v974, 96
  %v1019 = vpop.permute.xlu0 %1018
  %1020 = vrot.lane.b32.xlu0 %v975, 96
  %v1021 = vpop.permute.xlu0 %1020
  %1022 = vrot.lane.b32.xlu0 %v976, 96
  %v1023 = vpop.permute.xlu0 %1022
  %1024 = vrot.lane.b32.xlu0 %v977, 96
  %v1025 = vpop.permute.xlu0 %1024
  %1026 = vrot.lane.b32.xlu0 %v978, 96
  %v1027 = vpop.permute.xlu0 %1026
  %1028 = vrot.lane.b32.xlu0 %v979, 96
  %v1029 = vpop.permute.xlu0 %1028
  %1030 = vrot.lane.b32.xlu0 %v980, 96
  %v1031 = vpop.permute.xlu0 %1030
  %1032 = vrot.lane.b32.xlu0 %v981, 96
  %v1033 = vpop.permute.xlu0 %1032
  %1034 = vrot.lane.b32.xlu0 %v982, 96
  %v1035 = vpop.permute.xlu0 %1034
  %1036 = vrot.lane.b32.xlu0 %v983, 96
  %v1037 = vpop.permute.xlu0 %1036
  %1056 = vst.msk [vmem:[#allocation3 + $0x8] sm:$0xff] %vm694, %v1003
  %1057 = vst.msk [vmem:[#allocation3 + $0x20] sm:$0xff] %vm694, %v1005
  %1058 = vst.msk [vmem:[#allocation3 + $0x38] sm:$0xff] %vm694, %v1007
  %1059 = vst.msk [vmem:[#allocation3 + $0x50] sm:$0xff] %vm694, %v1009
  %1060 = vst.msk [vmem:[#allocation3 + $0x68] sm:$0xff] %vm694, %v1011
  %1061 = vst.msk [vmem:[#allocation3 + $0x80] sm:$0xff] %vm694, %v1013
  %1062 = vst.msk [vmem:[#allocation3 + $0x98] sm:$0xff] %vm694, %v1015
  %1063 = vst.msk [vmem:[#allocation3 + $0xb0] sm:$0xff] %vm694, %v1017
  %1064 = vst.msk [vmem:[#allocation3 + $0xc8] sm:$0xff] %vm694, %v1019
  %1065 = vst.msk [vmem:[#allocation3 + $0xe0] sm:$0xff] %vm694, %v1021
  %1066 = vst.msk [vmem:[#allocation3 + $0xf8] sm:$0xff] %vm694, %v1023
  %1067 = vst.msk [vmem:[#allocation3 + $0x110] sm:$0xff] %vm694, %v1025
  %1068 = vst.msk [vmem:[#allocation3 + $0x128] sm:$0xff] %vm694, %v1027
  %1069 = vst.msk [vmem:[#allocation3 + $0x140] sm:$0xff] %vm694, %v1029
  %1070 = vst.msk [vmem:[#allocation3 + $0x158] sm:$0xff] %vm694, %v1031
  %1071 = vst.msk [vmem:[#allocation3 + $0x170] sm:$0xff] %vm694, %v1033
  %1072 = vst.msk [vmem:[#allocation3 + $0x188] sm:$0xff] %vm694, %v1035
  %1073 = vst.msk [vmem:[#allocation3 + $0x1a0] sm:$0x3f] %vm712, %v1037
  %v1074 = vld [vmem:[#allocation2 + $0x14] sm:$0xff]
  %v1075 = vld [vmem:[#allocation2 + $0x1c] sm:$0xff]
  %v1076 = vld [vmem:[#allocation2 + $0x24] sm:$0xff]
  %v1077 = vld [vmem:[#allocation2 + $0x2c] sm:$0xff]
  %v1078 = vld [vmem:[#allocation2 + $0x34] sm:$0xff]
  %v1079 = vld [vmem:[#allocation2 + $0x3c] sm:$0xff]
  %v1080 = vld [vmem:[#allocation2 + $0x44] sm:$0xff]
  %v1081 = vld [vmem:[#allocation2 + $0x4c] sm:$0xff]
  %v1082 = vld [vmem:[#allocation2 + $0x54] sm:$0xff]
  %v1083 = vld [vmem:[#allocation2 + $0x5c] sm:$0xff]
  %v1084 = vld [vmem:[#allocation2 + $0x64] sm:$0xff]
  %v1085 = vld [vmem:[#allocation2 + $0x6c] sm:$0xff]
  %v1086 = vld [vmem:[#allocation2 + $0x74] sm:$0xff]
  %v1087 = vld [vmem:[#allocation2 + $0x7c] sm:$0xff]
  %v1088 = vld [vmem:[#allocation2 + $0x84] sm:$0xff]
  %v1089 = vld [vmem:[#allocation2 + $0x8c] sm:$0xff]
  %v1090 = vld [vmem:[#allocation2 + $0x94] sm:$0xff]
  %v1091 = vld [vmem:[#allocation2 + $0x9c] sm:$0x3f]
  %1092 = vst.msk [vmem:[#allocation3 + $0x10] sm:$0xff] %vm324, %v1074
  %1093 = vst.msk [vmem:[#allocation3 + $0x28] sm:$0xff] %vm324, %v1075
  %1094 = vst.msk [vmem:[#allocation3 + $0x40] sm:$0xff] %vm324, %v1076
  %1095 = vst.msk [vmem:[#allocation3 + $0x58] sm:$0xff] %vm324, %v1077
  %1096 = vst.msk [vmem:[#allocation3 + $0x70] sm:$0xff] %vm324, %v1078
  %1097 = vst.msk [vmem:[#allocation3 + $0x88] sm:$0xff] %vm324, %v1079
  %1098 = vst.msk [vmem:[#allocation3 + $0xa0] sm:$0xff] %vm324, %v1080
  %1099 = vst.msk [vmem:[#allocation3 + $0xb8] sm:$0xff] %vm324, %v1081
  %1100 = vst.msk [vmem:[#allocation3 + $0xd0] sm:$0xff] %vm324, %v1082
  %1101 = vst.msk [vmem:[#allocation3 + $0xe8] sm:$0xff] %vm324, %v1083
  %1102 = vst.msk [vmem:[#allocation3 + $0x100] sm:$0xff] %vm324, %v1084
  %1103 = vst.msk [vmem:[#allocation3 + $0x118] sm:$0xff] %vm324, %v1085
  %1104 = vst.msk [vmem:[#allocation3 + $0x130] sm:$0xff] %vm324, %v1086
  %1105 = vst.msk [vmem:[#allocation3 + $0x148] sm:$0xff] %vm324, %v1087
  %1106 = vst.msk [vmem:[#allocation3 + $0x160] sm:$0xff] %vm324, %v1088
  %1107 = vst.msk [vmem:[#allocation3 + $0x178] sm:$0xff] %vm324, %v1089
  %1108 = vst.msk [vmem:[#allocation3 + $0x190] sm:$0xff] %vm324, %v1090
  %1109 = vst.msk [vmem:[#allocation3 + $0x1a8] sm:$0x3f] %vm382, %v1091
  %v1110 = vld [vmem:[#allocation3] sm:$0xff]
  %v1111 = vld [vmem:[#allocation3 + $0x8] sm:$0xff]
  %v1112 = vld [vmem:[#allocation3 + $0x10] sm:$0xff]
  %v1113 = vld [vmem:[#allocation3 + $0x18] sm:$0xff]
  %v1114 = vld [vmem:[#allocation3 + $0x20] sm:$0xff]
  %v1115 = vld [vmem:[#allocation3 + $0x28] sm:$0xff]
  %v1116 = vld [vmem:[#allocation3 + $0x30] sm:$0xff]
  %v1117 = vld [vmem:[#allocation3 + $0x38] sm:$0xff]
  %v1118 = vld [vmem:[#allocation3 + $0x40] sm:$0xff]
  %v1119 = vld [vmem:[#allocation3 + $0x48] sm:$0xff]
  %v1120 = vld [vmem:[#allocation3 + $0x50] sm:$0xff]
  %v1121 = vld [vmem:[#allocation3 + $0x58] sm:$0xff]
  %v1122 = vld [vmem:[#allocation3 + $0x60] sm:$0xff]
  %v1123 = vld [vmem:[#allocation3 + $0x68] sm:$0xff]
  %v1124 = vld [vmem:[#allocation3 + $0x70] sm:$0xff]
  %v1125 = vld [vmem:[#allocation3 + $0x78] sm:$0xff]
  %v1126 = vld [vmem:[#allocation3 + $0x80] sm:$0xff]
  %v1127 = vld [vmem:[#allocation3 + $0x88] sm:$0xff]
  %v1128 = vld [vmem:[#allocation3 + $0x90] sm:$0xff]
  %v1129 = vld [vmem:[#allocation3 + $0x98] sm:$0xff]
  %v1130 = vld [vmem:[#allocation3 + $0xa0] sm:$0xff]
  %v1131 = vld [vmem:[#allocation3 + $0xa8] sm:$0xff]
  %v1132 = vld [vmem:[#allocation3 + $0xb0] sm:$0xff]
  %v1133 = vld [vmem:[#allocation3 + $0xb8] sm:$0xff]
  %v1134 = vld [vmem:[#allocation3 + $0xc0] sm:$0xff]
  %v1135 = vld [vmem:[#allocation3 + $0xc8] sm:$0xff]
  %v1136 = vld [vmem:[#allocation3 + $0xd0] sm:$0xff]
  %v1137 = vld [vmem:[#allocation3 + $0xd8] sm:$0xff]
  %v1138 = vld [vmem:[#allocation3 + $0xe0] sm:$0xff]
  %v1139 = vld [vmem:[#allocation3 + $0xe8] sm:$0xff]
  %v1140 = vld [vmem:[#allocation3 + $0xf0] sm:$0xff]
  %v1141 = vld [vmem:[#allocation3 + $0xf8] sm:$0xff]
  %v1142 = vld [vmem:[#allocation3 + $0x100] sm:$0xff]
  %v1143 = vld [vmem:[#allocation3 + $0x108] sm:$0xff]
  %v1144 = vld [vmem:[#allocation3 + $0x110] sm:$0xff]
  %v1145 = vld [vmem:[#allocation3 + $0x118] sm:$0xff]
  %v1146 = vld [vmem:[#allocation3 + $0x120] sm:$0xff]
  %v1147 = vld [vmem:[#allocation3 + $0x128] sm:$0xff]
  %v1148 = vld [vmem:[#allocation3 + $0x130] sm:$0xff]
  %v1149 = vld [vmem:[#allocation3 + $0x138] sm:$0xff]
  %v1150 = vld [vmem:[#allocation3 + $0x140] sm:$0xff]
  %v1151 = vld [vmem:[#allocation3 + $0x148] sm:$0xff]
  %v1152 = vld [vmem:[#allocation3 + $0x150] sm:$0xff]
  %v1153 = vld [vmem:[#allocation3 + $0x158] sm:$0xff]
  %v1154 = vld [vmem:[#allocation3 + $0x160] sm:$0xff]
  %v1155 = vld [vmem:[#allocation3 + $0x168] sm:$0xff]
  %v1156 = vld [vmem:[#allocation3 + $0x170] sm:$0xff]
  %v1157 = vld [vmem:[#allocation3 + $0x178] sm:$0xff]
  %v1158 = vld [vmem:[#allocation3 + $0x180] sm:$0xff]
  %v1159 = vld [vmem:[#allocation3 + $0x188] sm:$0xff]
  %v1160 = vld [vmem:[#allocation3 + $0x190] sm:$0xff]
  %v1161 = vld [vmem:[#allocation3 + $0x198] sm:$0x3f]
  %v1162 = vld [vmem:[#allocation3 + $0x1a0] sm:$0x3f]
  %v1163 = vld [vmem:[#allocation3 + $0x1a8] sm:$0x3f]
  %v1164 = vld [vmem:[%s3] sm:$0xff]
  %v1165 = vld [vmem:[%s3 + $0x8] sm:$0xff]
  %v1166 = vld [vmem:[%s3 + $0x10] sm:$0xff]
  %v1167 = vld [vmem:[%s3 + $0x18] sm:$0xff]
  %v1168 = vld [vmem:[%s3 + $0x20] sm:$0xff]
  %v1169 = vld [vmem:[%s3 + $0x28] sm:$0xff]
  %v1170 = vld [vmem:[%s3 + $0x30] sm:$0xff]
  %v1171 = vld [vmem:[%s3 + $0x38] sm:$0xff]
  %v1172 = vld [vmem:[%s3 + $0x40] sm:$0xff]
  %v1173 = vld [vmem:[%s3 + $0x48] sm:$0xff]
  %v1174 = vld [vmem:[%s3 + $0x50] sm:$0xff]
  %v1175 = vld [vmem:[%s3 + $0x58] sm:$0xff]
  %v1176 = vld [vmem:[%s3 + $0x60] sm:$0xff]
  %v1177 = vld [vmem:[%s3 + $0x68] sm:$0xff]
  %v1178 = vld [vmem:[%s3 + $0x70] sm:$0xff]
  %v1179 = vld [vmem:[%s3 + $0x78] sm:$0xff]
  %v1180 = vld [vmem:[%s3 + $0x80] sm:$0xff]
  %v1181 = vld [vmem:[%s3 + $0x88] sm:$0xff]
  %v1182 = vld [vmem:[%s3 + $0x90] sm:$0xff]
  %v1183 = vld [vmem:[%s3 + $0x98] sm:$0xff]
  %v1184 = vld [vmem:[%s3 + $0xa0] sm:$0xff]
  %v1185 = vld [vmem:[%s3 + $0xa8] sm:$0xff]
  %v1186 = vld [vmem:[%s3 + $0xb0] sm:$0xff]
  %v1187 = vld [vmem:[%s3 + $0xb8] sm:$0xff]
  %v1188 = vld [vmem:[%s3 + $0xc0] sm:$0xff]
  %v1189 = vld [vmem:[%s3 + $0xc8] sm:$0xff]
  %v1190 = vld [vmem:[%s3 + $0xd0] sm:$0xff]
  %v1191 = vld [vmem:[%s3 + $0xd8] sm:$0xff]
  %v1192 = vld [vmem:[%s3 + $0xe0] sm:$0xff]
  %v1193 = vld [vmem:[%s3 + $0xe8] sm:$0xff]
  %v1194 = vld [vmem:[%s3 + $0xf0] sm:$0xff]
  %v1195 = vld [vmem:[%s3 + $0xf8] sm:$0xff]
  %v1196 = vld [vmem:[%s3 + $0x100] sm:$0xff]
  %v1197 = vld [vmem:[%s3 + $0x108] sm:$0xff]
  %v1198 = vld [vmem:[%s3 + $0x110] sm:$0xff]
  %v1199 = vld [vmem:[%s3 + $0x118] sm:$0xff]
  %v1200 = vld [vmem:[%s4] sm:$0x1]
  %v1202 = vlaneseq
  %v1203 = vshrl.u32 %v1202, 7
  %v1204 = vsub.s32 0, %v1203
  %v1205 = vrot.slane %v1200, %v1204
  %v1208 = vsel %vm324, %v1112, 0
  %v1211 = vsel %vm324, %v1115, 0
  %v1214 = vsel %vm324, %v1118, 0
  %v1217 = vsel %vm324, %v1121, 0
  %v1220 = vsel %vm324, %v1124, 0
  %v1223 = vsel %vm324, %v1127, 0
  %v1226 = vsel %vm324, %v1130, 0
  %v1229 = vsel %vm324, %v1133, 0
  %v1232 = vsel %vm324, %v1136, 0
  %v1235 = vsel %vm324, %v1139, 0
  %v1238 = vsel %vm324, %v1142, 0
  %v1241 = vsel %vm324, %v1145, 0
  %v1244 = vsel %vm324, %v1148, 0
  %v1247 = vsel %vm324, %v1151, 0
  %v1250 = vsel %vm324, %v1154, 0
  %v1253 = vsel %vm324, %v1157, 0
  %v1256 = vsel %vm324, %v1160, 0
  %v1259 = vsel %vm324, %v1163, 0
  %1261 = vmatprep.subr.mxu0 0.0
  %1262 = vmatpush1.msra.mxu0 %v1164
  %1263 = vmatprep.subr.mxu0 0.0
  %1264 = vmatpush1.msra.mxu0 %v1165
  %1265 = vmatprep.subr.mxu0 0.0
  %1266 = vmatpush1.msra.mxu0 %v1166
  %1267 = vmatprep.subr.mxu0 0.0
  %1268 = vmatpush1.msra.mxu0 %v1167
  %1269 = vmatprep.subr.mxu0 0.0
  %1270 = vmatpush1.msra.mxu0 %v1168
  %1271 = vmatprep.subr.mxu0 0.0
  %1272 = vmatpush1.msra.mxu0 %v1169
  %1273 = vmatprep.subr.mxu0 0.0
  %1274 = vmatpush1.msra.mxu0 %v1170
  %1275 = vmatprep.subr.mxu0 0.0
  %1276 = vmatpush1.msra.mxu0 %v1171
  %1277 = vmatprep.subr.mxu0 0.0
  %1278 = vmatpush1.msra.mxu0 %v1172
  %1279 = vmatprep.subr.mxu0 0.0
  %1280 = vmatpush1.msra.mxu0 %v1173
  %1281 = vmatprep.subr.mxu0 0.0
  %1282 = vmatpush1.msra.mxu0 %v1174
  %1283 = vmatprep.subr.mxu0 0.0
  %1284 = vmatpush1.msra.mxu0 %v1175
  %1285 = vmatprep.subr.mxu0 0.0
  %1286 = vmatpush1.msra.mxu0 %v1176
  %1287 = vmatprep.subr.mxu0 0.0
  %1288 = vmatpush1.msra.mxu0 %v1177
  %1289 = vmatprep.subr.mxu0 0.0
  %1290 = vmatpush1.msra.mxu0 %v1178
  %1291 = vmatprep.subr.mxu0 0.0
  %1292 = vmatpush1.msra.mxu0 %v1179
  %1293 = vmatprep.subr.mxu0 0.0
  %1294 = vmatpush1.msra.mxu0 %v1180
  %1295 = vmatprep.subr.mxu0 0.0
  %1296 = vmatpush1.msra.mxu0 %v1181
  %1297 = vmatprep.subr.mxu0 0.0
  %1298 = vmatpush1.msra.mxu0 %v1182
  %1299 = vmatprep.subr.mxu0 0.0
  %1300 = vmatpush1.msra.mxu0 %v1183
  %1301 = vmatprep.subr.mxu0 0.0
  %1302 = vmatpush1.msra.mxu0 %v1184
  %1303 = vmatprep.subr.mxu0 0.0
  %1304 = vmatpush1.msra.mxu0 %v1185
  %1305 = vmatprep.subr.mxu0 0.0
  %1306 = vmatpush1.msra.mxu0 %v1186
  %1307 = vmatprep.subr.mxu0 0.0
  %1308 = vmatpush1.msra.mxu0 %v1187
  %1309 = vmatprep.subr.mxu0 0.0
  %1310 = vmatpush1.msra.mxu0 %v1188
  %1311 = vmatprep.subr.mxu0 0.0
  %1312 = vmatpush1.msra.mxu0 %v1189
  %1313 = vmatprep.subr.mxu0 0.0
  %1314 = vmatpush1.msra.mxu0 %v1190
  %1315 = vmatprep.subr.mxu0 0.0
  %1316 = vmatpush1.msra.mxu0 %v1191
  %1317 = vmatprep.subr.mxu0 0.0
  %1318 = vmatpush1.msra.mxu0 %v1192
  %1319 = vmatprep.subr.mxu0 0.0
  %1320 = vmatpush1.msra.mxu0 %v1193
  %1321 = vmatprep.subr.mxu0 0.0
  %1322 = vmatpush1.msra.mxu0 %v1194
  %1323 = vmatprep.subr.mxu0 0.0
  %1324 = vmatpush1.msra.mxu0 %v1195
  %1325 = vmatprep.mubr.f32.mxu0 %v1111
  %1326 = vmatmul.mubr.f32.gmra.mrb[0].mxu0 %v1110
  %v1327 = vpop.f32.mrb[0].mxu0
  %v1328 = vadd.f32 %v1205, %v1327
  %v1329 = vpop.f32.mrb[0].mxu0
  %1330 = vmatprep.mubr.f32.mxu0 %v1114
  %1331 = vmatmul.mubr.f32.gmra.mrb[0].mxu0 %v1113
  %v1332 = vpop.f32.mrb[0].mxu0
  %v1333 = vadd.f32 %v1205, %v1332
  %v1334 = vpop.f32.mrb[0].mxu0
  %1335 = vmatprep.mubr.f32.mxu0 %v1117
  %1336 = vmatmul.mubr.f32.gmra.mrb[0].mxu0 %v1116
  %v1337 = vpop.f32.mrb[0].mxu0
  %v1338 = vadd.f32 %v1205, %v1337
  %v1339 = vpop.f32.mrb[0].mxu0
  %1340 = vmatprep.mubr.f32.mxu0 %v1120
  %1341 = vmatmul.mubr.f32.gmra.mrb[0].mxu0 %v1119
  %v1342 = vpop.f32.mrb[0].mxu0
  %v1343 = vadd.f32 %v1205, %v1342
  %v1344 = vpop.f32.mrb[0].mxu0
  %1345 = vmatprep.mubr.f32.mxu0 %v1123
  %1346 = vmatmul.mubr.f32.gmra.mrb[0].mxu0 %v1122
  %v1347 = vpop.f32.mrb[0].mxu0
  %v1348 = vadd.f32 %v1205, %v1347
  %v1349 = vpop.f32.mrb[0].mxu0
  %1350 = vmatprep.mubr.f32.mxu0 %v1126
  %1351 = vmatmul.mubr.f32.gmra.mrb[0].mxu0 %v1125
  %v1352 = vpop.f32.mrb[0].mxu0
  %v1353 = vadd.f32 %v1205, %v1352
  %v1354 = vpop.f32.mrb[0].mxu0
  %1355 = vmatprep.mubr.f32.mxu0 %v1129
  %1356 = vmatmul.mubr.f32.gmra.mrb[0].mxu0 %v1128
  %v1357 = vpop.f32.mrb[0].mxu0
  %v1358 = vadd.f32 %v1205, %v1357
  %v1359 = vpop.f32.mrb[0].mxu0
  %1360 = vmatprep.mubr.f32.mxu0 %v1132
  %1361 = vmatmul.mubr.f32.gmra.mrb[0].mxu0 %v1131
  %v1362 = vpop.f32.mrb[0].mxu0
  %v1363 = vadd.f32 %v1205, %v1362
  %v1364 = vpop.f32.mrb[0].mxu0
  %1365 = vmatprep.mubr.f32.mxu0 %v1135
  %1366 = vmatmul.mubr.f32.gmra.mrb[0].mxu0 %v1134
  %v1367 = vpop.f32.mrb[0].mxu0
  %v1368 = vadd.f32 %v1205, %v1367
  %v1369 = vpop.f32.mrb[0].mxu0
  %1370 = vmatprep.mubr.f32.mxu0 %v1138
  %1371 = vmatmul.mubr.f32.gmra.mrb[0].mxu0 %v1137
  %v1372 = vpop.f32.mrb[0].mxu0
  %v1373 = vadd.f32 %v1205, %v1372
  %v1374 = vpop.f32.mrb[0].mxu0
  %1375 = vmatprep.mubr.f32.mxu0 %v1141
  %1376 = vmatmul.mubr.f32.gmra.mrb[0].mxu0 %v1140
  %v1377 = vpop.f32.mrb[0].mxu0
  %v1378 = vadd.f32 %v1205, %v1377
  %v1379 = vpop.f32.mrb[0].mxu0
  %1380 = vmatprep.mubr.f32.mxu0 %v1144
  %1381 = vmatmul.mubr.f32.gmra.mrb[0].mxu0 %v1143
  %v1382 = vpop.f32.mrb[0].mxu0
  %v1383 = vadd.f32 %v1205, %v1382
  %v1384 = vpop.f32.mrb[0].mxu0
  %1385 = vmatprep.mubr.f32.mxu0 %v1147
  %1386 = vmatmul.mubr.f32.gmra.mrb[0].mxu0 %v1146
  %v1387 = vpop.f32.mrb[0].mxu0
  %v1388 = vadd.f32 %v1205, %v1387
  %v1389 = vpop.f32.mrb[0].mxu0
  %1390 = vmatprep.mubr.f32.mxu0 %v1150
  %1391 = vmatmul.mubr.f32.gmra.mrb[0].mxu0 %v1149
  %v1392 = vpop.f32.mrb[0].mxu0
  %v1393 = vadd.f32 %v1205, %v1392
  %v1394 = vpop.f32.mrb[0].mxu0
  %1395 = vmatprep.mubr.f32.mxu0 %v1153
  %1396 = vmatmul.mubr.f32.gmra.mrb[0].mxu0 %v1152
  %v1397 = vpop.f32.mrb[0].mxu0
  %v1398 = vadd.f32 %v1205, %v1397
  %v1399 = vpop.f32.mrb[0].mxu0
  %1400 = vmatprep.mubr.f32.mxu0 %v1156
  %1401 = vmatmul.mubr.f32.gmra.mrb[0].mxu0 %v1155
  %v1402 = vpop.f32.mrb[0].mxu0
  %v1403 = vadd.f32 %v1205, %v1402
  %v1404 = vpop.f32.mrb[0].mxu0
  %1405 = vmatprep.mubr.f32.mxu0 %v1159
  %1406 = vmatmul.mubr.f32.gmra.mrb[0].mxu0 %v1158
  %v1407 = vpop.f32.mrb[0].mxu0
  %v1408 = vadd.f32 %v1205, %v1407
  %v1409 = vpop.f32.mrb[0].mxu0
  %1410 = vmatprep.mubr.f32.mxu0 %v1162
  %1411 = vmatmul.mubr.f32.gmra.mrb[0].mxu0 %v1161
  %v1412 = vpop.f32.mrb[0].mxu0
  %v1413 = vadd.f32 %v1205, %v1412
  %v1414 = vpop.f32.mrb[0].mxu0
  %1415 = vdwg.mxu0
  %1416 = vmatprep.subr.mxu0 0.0
  %1417 = vmatpush1.msra.mxu0 %v1196
  %1418 = vmatprep.subr.mxu0 0.0
  %1419 = vmatpush1.msra.mxu0 %v1197
  %1420 = vmatprep.subr.mxu0 0.0
  %1421 = vmatpush1.msra.mxu0 %v1198
  %1422 = vmatprep.subr.mxu0 0.0
  %1423 = vmatpush1.msra.mxu0 %v1199
  %1424 = vmatprep.subr.mxu0 0.0
  %1425 = vmatpush1.msra.mxu0 0.0
  %1426 = vmatprep.subr.mxu0 0.0
  %1427 = vmatpush1.msra.mxu0 0.0
  %1428 = vmatprep.subr.mxu0 0.0
  %1429 = vmatpush1.msra.mxu0 0.0
  %1430 = vmatprep.subr.mxu0 0.0
  %1431 = vmatpush1.msra.mxu0 0.0
  %1432 = vmatprep.subr.mxu0 0.0
  %1433 = vmatpush1.msra.mxu0 0.0
  %1434 = vmatprep.subr.mxu0 0.0
  %1435 = vmatpush1.msra.mxu0 0.0
  %1436 = vmatprep.subr.mxu0 0.0
  %1437 = vmatpush1.msra.mxu0 0.0
  %1438 = vmatprep.subr.mxu0 0.0
  %1439 = vmatpush1.msra.mxu0 0.0
  %1440 = vmatprep.subr.mxu0 0.0
  %1441 = vmatpush1.msra.mxu0 0.0
  %1442 = vmatprep.subr.mxu0 0.0
  %1443 = vmatpush1.msra.mxu0 0.0
  %1444 = vmatprep.subr.mxu0 0.0
  %1445 = vmatpush1.msra.mxu0 0.0
  %1446 = vmatprep.subr.mxu0 0.0
  %1447 = vmatpush1.msra.mxu0 0.0
  %1448 = vmatprep.subr.mxu0 0.0
  %1449 = vmatpush1.msra.mxu0 0.0
  %1450 = vmatprep.subr.mxu0 0.0
  %1451 = vmatpush1.msra.mxu0 0.0
  %1452 = vmatprep.subr.mxu0 0.0
  %1453 = vmatpush1.msra.mxu0 0.0
  %1454 = vmatprep.subr.mxu0 0.0
  %1455 = vmatpush1.msra.mxu0 0.0
  %1456 = vmatprep.subr.mxu0 0.0
  %1457 = vmatpush1.msra.mxu0 0.0
  %1458 = vmatprep.subr.mxu0 0.0
  %1459 = vmatpush1.msra.mxu0 0.0
  %1460 = vmatprep.subr.mxu0 0.0
  %1461 = vmatpush1.msra.mxu0 0.0
  %1462 = vmatprep.subr.mxu0 0.0
  %1463 = vmatpush1.msra.mxu0 0.0
  %1464 = vmatprep.subr.mxu0 0.0
  %1465 = vmatpush1.msra.mxu0 0.0
  %1466 = vmatprep.subr.mxu0 0.0
  %1467 = vmatpush1.msra.mxu0 0.0
  %1468 = vmatprep.subr.mxu0 0.0
  %1469 = vmatpush1.msra.mxu0 0.0
  %1470 = vmatprep.subr.mxu0 0.0
  %1471 = vmatpush1.msra.mxu0 0.0
  %1472 = vmatprep.subr.mxu0 0.0
  %1473 = vmatpush1.msra.mxu0 0.0
  %1474 = vmatprep.subr.mxu0 0.0
  %1475 = vmatpush1.msra.mxu0 0.0
  %1476 = vmatprep.subr.mxu0 0.0
  %1477 = vmatpush1.msra.mxu0 0.0
  %1478 = vmatprep.subr.mxu0 0.0
  %1479 = vmatpush1.msra.mxu0 0.0
  %1480 = vmatprep.mubr.f32.mxu0 0.0
  %1481 = vmatmul.mubr.f32.gmra.mrb[0].mxu0 %v1208
  %v1482 = vpop.f32.mrb[0].mxu0
  %v1483 = vadd.f32 %v1328, %v1482
  %v1484 = vpop.f32.mrb[0].mxu0
  %1485 = vmatprep.mubr.f32.mxu0 0.0
  %1486 = vmatmul.mubr.f32.gmra.mrb[0].mxu0 %v1211
  %v1487 = vpop.f32.mrb[0].mxu0
  %v1488 = vadd.f32 %v1333, %v1487
  %v1489 = vpop.f32.mrb[0].mxu0
  %1490 = vmatprep.mubr.f32.mxu0 0.0
  %1491 = vmatmul.mubr.f32.gmra.mrb[0].mxu0 %v1214
  %v1492 = vpop.f32.mrb[0].mxu0
  %v1493 = vadd.f32 %v1338, %v1492
  %v1494 = vpop.f32.mrb[0].mxu0
  %1495 = vmatprep.mubr.f32.mxu0 0.0
  %1496 = vmatmul.mubr.f32.gmra.mrb[0].mxu0 %v1217
  %v1497 = vpop.f32.mrb[0].mxu0
  %v1498 = vadd.f32 %v1343, %v1497
  %v1499 = vpop.f32.mrb[0].mxu0
  %1500 = vmatprep.mubr.f32.mxu0 0.0
  %1501 = vmatmul.mubr.f32.gmra.mrb[0].mxu0 %v1220
  %v1502 = vpop.f32.mrb[0].mxu0
  %v1503 = vadd.f32 %v1348, %v1502
  %v1504 = vpop.f32.mrb[0].mxu0
  %1505 = vmatprep.mubr.f32.mxu0 0.0
  %1506 = vmatmul.mubr.f32.gmra.mrb[0].mxu0 %v1223
  %v1507 = vpop.f32.mrb[0].mxu0
  %v1508 = vadd.f32 %v1353, %v1507
  %v1509 = vpop.f32.mrb[0].mxu0
  %1510 = vmatprep.mubr.f32.mxu0 0.0
  %1511 = vmatmul.mubr.f32.gmra.mrb[0].mxu0 %v1226
  %v1512 = vpop.f32.mrb[0].mxu0
  %v1513 = vadd.f32 %v1358, %v1512
  %v1514 = vpop.f32.mrb[0].mxu0
  %1515 = vmatprep.mubr.f32.mxu0 0.0
  %1516 = vmatmul.mubr.f32.gmra.mrb[0].mxu0 %v1229
  %v1517 = vpop.f32.mrb[0].mxu0
  %v1518 = vadd.f32 %v1363, %v1517
  %v1519 = vpop.f32.mrb[0].mxu0
  %1520 = vmatprep.mubr.f32.mxu0 0.0
  %1521 = vmatmul.mubr.f32.gmra.mrb[0].mxu0 %v1232
  %v1522 = vpop.f32.mrb[0].mxu0
  %v1523 = vadd.f32 %v1368, %v1522
  %v1524 = vpop.f32.mrb[0].mxu0
  %1525 = vmatprep.mubr.f32.mxu0 0.0
  %1526 = vmatmul.mubr.f32.gmra.mrb[0].mxu0 %v1235
  %v1527 = vpop.f32.mrb[0].mxu0
  %v1528 = vadd.f32 %v1373, %v1527
  %v1529 = vpop.f32.mrb[0].mxu0
  %1530 = vmatprep.mubr.f32.mxu0 0.0
  %1531 = vmatmul.mubr.f32.gmra.mrb[0].mxu0 %v1238
  %v1532 = vpop.f32.mrb[0].mxu0
  %v1533 = vadd.f32 %v1378, %v1532
  %v1534 = vpop.f32.mrb[0].mxu0
  %1535 = vmatprep.mubr.f32.mxu0 0.0
  %1536 = vmatmul.mubr.f32.gmra.mrb[0].mxu0 %v1241
  %v1537 = vpop.f32.mrb[0].mxu0
  %v1538 = vadd.f32 %v1383, %v1537
  %v1539 = vpop.f32.mrb[0].mxu0
  %1540 = vmatprep.mubr.f32.mxu0 0.0
  %1541 = vmatmul.mubr.f32.gmra.mrb[0].mxu0 %v1244
  %v1542 = vpop.f32.mrb[0].mxu0
  %v1543 = vadd.f32 %v1388, %v1542
  %v1544 = vpop.f32.mrb[0].mxu0
  %1545 = vmatprep.mubr.f32.mxu0 0.0
  %1546 = vmatmul.mubr.f32.gmra.mrb[0].mxu0 %v1247
  %v1547 = vpop.f32.mrb[0].mxu0
  %v1548 = vadd.f32 %v1393, %v1547
  %v1549 = vpop.f32.mrb[0].mxu0
  %1550 = vmatprep.mubr.f32.mxu0 0.0
  %1551 = vmatmul.mubr.f32.gmra.mrb[0].mxu0 %v1250
  %v1552 = vpop.f32.mrb[0].mxu0
  %v1553 = vadd.f32 %v1398, %v1552
  %v1554 = vpop.f32.mrb[0].mxu0
  %1555 = vmatprep.mubr.f32.mxu0 0.0
  %1556 = vmatmul.mubr.f32.gmra.mrb[0].mxu0 %v1253
  %v1557 = vpop.f32.mrb[0].mxu0
  %v1558 = vadd.f32 %v1403, %v1557
  %v1559 = vpop.f32.mrb[0].mxu0
  %1560 = vmatprep.mubr.f32.mxu0 0.0
  %1561 = vmatmul.mubr.f32.gmra.mrb[0].mxu0 %v1256
  %v1562 = vpop.f32.mrb[0].mxu0
  %v1563 = vadd.f32 %v1408, %v1562
  %v1564 = vpop.f32.mrb[0].mxu0
  %1565 = vmatprep.mubr.f32.mxu0 0.0
  %1566 = vmatmul.mubr.f32.gmra.mrb[0].mxu0 %v1259
  %v1567 = vpop.f32.mrb[0].mxu0
  %v1568 = vadd.f32 %v1413, %v1567
  %v1569 = vpop.f32.mrb[0].mxu0
  %1570 = vdwg.mxu0
  %v1571 = vmax.f32 %v1483, 0.0
  %v1572 = vmax.f32 %v1488, 0.0
  %v1573 = vmax.f32 %v1493, 0.0
  %v1574 = vmax.f32 %v1498, 0.0
  %v1575 = vmax.f32 %v1503, 0.0
  %v1576 = vmax.f32 %v1508, 0.0
  %v1577 = vmax.f32 %v1513, 0.0
  %v1578 = vmax.f32 %v1518, 0.0
  %v1579 = vmax.f32 %v1523, 0.0
  %v1580 = vmax.f32 %v1528, 0.0
  %v1581 = vmax.f32 %v1533, 0.0
  %v1582 = vmax.f32 %v1538, 0.0
  %v1583 = vmax.f32 %v1543, 0.0
  %v1584 = vmax.f32 %v1548, 0.0
  %v1585 = vmax.f32 %v1553, 0.0
  %v1586 = vmax.f32 %v1558, 0.0
  %v1587 = vmax.f32 %v1563, 0.0
  %v1588 = vmax.f32 %v1568, 0.0
  %1589 = vst.msk [vmem:[#allocation2] sm:$0xff] %vm324, %v1571
  %1590 = vst.msk [vmem:[#allocation2 + $0x8] sm:$0xff] %vm324, %v1572
  %1591 = vst.msk [vmem:[#allocation2 + $0x10] sm:$0xff] %vm324, %v1573
  %1592 = vst.msk [vmem:[#allocation2 + $0x18] sm:$0xff] %vm324, %v1574
  %1593 = vst.msk [vmem:[#allocation2 + $0x20] sm:$0xff] %vm324, %v1575
  %1594 = vst.msk [vmem:[#allocation2 + $0x28] sm:$0xff] %vm324, %v1576
  %1595 = vst.msk [vmem:[#allocation2 + $0x30] sm:$0xff] %vm324, %v1577
  %1596 = vst.msk [vmem:[#allocation2 + $0x38] sm:$0xff] %vm324, %v1578
  %1597 = vst.msk [vmem:[#allocation2 + $0x40] sm:$0xff] %vm324, %v1579
  %1598 = vst.msk [vmem:[#allocation2 + $0x48] sm:$0xff] %vm324, %v1580
  %1599 = vst.msk [vmem:[#allocation2 + $0x50] sm:$0xff] %vm324, %v1581
  %1600 = vst.msk [vmem:[#allocation2 + $0x58] sm:$0xff] %vm324, %v1582
  %1601 = vst.msk [vmem:[#allocation2 + $0x60] sm:$0xff] %vm324, %v1583
  %1602 = vst.msk [vmem:[#allocation2 + $0x68] sm:$0xff] %vm324, %v1584
  %1603 = vst.msk [vmem:[#allocation2 + $0x70] sm:$0xff] %vm324, %v1585
  %1604 = vst.msk [vmem:[#allocation2 + $0x78] sm:$0xff] %vm324, %v1586
  %1605 = vst.msk [vmem:[#allocation2 + $0x80] sm:$0xff] %vm324, %v1587
  %1606 = vst.msk [vmem:[#allocation2 + $0x88] sm:$0x3f] %vm382, %v1588
  %v1607 = vld [vmem:[#allocation2] sm:$0xff]
  %v1608 = vld [vmem:[#allocation2 + $0x8] sm:$0xff]
  %v1609 = vld [vmem:[#allocation2 + $0x10] sm:$0xff]
  %v1610 = vld [vmem:[#allocation2 + $0x18] sm:$0xff]
  %v1611 = vld [vmem:[#allocation2 + $0x20] sm:$0xff]
  %v1612 = vld [vmem:[#allocation2 + $0x28] sm:$0xff]
  %v1613 = vld [vmem:[#allocation2 + $0x30] sm:$0xff]
  %v1614 = vld [vmem:[#allocation2 + $0x38] sm:$0xff]
  %v1615 = vld [vmem:[#allocation2 + $0x40] sm:$0xff]
  %v1616 = vld [vmem:[#allocation2 + $0x48] sm:$0xff]
  %v1617 = vld [vmem:[#allocation2 + $0x50] sm:$0xff]
  %v1618 = vld [vmem:[#allocation2 + $0x58] sm:$0xff]
  %v1619 = vld [vmem:[#allocation2 + $0x60] sm:$0xff]
  %v1620 = vld [vmem:[#allocation2 + $0x68] sm:$0xff]
  %v1621 = vld [vmem:[#allocation2 + $0x70] sm:$0xff]
  %v1622 = vld [vmem:[#allocation2 + $0x78] sm:$0x3]
  %1623 = vst.msk [vmem:[#allocation3] sm:$0xff] %vm324, %v1607
  %1624 = vst.msk [vmem:[#allocation3 + $0x18] sm:$0xff] %vm324, %v1608
  %1625 = vst.msk [vmem:[#allocation3 + $0x30] sm:$0xff] %vm324, %v1609
  %1626 = vst.msk [vmem:[#allocation3 + $0x48] sm:$0xff] %vm324, %v1610
  %1627 = vst.msk [vmem:[#allocation3 + $0x60] sm:$0xff] %vm324, %v1611
  %1628 = vst.msk [vmem:[#allocation3 + $0x78] sm:$0xff] %vm324, %v1612
  %1629 = vst.msk [vmem:[#allocation3 + $0x90] sm:$0xff] %vm324, %v1613
  %1630 = vst.msk [vmem:[#allocation3 + $0xa8] sm:$0xff] %vm324, %v1614
  %1631 = vst.msk [vmem:[#allocation3 + $0xc0] sm:$0xff] %vm324, %v1615
  %1632 = vst.msk [vmem:[#allocation3 + $0xd8] sm:$0xff] %vm324, %v1616
  %1633 = vst.msk [vmem:[#allocation3 + $0xf0] sm:$0xff] %vm324, %v1617
  %1634 = vst.msk [vmem:[#allocation3 + $0x108] sm:$0xff] %vm324, %v1618
  %1635 = vst.msk [vmem:[#allocation3 + $0x120] sm:$0xff] %vm324, %v1619
  %1636 = vst.msk [vmem:[#allocation3 + $0x138] sm:$0xff] %vm324, %v1620
  %1637 = vst.msk [vmem:[#allocation3 + $0x150] sm:$0xff] %vm324, %v1621
  %1638 = vst.msk [vmem:[#allocation3 + $0x168] sm:$0x3] %vm345, %v1622
  %v1639 = vld [vmem:[#allocation2 + $0x1] sm:$0xff]
  %v1640 = vld [vmem:[#allocation2 + $0x9] sm:$0xff]
  %v1641 = vld [vmem:[#allocation2 + $0x11] sm:$0xff]
  %v1642 = vld [vmem:[#allocation2 + $0x19] sm:$0xff]
  %v1643 = vld [vmem:[#allocation2 + $0x21] sm:$0xff]
  %v1644 = vld [vmem:[#allocation2 + $0x29] sm:$0xff]
  %v1645 = vld [vmem:[#allocation2 + $0x31] sm:$0xff]
  %v1646 = vld [vmem:[#allocation2 + $0x39] sm:$0xff]
  %v1647 = vld [vmem:[#allocation2 + $0x41] sm:$0xff]
  %v1648 = vld [vmem:[#allocation2 + $0x49] sm:$0xff]
  %v1649 = vld [vmem:[#allocation2 + $0x51] sm:$0xff]
  %v1650 = vld [vmem:[#allocation2 + $0x59] sm:$0xff]
  %v1651 = vld [vmem:[#allocation2 + $0x61] sm:$0xff]
  %v1652 = vld [vmem:[#allocation2 + $0x69] sm:$0xff]
  %v1653 = vld [vmem:[#allocation2 + $0x71] sm:$0xff]
  %v1654 = vld [vmem:[#allocation2 + $0x79] sm:$0x3]
  %1671 = vrot.lane.b32.xlu0 %v1639, 32
  %v1672 = vpop.permute.xlu0 %1671
  %1673 = vrot.lane.b32.xlu0 %v1640, 32
  %v1674 = vpop.permute.xlu0 %1673
  %1675 = vrot.lane.b32.xlu0 %v1641, 32
  %v1676 = vpop.permute.xlu0 %1675
  %1677 = vrot.lane.b32.xlu0 %v1642, 32
  %v1678 = vpop.permute.xlu0 %1677
  %1679 = vrot.lane.b32.xlu0 %v1643, 32
  %v1680 = vpop.permute.xlu0 %1679
  %1681 = vrot.lane.b32.xlu0 %v1644, 32
  %v1682 = vpop.permute.xlu0 %1681
  %1683 = vrot.lane.b32.xlu0 %v1645, 32
  %v1684 = vpop.permute.xlu0 %1683
  %1685 = vrot.lane.b32.xlu0 %v1646, 32
  %v1686 = vpop.permute.xlu0 %1685
  %1687 = vrot.lane.b32.xlu0 %v1647, 32
  %v1688 = vpop.permute.xlu0 %1687
  %1689 = vrot.lane.b32.xlu0 %v1648, 32
  %v1690 = vpop.permute.xlu0 %1689
  %1691 = vrot.lane.b32.xlu0 %v1649, 32
  %v1692 = vpop.permute.xlu0 %1691
  %1693 = vrot.lane.b32.xlu0 %v1650, 32
  %v1694 = vpop.permute.xlu0 %1693
  %1695 = vrot.lane.b32.xlu0 %v1651, 32
  %v1696 = vpop.permute.xlu0 %1695
  %1697 = vrot.lane.b32.xlu0 %v1652, 32
  %v1698 = vpop.permute.xlu0 %1697
  %1699 = vrot.lane.b32.xlu0 %v1653, 32
  %v1700 = vpop.permute.xlu0 %1699
  %1701 = vrot.lane.b32.xlu0 %v1654, 32
  %v1702 = vpop.permute.xlu0 %1701
  %1719 = vst.msk [vmem:[#allocation3] sm:$0xff] %vm474, %v1672
  %1720 = vst.msk [vmem:[#allocation3 + $0x18] sm:$0xff] %vm474, %v1674
  %1721 = vst.msk [vmem:[#allocation3 + $0x30] sm:$0xff] %vm474, %v1676
  %1722 = vst.msk [vmem:[#allocation3 + $0x48] sm:$0xff] %vm474, %v1678
  %1723 = vst.msk [vmem:[#allocation3 + $0x60] sm:$0xff] %vm474, %v1680
  %1724 = vst.msk [vmem:[#allocation3 + $0x78] sm:$0xff] %vm474, %v1682
  %1725 = vst.msk [vmem:[#allocation3 + $0x90] sm:$0xff] %vm474, %v1684
  %1726 = vst.msk [vmem:[#allocation3 + $0xa8] sm:$0xff] %vm474, %v1686
  %1727 = vst.msk [vmem:[#allocation3 + $0xc0] sm:$0xff] %vm474, %v1688
  %1728 = vst.msk [vmem:[#allocation3 + $0xd8] sm:$0xff] %vm474, %v1690
  %1729 = vst.msk [vmem:[#allocation3 + $0xf0] sm:$0xff] %vm474, %v1692
  %1730 = vst.msk [vmem:[#allocation3 + $0x108] sm:$0xff] %vm474, %v1694
  %1731 = vst.msk [vmem:[#allocation3 + $0x120] sm:$0xff] %vm474, %v1696
  %1732 = vst.msk [vmem:[#allocation3 + $0x138] sm:$0xff] %vm474, %v1698
  %1733 = vst.msk [vmem:[#allocation3 + $0x150] sm:$0xff] %vm474, %v1700
  %vm1734 = vcmask 517376
  %1735 = vst.msk [vmem:[#allocation3 + $0x168] sm:$0x3] %vm1734, %v1702
  %v1736 = vld [vmem:[#allocation2 + $0x2] sm:$0xff]
  %v1737 = vld [vmem:[#allocation2 + $0xa] sm:$0xff]
  %v1738 = vld [vmem:[#allocation2 + $0x12] sm:$0xff]
  %v1739 = vld [vmem:[#allocation2 + $0x1a] sm:$0xff]
  %v1740 = vld [vmem:[#allocation2 + $0x22] sm:$0xff]
  %v1741 = vld [vmem:[#allocation2 + $0x2a] sm:$0xff]
  %v1742 = vld [vmem:[#allocation2 + $0x32] sm:$0xff]
  %v1743 = vld [vmem:[#allocation2 + $0x3a] sm:$0xff]
  %v1744 = vld [vmem:[#allocation2 + $0x42] sm:$0xff]
  %v1745 = vld [vmem:[#allocation2 + $0x4a] sm:$0xff]
  %v1746 = vld [vmem:[#allocation2 + $0x52] sm:$0xff]
  %v1747 = vld [vmem:[#allocation2 + $0x5a] sm:$0xff]
  %v1748 = vld [vmem:[#allocation2 + $0x62] sm:$0xff]
  %v1749 = vld [vmem:[#allocation2 + $0x6a] sm:$0xff]
  %v1750 = vld [vmem:[#allocation2 + $0x72] sm:$0xff]
  %v1751 = vld [vmem:[#allocation2 + $0x7a] sm:$0x3]
  %1768 = vrot.lane.b32.xlu0 %v1736, 64
  %v1769 = vpop.permute.xlu0 %1768
  %1770 = vrot.lane.b32.xlu0 %v1737, 64
  %v1771 = vpop.permute.xlu0 %1770
  %1772 = vrot.lane.b32.xlu0 %v1738, 64
  %v1773 = vpop.permute.xlu0 %1772
  %1774 = vrot.lane.b32.xlu0 %v1739, 64
  %v1775 = vpop.permute.xlu0 %1774
  %1776 = vrot.lane.b32.xlu0 %v1740, 64
  %v1777 = vpop.permute.xlu0 %1776
  %1778 = vrot.lane.b32.xlu0 %v1741, 64
  %v1779 = vpop.permute.xlu0 %1778
  %1780 = vrot.lane.b32.xlu0 %v1742, 64
  %v1781 = vpop.permute.xlu0 %1780
  %1782 = vrot.lane.b32.xlu0 %v1743, 64
  %v1783 = vpop.permute.xlu0 %1782
  %1784 = vrot.lane.b32.xlu0 %v1744, 64
  %v1785 = vpop.permute.xlu0 %1784
  %1786 = vrot.lane.b32.xlu0 %v1745, 64
  %v1787 = vpop.permute.xlu0 %1786
  %1788 = vrot.lane.b32.xlu0 %v1746, 64
  %v1789 = vpop.permute.xlu0 %1788
  %1790 = vrot.lane.b32.xlu0 %v1747, 64
  %v1791 = vpop.permute.xlu0 %1790
  %1792 = vrot.lane.b32.xlu0 %v1748, 64
  %v1793 = vpop.permute.xlu0 %1792
  %1794 = vrot.lane.b32.xlu0 %v1749, 64
  %v1795 = vpop.permute.xlu0 %1794
  %1796 = vrot.lane.b32.xlu0 %v1750, 64
  %v1797 = vpop.permute.xlu0 %1796
  %1798 = vrot.lane.b32.xlu0 %v1751, 64
  %v1799 = vpop.permute.xlu0 %1798
  %1816 = vst.msk [vmem:[#allocation3] sm:$0xff] %vm584, %v1769
  %1817 = vst.msk [vmem:[#allocation3 + $0x18] sm:$0xff] %vm584, %v1771
  %1818 = vst.msk [vmem:[#allocation3 + $0x30] sm:$0xff] %vm584, %v1773
  %1819 = vst.msk [vmem:[#allocation3 + $0x48] sm:$0xff] %vm584, %v1775
  %1820 = vst.msk [vmem:[#allocation3 + $0x60] sm:$0xff] %vm584, %v1777
  %1821 = vst.msk [vmem:[#allocation3 + $0x78] sm:$0xff] %vm584, %v1779
  %1822 = vst.msk [vmem:[#allocation3 + $0x90] sm:$0xff] %vm584, %v1781
  %1823 = vst.msk [vmem:[#allocation3 + $0xa8] sm:$0xff] %vm584, %v1783
  %1824 = vst.msk [vmem:[#allocation3 + $0xc0] sm:$0xff] %vm584, %v1785
  %1825 = vst.msk [vmem:[#allocation3 + $0xd8] sm:$0xff] %vm584, %v1787
  %1826 = vst.msk [vmem:[#allocation3 + $0xf0] sm:$0xff] %vm584, %v1789
  %1827 = vst.msk [vmem:[#allocation3 + $0x108] sm:$0xff] %vm584, %v1791
  %1828 = vst.msk [vmem:[#allocation3 + $0x120] sm:$0xff] %vm584, %v1793
  %1829 = vst.msk [vmem:[#allocation3 + $0x138] sm:$0xff] %vm584, %v1795
  %1830 = vst.msk [vmem:[#allocation3 + $0x150] sm:$0xff] %vm584, %v1797
  %vm1831 = vcmask 779776
  %1832 = vst.msk [vmem:[#allocation3 + $0x168] sm:$0x3] %vm1831, %v1799
  %v1833 = vld [vmem:[#allocation2 + $0x9] sm:$0xff]
  %v1834 = vld [vmem:[#allocation2 + $0x11] sm:$0xff]
  %v1835 = vld [vmem:[#allocation2 + $0x19] sm:$0xff]
  %v1836 = vld [vmem:[#allocation2 + $0x21] sm:$0xff]
  %v1837 = vld [vmem:[#allocation2 + $0x29] sm:$0xff]
  %v1838 = vld [vmem:[#allocation2 + $0x31] sm:$0xff]
  %v1839 = vld [vmem:[#allocation2 + $0x39] sm:$0xff]
  %v1840 = vld [vmem:[#allocation2 + $0x41] sm:$0xff]
  %v1841 = vld [vmem:[#allocation2 + $0x49] sm:$0xff]
  %v1842 = vld [vmem:[#allocation2 + $0x51] sm:$0xff]
  %v1843 = vld [vmem:[#allocation2 + $0x59] sm:$0xff]
  %v1844 = vld [vmem:[#allocation2 + $0x61] sm:$0xff]
  %v1845 = vld [vmem:[#allocation2 + $0x69] sm:$0xff]
  %v1846 = vld [vmem:[#allocation2 + $0x71] sm:$0xff]
  %v1847 = vld [vmem:[#allocation2 + $0x79] sm:$0xff]
  %v1848 = vld [vmem:[#allocation2 + $0x81] sm:$0x3]
  %1865 = vrot.lane.b32.xlu0 %v1833, 96
  %v1866 = vpop.permute.xlu0 %1865
  %1867 = vrot.lane.b32.xlu0 %v1834, 96
  %v1868 = vpop.permute.xlu0 %1867
  %1869 = vrot.lane.b32.xlu0 %v1835, 96
  %v1870 = vpop.permute.xlu0 %1869
  %1871 = vrot.lane.b32.xlu0 %v1836, 96
  %v1872 = vpop.permute.xlu0 %1871
  %1873 = vrot.lane.b32.xlu0 %v1837, 96
  %v1874 = vpop.permute.xlu0 %1873
  %1875 = vrot.lane.b32.xlu0 %v1838, 96
  %v1876 = vpop.permute.xlu0 %1875
  %1877 = vrot.lane.b32.xlu0 %v1839, 96
  %v1878 = vpop.permute.xlu0 %1877
  %1879 = vrot.lane.b32.xlu0 %v1840, 96
  %v1880 = vpop.permute.xlu0 %1879
  %1881 = vrot.lane.b32.xlu0 %v1841, 96
  %v1882 = vpop.permute.xlu0 %1881
  %1883 = vrot.lane.b32.xlu0 %v1842, 96
  %v1884 = vpop.permute.xlu0 %1883
  %1885 = vrot.lane.b32.xlu0 %v1843, 96
  %v1886 = vpop.permute.xlu0 %1885
  %1887 = vrot.lane.b32.xlu0 %v1844, 96
  %v1888 = vpop.permute.xlu0 %1887
  %1889 = vrot.lane.b32.xlu0 %v1845, 96
  %v1890 = vpop.permute.xlu0 %1889
  %1891 = vrot.lane.b32.xlu0 %v1846, 96
  %v1892 = vpop.permute.xlu0 %1891
  %1893 = vrot.lane.b32.xlu0 %v1847, 96
  %v1894 = vpop.permute.xlu0 %1893
  %1895 = vrot.lane.b32.xlu0 %v1848, 96
  %v1896 = vpop.permute.xlu0 %1895
  %1913 = vst.msk [vmem:[#allocation3] sm:$0xff] %vm694, %v1866
  %1914 = vst.msk [vmem:[#allocation3 + $0x18] sm:$0xff] %vm694, %v1868
  %1915 = vst.msk [vmem:[#allocation3 + $0x30] sm:$0xff] %vm694, %v1870
  %1916 = vst.msk [vmem:[#allocation3 + $0x48] sm:$0xff] %vm694, %v1872
  %1917 = vst.msk [vmem:[#allocation3 + $0x60] sm:$0xff] %vm694, %v1874
  %1918 = vst.msk [vmem:[#allocation3 + $0x78] sm:$0xff] %vm694, %v1876
  %1919 = vst.msk [vmem:[#allocation3 + $0x90] sm:$0xff] %vm694, %v1878
  %1920 = vst.msk [vmem:[#allocation3 + $0xa8] sm:$0xff] %vm694, %v1880
  %1921 = vst.msk [vmem:[#allocation3 + $0xc0] sm:$0xff] %vm694, %v1882
  %1922 = vst.msk [vmem:[#allocation3 + $0xd8] sm:$0xff] %vm694, %v1884
  %1923 = vst.msk [vmem:[#allocation3 + $0xf0] sm:$0xff] %vm694, %v1886
  %1924 = vst.msk [vmem:[#allocation3 + $0x108] sm:$0xff] %vm694, %v1888
  %1925 = vst.msk [vmem:[#allocation3 + $0x120] sm:$0xff] %vm694, %v1890
  %1926 = vst.msk [vmem:[#allocation3 + $0x138] sm:$0xff] %vm694, %v1892
  %1927 = vst.msk [vmem:[#allocation3 + $0x150] sm:$0xff] %vm694, %v1894
  %vm1928 = vcmask 1042176
  %1929 = vst.msk [vmem:[#allocation3 + $0x168] sm:$0x3] %vm1928, %v1896
  %v1930 = vld [vmem:[#allocation2 + $0xa] sm:$0xff]
  %v1931 = vld [vmem:[#allocation2 + $0x12] sm:$0xff]
  %v1932 = vld [vmem:[#allocation2 + $0x1a] sm:$0xff]
  %v1933 = vld [vmem:[#allocation2 + $0x22] sm:$0xff]
  %v1934 = vld [vmem:[#allocation2 + $0x2a] sm:$0xff]
  %v1935 = vld [vmem:[#allocation2 + $0x32] sm:$0xff]
  %v1936 = vld [vmem:[#allocation2 + $0x3a] sm:$0xff]
  %v1937 = vld [vmem:[#allocation2 + $0x42] sm:$0xff]
  %v1938 = vld [vmem:[#allocation2 + $0x4a] sm:$0xff]
  %v1939 = vld [vmem:[#allocation2 + $0x52] sm:$0xff]
  %v1940 = vld [vmem:[#allocation2 + $0x5a] sm:$0xff]
  %v1941 = vld [vmem:[#allocation2 + $0x62] sm:$0xff]
  %v1942 = vld [vmem:[#allocation2 + $0x6a] sm:$0xff]
  %v1943 = vld [vmem:[#allocation2 + $0x72] sm:$0xff]
  %v1944 = vld [vmem:[#allocation2 + $0x7a] sm:$0xff]
  %v1945 = vld [vmem:[#allocation2 + $0x82] sm:$0x3]
  %1946 = vst.msk [vmem:[#allocation3 + $0x8] sm:$0xff] %vm324, %v1930
  %1947 = vst.msk [vmem:[#allocation3 + $0x20] sm:$0xff] %vm324, %v1931
  %1948 = vst.msk [vmem:[#allocation3 + $0x38] sm:$0xff] %vm324, %v1932
  %1949 = vst.msk [vmem:[#allocation3 + $0x50] sm:$0xff] %vm324, %v1933
  %1950 = vst.msk [vmem:[#allocation3 + $0x68] sm:$0xff] %vm324, %v1934
  %1951 = vst.msk [vmem:[#allocation3 + $0x80] sm:$0xff] %vm324, %v1935
  %1952 = vst.msk [vmem:[#allocation3 + $0x98] sm:$0xff] %vm324, %v1936
  %1953 = vst.msk [vmem:[#allocation3 + $0xb0] sm:$0xff] %vm324, %v1937
  %1954 = vst.msk [vmem:[#allocation3 + $0xc8] sm:$0xff] %vm324, %v1938
  %1955 = vst.msk [vmem:[#allocation3 + $0xe0] sm:$0xff] %vm324, %v1939
  %1956 = vst.msk [vmem:[#allocation3 + $0xf8] sm:$0xff] %vm324, %v1940
  %1957 = vst.msk [vmem:[#allocation3 + $0x110] sm:$0xff] %vm324, %v1941
  %1958 = vst.msk [vmem:[#allocation3 + $0x128] sm:$0xff] %vm324, %v1942
  %1959 = vst.msk [vmem:[#allocation3 + $0x140] sm:$0xff] %vm324, %v1943
  %1960 = vst.msk [vmem:[#allocation3 + $0x158] sm:$0xff] %vm324, %v1944
  %1961 = vst.msk [vmem:[#allocation3 + $0x170] sm:$0x3] %vm345, %v1945
  %v1962 = vld [vmem:[#allocation2 + $0xb] sm:$0xff]
  %v1963 = vld [vmem:[#allocation2 + $0x13] sm:$0xff]
  %v1964 = vld [vmem:[#allocation2 + $0x1b] sm:$0xff]
  %v1965 = vld [vmem:[#allocation2 + $0x23] sm:$0xff]
  %v1966 = vld [vmem:[#allocation2 + $0x2b] sm:$0xff]
  %v1967 = vld [vmem:[#allocation2 + $0x33] sm:$0xff]
  %v1968 = vld [vmem:[#allocation2 + $0x3b] sm:$0xff]
  %v1969 = vld [vmem:[#allocation2 + $0x43] sm:$0xff]
  %v1970 = vld [vmem:[#allocation2 + $0x4b] sm:$0xff]
  %v1971 = vld [vmem:[#allocation2 + $0x53] sm:$0xff]
  %v1972 = vld [vmem:[#allocation2 + $0x5b] sm:$0xff]
  %v1973 = vld [vmem:[#allocation2 + $0x63] sm:$0xff]
  %v1974 = vld [vmem:[#allocation2 + $0x6b] sm:$0xff]
  %v1975 = vld [vmem:[#allocation2 + $0x73] sm:$0xff]
  %v1976 = vld [vmem:[#allocation2 + $0x7b] sm:$0xff]
  %v1977 = vld [vmem:[#allocation2 + $0x83] sm:$0x3]
  %1994 = vrot.lane.b32.xlu0 %v1962, 32
  %v1995 = vpop.permute.xlu0 %1994
  %1996 = vrot.lane.b32.xlu0 %v1963, 32
  %v1997 = vpop.permute.xlu0 %1996
  %1998 = vrot.lane.b32.xlu0 %v1964, 32
  %v1999 = vpop.permute.xlu0 %1998
  %2000 = vrot.lane.b32.xlu0 %v1965, 32
  %v2001 = vpop.permute.xlu0 %2000
  %2002 = vrot.lane.b32.xlu0 %v1966, 32
  %v2003 = vpop.permute.xlu0 %2002
  %2004 = vrot.lane.b32.xlu0 %v1967, 32
  %v2005 = vpop.permute.xlu0 %2004
  %2006 = vrot.lane.b32.xlu0 %v1968, 32
  %v2007 = vpop.permute.xlu0 %2006
  %2008 = vrot.lane.b32.xlu0 %v1969, 32
  %v2009 = vpop.permute.xlu0 %2008
  %2010 = vrot.lane.b32.xlu0 %v1970, 32
  %v2011 = vpop.permute.xlu0 %2010
  %2012 = vrot.lane.b32.xlu0 %v1971, 32
  %v2013 = vpop.permute.xlu0 %2012
  %2014 = vrot.lane.b32.xlu0 %v1972, 32
  %v2015 = vpop.permute.xlu0 %2014
  %2016 = vrot.lane.b32.xlu0 %v1973, 32
  %v2017 = vpop.permute.xlu0 %2016
  %2018 = vrot.lane.b32.xlu0 %v1974, 32
  %v2019 = vpop.permute.xlu0 %2018
  %2020 = vrot.lane.b32.xlu0 %v1975, 32
  %v2021 = vpop.permute.xlu0 %2020
  %2022 = vrot.lane.b32.xlu0 %v1976, 32
  %v2023 = vpop.permute.xlu0 %2022
  %2024 = vrot.lane.b32.xlu0 %v1977, 32
  %v2025 = vpop.permute.xlu0 %2024
  %2042 = vst.msk [vmem:[#allocation3 + $0x8] sm:$0xff] %vm474, %v1995
  %2043 = vst.msk [vmem:[#allocation3 + $0x20] sm:$0xff] %vm474, %v1997
  %2044 = vst.msk [vmem:[#allocation3 + $0x38] sm:$0xff] %vm474, %v1999
  %2045 = vst.msk [vmem:[#allocation3 + $0x50] sm:$0xff] %vm474, %v2001
  %2046 = vst.msk [vmem:[#allocation3 + $0x68] sm:$0xff] %vm474, %v2003
  %2047 = vst.msk [vmem:[#allocation3 + $0x80] sm:$0xff] %vm474, %v2005
  %2048 = vst.msk [vmem:[#allocation3 + $0x98] sm:$0xff] %vm474, %v2007
  %2049 = vst.msk [vmem:[#allocation3 + $0xb0] sm:$0xff] %vm474, %v2009
  %2050 = vst.msk [vmem:[#allocation3 + $0xc8] sm:$0xff] %vm474, %v2011
  %2051 = vst.msk [vmem:[#allocation3 + $0xe0] sm:$0xff] %vm474, %v2013
  %2052 = vst.msk [vmem:[#allocation3 + $0xf8] sm:$0xff] %vm474, %v2015
  %2053 = vst.msk [vmem:[#allocation3 + $0x110] sm:$0xff] %vm474, %v2017
  %2054 = vst.msk [vmem:[#allocation3 + $0x128] sm:$0xff] %vm474, %v2019
  %2055 = vst.msk [vmem:[#allocation3 + $0x140] sm:$0xff] %vm474, %v2021
  %2056 = vst.msk [vmem:[#allocation3 + $0x158] sm:$0xff] %vm474, %v2023
  %2057 = vst.msk [vmem:[#allocation3 + $0x170] sm:$0x3] %vm1734, %v2025
  %v2058 = vld [vmem:[#allocation2 + $0x12] sm:$0xff]
  %v2059 = vld [vmem:[#allocation2 + $0x1a] sm:$0xff]
  %v2060 = vld [vmem:[#allocation2 + $0x22] sm:$0xff]
  %v2061 = vld [vmem:[#allocation2 + $0x2a] sm:$0xff]
  %v2062 = vld [vmem:[#allocation2 + $0x32] sm:$0xff]
  %v2063 = vld [vmem:[#allocation2 + $0x3a] sm:$0xff]
  %v2064 = vld [vmem:[#allocation2 + $0x42] sm:$0xff]
  %v2065 = vld [vmem:[#allocation2 + $0x4a] sm:$0xff]
  %v2066 = vld [vmem:[#allocation2 + $0x52] sm:$0xff]
  %v2067 = vld [vmem:[#allocation2 + $0x5a] sm:$0xff]
  %v2068 = vld [vmem:[#allocation2 + $0x62] sm:$0xff]
  %v2069 = vld [vmem:[#allocation2 + $0x6a] sm:$0xff]
  %v2070 = vld [vmem:[#allocation2 + $0x72] sm:$0xff]
  %v2071 = vld [vmem:[#allocation2 + $0x7a] sm:$0xff]
  %v2072 = vld [vmem:[#allocation2 + $0x82] sm:$0xff]
  %v2073 = vld [vmem:[#allocation2 + $0x8a] sm:$0x3]
  %2090 = vrot.lane.b32.xlu0 %v2058, 64
  %v2091 = vpop.permute.xlu0 %2090
  %2092 = vrot.lane.b32.xlu0 %v2059, 64
  %v2093 = vpop.permute.xlu0 %2092
  %2094 = vrot.lane.b32.xlu0 %v2060, 64
  %v2095 = vpop.permute.xlu0 %2094
  %2096 = vrot.lane.b32.xlu0 %v2061, 64
  %v2097 = vpop.permute.xlu0 %2096
  %2098 = vrot.lane.b32.xlu0 %v2062, 64
  %v2099 = vpop.permute.xlu0 %2098
  %2100 = vrot.lane.b32.xlu0 %v2063, 64
  %v2101 = vpop.permute.xlu0 %2100
  %2102 = vrot.lane.b32.xlu0 %v2064, 64
  %v2103 = vpop.permute.xlu0 %2102
  %2104 = vrot.lane.b32.xlu0 %v2065, 64
  %v2105 = vpop.permute.xlu0 %2104
  %2106 = vrot.lane.b32.xlu0 %v2066, 64
  %v2107 = vpop.permute.xlu0 %2106
  %2108 = vrot.lane.b32.xlu0 %v2067, 64
  %v2109 = vpop.permute.xlu0 %2108
  %2110 = vrot.lane.b32.xlu0 %v2068, 64
  %v2111 = vpop.permute.xlu0 %2110
  %2112 = vrot.lane.b32.xlu0 %v2069, 64
  %v2113 = vpop.permute.xlu0 %2112
  %2114 = vrot.lane.b32.xlu0 %v2070, 64
  %v2115 = vpop.permute.xlu0 %2114
  %2116 = vrot.lane.b32.xlu0 %v2071, 64
  %v2117 = vpop.permute.xlu0 %2116
  %2118 = vrot.lane.b32.xlu0 %v2072, 64
  %v2119 = vpop.permute.xlu0 %2118
  %2120 = vrot.lane.b32.xlu0 %v2073, 64
  %v2121 = vpop.permute.xlu0 %2120
  %2138 = vst.msk [vmem:[#allocation3 + $0x8] sm:$0xff] %vm584, %v2091
  %2139 = vst.msk [vmem:[#allocation3 + $0x20] sm:$0xff] %vm584, %v2093
  %2140 = vst.msk [vmem:[#allocation3 + $0x38] sm:$0xff] %vm584, %v2095
  %2141 = vst.msk [vmem:[#allocation3 + $0x50] sm:$0xff] %vm584, %v2097
  %2142 = vst.msk [vmem:[#allocation3 + $0x68] sm:$0xff] %vm584, %v2099
  %2143 = vst.msk [vmem:[#allocation3 + $0x80] sm:$0xff] %vm584, %v2101
  %2144 = vst.msk [vmem:[#allocation3 + $0x98] sm:$0xff] %vm584, %v2103
  %2145 = vst.msk [vmem:[#allocation3 + $0xb0] sm:$0xff] %vm584, %v2105
  %2146 = vst.msk [vmem:[#allocation3 + $0xc8] sm:$0xff] %vm584, %v2107
  %2147 = vst.msk [vmem:[#allocation3 + $0xe0] sm:$0xff] %vm584, %v2109
  %2148 = vst.msk [vmem:[#allocation3 + $0xf8] sm:$0xff] %vm584, %v2111
  %2149 = vst.msk [vmem:[#allocation3 + $0x110] sm:$0xff] %vm584, %v2113
  %2150 = vst.msk [vmem:[#allocation3 + $0x128] sm:$0xff] %vm584, %v2115
  %2151 = vst.msk [vmem:[#allocation3 + $0x140] sm:$0xff] %vm584, %v2117
  %2152 = vst.msk [vmem:[#allocation3 + $0x158] sm:$0xff] %vm584, %v2119
  %2153 = vst.msk [vmem:[#allocation3 + $0x170] sm:$0x3] %vm1831, %v2121
  %v2154 = vld [vmem:[#allocation2 + $0x13] sm:$0xff]
  %v2155 = vld [vmem:[#allocation2 + $0x1b] sm:$0xff]
  %v2156 = vld [vmem:[#allocation2 + $0x23] sm:$0xff]
  %v2157 = vld [vmem:[#allocation2 + $0x2b] sm:$0xff]
  %v2158 = vld [vmem:[#allocation2 + $0x33] sm:$0xff]
  %v2159 = vld [vmem:[#allocation2 + $0x3b] sm:$0xff]
  %v2160 = vld [vmem:[#allocation2 + $0x43] sm:$0xff]
  %v2161 = vld [vmem:[#allocation2 + $0x4b] sm:$0xff]
  %v2162 = vld [vmem:[#allocation2 + $0x53] sm:$0xff]
  %v2163 = vld [vmem:[#allocation2 + $0x5b] sm:$0xff]
  %v2164 = vld [vmem:[#allocation2 + $0x63] sm:$0xff]
  %v2165 = vld [vmem:[#allocation2 + $0x6b] sm:$0xff]
  %v2166 = vld [vmem:[#allocation2 + $0x73] sm:$0xff]
  %v2167 = vld [vmem:[#allocation2 + $0x7b] sm:$0xff]
  %v2168 = vld [vmem:[#allocation2 + $0x83] sm:$0xff]
  %v2169 = vld [vmem:[#allocation2 + $0x8b] sm:$0x3]
  %2186 = vrot.lane.b32.xlu0 %v2154, 96
  %v2187 = vpop.permute.xlu0 %2186
  %2188 = vrot.lane.b32.xlu0 %v2155, 96
  %v2189 = vpop.permute.xlu0 %2188
  %2190 = vrot.lane.b32.xlu0 %v2156, 96
  %v2191 = vpop.permute.xlu0 %2190
  %2192 = vrot.lane.b32.xlu0 %v2157, 96
  %v2193 = vpop.permute.xlu0 %2192
  %2194 = vrot.lane.b32.xlu0 %v2158, 96
  %v2195 = vpop.permute.xlu0 %2194
  %2196 = vrot.lane.b32.xlu0 %v2159, 96
  %v2197 = vpop.permute.xlu0 %2196
  %2198 = vrot.lane.b32.xlu0 %v2160, 96
  %v2199 = vpop.permute.xlu0 %2198
  %2200 = vrot.lane.b32.xlu0 %v2161, 96
  %v2201 = vpop.permute.xlu0 %2200
  %2202 = vrot.lane.b32.xlu0 %v2162, 96
  %v2203 = vpop.permute.xlu0 %2202
  %2204 = vrot.lane.b32.xlu0 %v2163, 96
  %v2205 = vpop.permute.xlu0 %2204
  %2206 = vrot.lane.b32.xlu0 %v2164, 96
  %v2207 = vpop.permute.xlu0 %2206
  %2208 = vrot.lane.b32.xlu0 %v2165, 96
  %v2209 = vpop.permute.xlu0 %2208
  %2210 = vrot.lane.b32.xlu0 %v2166, 96
  %v2211 = vpop.permute.xlu0 %2210
  %2212 = vrot.lane.b32.xlu0 %v2167, 96
  %v2213 = vpop.permute.xlu0 %2212
  %2214 = vrot.lane.b32.xlu0 %v2168, 96
  %v2215 = vpop.permute.xlu0 %2214
  %2216 = vrot.lane.b32.xlu0 %v2169, 96
  %v2217 = vpop.permute.xlu0 %2216
  %2234 = vst.msk [vmem:[#allocation3 + $0x8] sm:$0xff] %vm694, %v2187
  %2235 = vst.msk [vmem:[#allocation3 + $0x20] sm:$0xff] %vm694, %v2189
  %2236 = vst.msk [vmem:[#allocation3 + $0x38] sm:$0xff] %vm694, %v2191
  %2237 = vst.msk [vmem:[#allocation3 + $0x50] sm:$0xff] %vm694, %v2193
  %2238 = vst.msk [vmem:[#allocation3 + $0x68] sm:$0xff] %vm694, %v2195
  %2239 = vst.msk [vmem:[#allocation3 + $0x80] sm:$0xff] %vm694, %v2197
  %2240 = vst.msk [vmem:[#allocation3 + $0x98] sm:$0xff] %vm694, %v2199
  %2241 = vst.msk [vmem:[#allocation3 + $0xb0] sm:$0xff] %vm694, %v2201
  %2242 = vst.msk [vmem:[#allocation3 + $0xc8] sm:$0xff] %vm694, %v2203
  %2243 = vst.msk [vmem:[#allocation3 + $0xe0] sm:$0xff] %vm694, %v2205
  %2244 = vst.msk [vmem:[#allocation3 + $0xf8] sm:$0xff] %vm694, %v2207
  %2245 = vst.msk [vmem:[#allocation3 + $0x110] sm:$0xff] %vm694, %v2209
  %2246 = vst.msk [vmem:[#allocation3 + $0x128] sm:$0xff] %vm694, %v2211
  %2247 = vst.msk [vmem:[#allocation3 + $0x140] sm:$0xff] %vm694, %v2213
  %2248 = vst.msk [vmem:[#allocation3 + $0x158] sm:$0xff] %vm694, %v2215
  %2249 = vst.msk [vmem:[#allocation3 + $0x170] sm:$0x3] %vm1928, %v2217
  %v2250 = vld [vmem:[#allocation2 + $0x14] sm:$0xff]
  %v2251 = vld [vmem:[#allocation2 + $0x1c] sm:$0xff]
  %v2252 = vld [vmem:[#allocation2 + $0x24] sm:$0xff]
  %v2253 = vld [vmem:[#allocation2 + $0x2c] sm:$0xff]
  %v2254 = vld [vmem:[#allocation2 + $0x34] sm:$0xff]
  %v2255 = vld [vmem:[#allocation2 + $0x3c] sm:$0xff]
  %v2256 = vld [vmem:[#allocation2 + $0x44] sm:$0xff]
  %v2257 = vld [vmem:[#allocation2 + $0x4c] sm:$0xff]
  %v2258 = vld [vmem:[#allocation2 + $0x54] sm:$0xff]
  %v2259 = vld [vmem:[#allocation2 + $0x5c] sm:$0xff]
  %v2260 = vld [vmem:[#allocation2 + $0x64] sm:$0xff]
  %v2261 = vld [vmem:[#allocation2 + $0x6c] sm:$0xff]
  %v2262 = vld [vmem:[#allocation2 + $0x74] sm:$0xff]
  %v2263 = vld [vmem:[#allocation2 + $0x7c] sm:$0xff]
  %v2264 = vld [vmem:[#allocation2 + $0x84] sm:$0xff]
  %v2265 = vld [vmem:[#allocation2 + $0x8c] sm:$0x3]
  %2266 = vst.msk [vmem:[#allocation3 + $0x10] sm:$0xff] %vm324, %v2250
  %2267 = vst.msk [vmem:[#allocation3 + $0x28] sm:$0xff] %vm324, %v2251
  %2268 = vst.msk [vmem:[#allocation3 + $0x40] sm:$0xff] %vm324, %v2252
  %2269 = vst.msk [vmem:[#allocation3 + $0x58] sm:$0xff] %vm324, %v2253
  %2270 = vst.msk [vmem:[#allocation3 + $0x70] sm:$0xff] %vm324, %v2254
  %2271 = vst.msk [vmem:[#allocation3 + $0x88] sm:$0xff] %vm324, %v2255
  %2272 = vst.msk [vmem:[#allocation3 + $0xa0] sm:$0xff] %vm324, %v2256
  %2273 = vst.msk [vmem:[#allocation3 + $0xb8] sm:$0xff] %vm324, %v2257
  %2274 = vst.msk [vmem:[#allocation3 + $0xd0] sm:$0xff] %vm324, %v2258
  %2275 = vst.msk [vmem:[#allocation3 + $0xe8] sm:$0xff] %vm324, %v2259
  %2276 = vst.msk [vmem:[#allocation3 + $0x100] sm:$0xff] %vm324, %v2260
  %2277 = vst.msk [vmem:[#allocation3 + $0x118] sm:$0xff] %vm324, %v2261
  %2278 = vst.msk [vmem:[#allocation3 + $0x130] sm:$0xff] %vm324, %v2262
  %2279 = vst.msk [vmem:[#allocation3 + $0x148] sm:$0xff] %vm324, %v2263
  %2280 = vst.msk [vmem:[#allocation3 + $0x160] sm:$0xff] %vm324, %v2264
  %2281 = vst.msk [vmem:[#allocation3 + $0x178] sm:$0x3] %vm345, %v2265
  %v2282 = vld [vmem:[#allocation3] sm:$0xff]
  %v2283 = vld [vmem:[#allocation3 + $0x8] sm:$0xff]
  %v2284 = vld [vmem:[#allocation3 + $0x10] sm:$0xff]
  %v2285 = vld [vmem:[#allocation3 + $0x18] sm:$0xff]
  %v2286 = vld [vmem:[#allocation3 + $0x20] sm:$0xff]
  %v2287 = vld [vmem:[#allocation3 + $0x28] sm:$0xff]
  %v2288 = vld [vmem:[#allocation3 + $0x30] sm:$0xff]
  %v2289 = vld [vmem:[#allocation3 + $0x38] sm:$0xff]
  %v2290 = vld [vmem:[#allocation3 + $0x40] sm:$0xff]
  %v2291 = vld [vmem:[#allocation3 + $0x48] sm:$0xff]
  %v2292 = vld [vmem:[#allocation3 + $0x50] sm:$0xff]
  %v2293 = vld [vmem:[#allocation3 + $0x58] sm:$0xff]
  %v2294 = vld [vmem:[#allocation3 + $0x60] sm:$0xff]
  %v2295 = vld [vmem:[#allocation3 + $0x68] sm:$0xff]
  %v2296 = vld [vmem:[#allocation3 + $0x70] sm:$0xff]
  %v2297 = vld [vmem:[#allocation3 + $0x78] sm:$0xff]
  %v2298 = vld [vmem:[#allocation3 + $0x80] sm:$0xff]
  %v2299 = vld [vmem:[#allocation3 + $0x88] sm:$0xff]
  %v2300 = vld [vmem:[#allocation3 + $0x90] sm:$0xff]
  %v2301 = vld [vmem:[#allocation3 + $0x98] sm:$0xff]
  %v2302 = vld [vmem:[#allocation3 + $0xa0] sm:$0xff]
  %v2303 = vld [vmem:[#allocation3 + $0xa8] sm:$0xff]
  %v2304 = vld [vmem:[#allocation3 + $0xb0] sm:$0xff]
  %v2305 = vld [vmem:[#allocation3 + $0xb8] sm:$0xff]
  %v2306 = vld [vmem:[#allocation3 + $0xc0] sm:$0xff]
  %v2307 = vld [vmem:[#allocation3 + $0xc8] sm:$0xff]
  %v2308 = vld [vmem:[#allocation3 + $0xd0] sm:$0xff]
  %v2309 = vld [vmem:[#allocation3 + $0xd8] sm:$0xff]
  %v2310 = vld [vmem:[#allocation3 + $0xe0] sm:$0xff]
  %v2311 = vld [vmem:[#allocation3 + $0xe8] sm:$0xff]
  %v2312 = vld [vmem:[#allocation3 + $0xf0] sm:$0xff]
  %v2313 = vld [vmem:[#allocation3 + $0xf8] sm:$0xff]
  %v2314 = vld [vmem:[#allocation3 + $0x100] sm:$0xff]
  %v2315 = vld [vmem:[#allocation3 + $0x108] sm:$0xff]
  %v2316 = vld [vmem:[#allocation3 + $0x110] sm:$0xff]
  %v2317 = vld [vmem:[#allocation3 + $0x118] sm:$0xff]
  %v2318 = vld [vmem:[#allocation3 + $0x120] sm:$0xff]
  %v2319 = vld [vmem:[#allocation3 + $0x128] sm:$0xff]
  %v2320 = vld [vmem:[#allocation3 + $0x130] sm:$0xff]
  %v2321 = vld [vmem:[#allocation3 + $0x138] sm:$0xff]
  %v2322 = vld [vmem:[#allocation3 + $0x140] sm:$0xff]
  %v2323 = vld [vmem:[#allocation3 + $0x148] sm:$0xff]
  %v2324 = vld [vmem:[#allocation3 + $0x150] sm:$0xff]
  %v2325 = vld [vmem:[#allocation3 + $0x158] sm:$0xff]
  %v2326 = vld [vmem:[#allocation3 + $0x160] sm:$0xff]
  %v2327 = vld [vmem:[#allocation3 + $0x168] sm:$0x3]
  %v2328 = vld [vmem:[#allocation3 + $0x170] sm:$0x3]
  %v2329 = vld [vmem:[#allocation3 + $0x178] sm:$0x3]
  %v2330 = vld [vmem:[%s5] sm:$0xff]
  %v2331 = vld [vmem:[%s5 + $0x8] sm:$0xff]
  %v2332 = vld [vmem:[%s5 + $0x10] sm:$0xff]
  %v2333 = vld [vmem:[%s5 + $0x18] sm:$0xff]
  %v2334 = vld [vmem:[%s5 + $0x20] sm:$0xff]
  %v2335 = vld [vmem:[%s5 + $0x28] sm:$0xff]
  %v2336 = vld [vmem:[%s5 + $0x30] sm:$0xff]
  %v2337 = vld [vmem:[%s5 + $0x38] sm:$0xff]
  %v2338 = vld [vmem:[%s5 + $0x40] sm:$0xff]
  %v2339 = vld [vmem:[%s5 + $0x48] sm:$0xff]
  %v2340 = vld [vmem:[%s5 + $0x50] sm:$0xff]
  %v2341 = vld [vmem:[%s5 + $0x58] sm:$0xff]
  %v2342 = vld [vmem:[%s5 + $0x60] sm:$0xff]
  %v2343 = vld [vmem:[%s5 + $0x68] sm:$0xff]
  %v2344 = vld [vmem:[%s5 + $0x70] sm:$0xff]
  %v2345 = vld [vmem:[%s5 + $0x78] sm:$0xff]
  %v2346 = vld [vmem:[%s5 + $0x80] sm:$0xff]
  %v2347 = vld [vmem:[%s5 + $0x88] sm:$0xff]
  %v2348 = vld [vmem:[%s5 + $0x90] sm:$0xff]
  %v2349 = vld [vmem:[%s5 + $0x98] sm:$0xff]
  %v2350 = vld [vmem:[%s5 + $0xa0] sm:$0xff]
  %v2351 = vld [vmem:[%s5 + $0xa8] sm:$0xff]
  %v2352 = vld [vmem:[%s5 + $0xb0] sm:$0xff]
  %v2353 = vld [vmem:[%s5 + $0xb8] sm:$0xff]
  %v2354 = vld [vmem:[%s5 + $0xc0] sm:$0xff]
  %v2355 = vld [vmem:[%s5 + $0xc8] sm:$0xff]
  %v2356 = vld [vmem:[%s5 + $0xd0] sm:$0xff]
  %v2357 = vld [vmem:[%s5 + $0xd8] sm:$0xff]
  %v2358 = vld [vmem:[%s5 + $0xe0] sm:$0xff]
  %v2359 = vld [vmem:[%s5 + $0xe8] sm:$0xff]
  %v2360 = vld [vmem:[%s5 + $0xf0] sm:$0xff]
  %v2361 = vld [vmem:[%s5 + $0xf8] sm:$0xff]
  %v2362 = vld [vmem:[%s5 + $0x100] sm:$0xff]
  %v2363 = vld [vmem:[%s5 + $0x108] sm:$0xff]
  %v2364 = vld [vmem:[%s5 + $0x110] sm:$0xff]
  %v2365 = vld [vmem:[%s5 + $0x118] sm:$0xff]
  %v2366 = vld [vmem:[%s6] sm:$0x1]
  %v2368 = vlaneseq
  %v2369 = vshrl.u32 %v2368, 7
  %v2370 = vsub.s32 0, %v2369
  %v2371 = vrot.slane %v2366, %v2370
  %v2374 = vsel %vm324, %v2284, 0
  %v2377 = vsel %vm324, %v2287, 0
  %v2380 = vsel %vm324, %v2290, 0
  %v2383 = vsel %vm324, %v2293, 0
  %v2386 = vsel %vm324, %v2296, 0
  %v2389 = vsel %vm324, %v2299, 0
  %v2392 = vsel %vm324, %v2302, 0
  %v2395 = vsel %vm324, %v2305, 0
  %v2398 = vsel %vm324, %v2308, 0
  %v2401 = vsel %vm324, %v2311, 0
  %v2404 = vsel %vm324, %v2314, 0
  %v2407 = vsel %vm324, %v2317, 0
  %v2410 = vsel %vm324, %v2320, 0
  %v2413 = vsel %vm324, %v2323, 0
  %v2416 = vsel %vm324, %v2326, 0
  %v2419 = vsel %vm324, %v2329, 0
  %2421 = vmatprep.subr.mxu0 0.0
  %2422 = vmatpush1.msra.mxu0 %v2330
  %2423 = vmatprep.subr.mxu0 0.0
  %2424 = vmatpush1.msra.mxu0 %v2331
  %2425 = vmatprep.subr.mxu0 0.0
  %2426 = vmatpush1.msra.mxu0 %v2332
  %2427 = vmatprep.subr.mxu0 0.0
  %2428 = vmatpush1.msra.mxu0 %v2333
  %2429 = vmatprep.subr.mxu0 0.0
  %2430 = vmatpush1.msra.mxu0 %v2334
  %2431 = vmatprep.subr.mxu0 0.0
  %2432 = vmatpush1.msra.mxu0 %v2335
  %2433 = vmatprep.subr.mxu0 0.0
  %2434 = vmatpush1.msra.mxu0 %v2336
  %2435 = vmatprep.subr.mxu0 0.0
  %2436 = vmatpush1.msra.mxu0 %v2337
  %2437 = vmatprep.subr.mxu0 0.0
  %2438 = vmatpush1.msra.mxu0 %v2338
  %2439 = vmatprep.subr.mxu0 0.0
  %2440 = vmatpush1.msra.mxu0 %v2339
  %2441 = vmatprep.subr.mxu0 0.0
  %2442 = vmatpush1.msra.mxu0 %v2340
  %2443 = vmatprep.subr.mxu0 0.0
  %2444 = vmatpush1.msra.mxu0 %v2341
  %2445 = vmatprep.subr.mxu0 0.0
  %2446 = vmatpush1.msra.mxu0 %v2342
  %2447 = vmatprep.subr.mxu0 0.0
  %2448 = vmatpush1.msra.mxu0 %v2343
  %2449 = vmatprep.subr.mxu0 0.0
  %2450 = vmatpush1.msra.mxu0 %v2344
  %2451 = vmatprep.subr.mxu0 0.0
  %2452 = vmatpush1.msra.mxu0 %v2345
  %2453 = vmatprep.subr.mxu0 0.0
  %2454 = vmatpush1.msra.mxu0 %v2346
  %2455 = vmatprep.subr.mxu0 0.0
  %2456 = vmatpush1.msra.mxu0 %v2347
  %2457 = vmatprep.subr.mxu0 0.0
  %2458 = vmatpush1.msra.mxu0 %v2348
  %2459 = vmatprep.subr.mxu0 0.0
  %2460 = vmatpush1.msra.mxu0 %v2349
  %2461 = vmatprep.subr.mxu0 0.0
  %2462 = vmatpush1.msra.mxu0 %v2350
  %2463 = vmatprep.subr.mxu0 0.0
  %2464 = vmatpush1.msra.mxu0 %v2351
  %2465 = vmatprep.subr.mxu0 0.0
  %2466 = vmatpush1.msra.mxu0 %v2352
  %2467 = vmatprep.subr.mxu0 0.0
  %2468 = vmatpush1.msra.mxu0 %v2353
  %2469 = vmatprep.subr.mxu0 0.0
  %2470 = vmatpush1.msra.mxu0 %v2354
  %2471 = vmatprep.subr.mxu0 0.0
  %2472 = vmatpush1.msra.mxu0 %v2355
  %2473 = vmatprep.subr.mxu0 0.0
  %2474 = vmatpush1.msra.mxu0 %v2356
  %2475 = vmatprep.subr.mxu0 0.0
  %2476 = vmatpush1.msra.mxu0 %v2357
  %2477 = vmatprep.subr.mxu0 0.0
  %2478 = vmatpush1.msra.mxu0 %v2358
  %2479 = vmatprep.subr.mxu0 0.0
  %2480 = vmatpush1.msra.mxu0 %v2359
  %2481 = vmatprep.subr.mxu0 0.0
  %2482 = vmatpush1.msra.mxu0 %v2360
  %2483 = vmatprep.subr.mxu0 0.0
  %2484 = vmatpush1.msra.mxu0 %v2361
  %2485 = vmatprep.mubr.f32.mxu0 %v2283
  %2486 = vmatmul.mubr.f32.gmra.mrb[0].mxu0 %v2282
  %v2487 = vpop.f32.mrb[0].mxu0
  %v2488 = vadd.f32 %v2371, %v2487
  %v2489 = vpop.f32.mrb[0].mxu0
  %2490 = vmatprep.mubr.f32.mxu0 %v2286
  %2491 = vmatmul.mubr.f32.gmra.mrb[0].mxu0 %v2285
  %v2492 = vpop.f32.mrb[0].mxu0
  %v2493 = vadd.f32 %v2371, %v2492
  %v2494 = vpop.f32.mrb[0].mxu0
  %2495 = vmatprep.mubr.f32.mxu0 %v2289
  %2496 = vmatmul.mubr.f32.gmra.mrb[0].mxu0 %v2288
  %v2497 = vpop.f32.mrb[0].mxu0
  %v2498 = vadd.f32 %v2371, %v2497
  %v2499 = vpop.f32.mrb[0].mxu0
  %2500 = vmatprep.mubr.f32.mxu0 %v2292
  %2501 = vmatmul.mubr.f32.gmra.mrb[0].mxu0 %v2291
  %v2502 = vpop.f32.mrb[0].mxu0
  %v2503 = vadd.f32 %v2371, %v2502
  %v2504 = vpop.f32.mrb[0].mxu0
  %2505 = vmatprep.mubr.f32.mxu0 %v2295
  %2506 = vmatmul.mubr.f32.gmra.mrb[0].mxu0 %v2294
  %v2507 = vpop.f32.mrb[0].mxu0
  %v2508 = vadd.f32 %v2371, %v2507
  %v2509 = vpop.f32.mrb[0].mxu0
  %2510 = vmatprep.mubr.f32.mxu0 %v2298
  %2511 = vmatmul.mubr.f32.gmra.mrb[0].mxu0 %v2297
  %v2512 = vpop.f32.mrb[0].mxu0
  %v2513 = vadd.f32 %v2371, %v2512
  %v2514 = vpop.f32.mrb[0].mxu0
  %2515 = vmatprep.mubr.f32.mxu0 %v2301
  %2516 = vmatmul.mubr.f32.gmra.mrb[0].mxu0 %v2300
  %v2517 = vpop.f32.mrb[0].mxu0
  %v2518 = vadd.f32 %v2371, %v2517
  %v2519 = vpop.f32.mrb[0].mxu0
  %2520 = vmatprep.mubr.f32.mxu0 %v2304
  %2521 = vmatmul.mubr.f32.gmra.mrb[0].mxu0 %v2303
  %v2522 = vpop.f32.mrb[0].mxu0
  %v2523 = vadd.f32 %v2371, %v2522
  %v2524 = vpop.f32.mrb[0].mxu0
  %2525 = vmatprep.mubr.f32.mxu0 %v2307
  %2526 = vmatmul.mubr.f32.gmra.mrb[0].mxu0 %v2306
  %v2527 = vpop.f32.mrb[0].mxu0
  %v2528 = vadd.f32 %v2371, %v2527
  %v2529 = vpop.f32.mrb[0].mxu0
  %2530 = vmatprep.mubr.f32.mxu0 %v2310
  %2531 = vmatmul.mubr.f32.gmra.mrb[0].mxu0 %v2309
  %v2532 = vpop.f32.mrb[0].mxu0
  %v2533 = vadd.f32 %v2371, %v2532
  %v2534 = vpop.f32.mrb[0].mxu0
  %2535 = vmatprep.mubr.f32.mxu0 %v2313
  %2536 = vmatmul.mubr.f32.gmra.mrb[0].mxu0 %v2312
  %v2537 = vpop.f32.mrb[0].mxu0
  %v2538 = vadd.f32 %v2371, %v2537
  %v2539 = vpop.f32.mrb[0].mxu0
  %2540 = vmatprep.mubr.f32.mxu0 %v2316
  %2541 = vmatmul.mubr.f32.gmra.mrb[0].mxu0 %v2315
  %v2542 = vpop.f32.mrb[0].mxu0
  %v2543 = vadd.f32 %v2371, %v2542
  %v2544 = vpop.f32.mrb[0].mxu0
  %2545 = vmatprep.mubr.f32.mxu0 %v2319
  %2546 = vmatmul.mubr.f32.gmra.mrb[0].mxu0 %v2318
  %v2547 = vpop.f32.mrb[0].mxu0
  %v2548 = vadd.f32 %v2371, %v2547
  %v2549 = vpop.f32.mrb[0].mxu0
  %2550 = vmatprep.mubr.f32.mxu0 %v2322
  %2551 = vmatmul.mubr.f32.gmra.mrb[0].mxu0 %v2321
  %v2552 = vpop.f32.mrb[0].mxu0
  %v2553 = vadd.f32 %v2371, %v2552
  %v2554 = vpop.f32.mrb[0].mxu0
  %2555 = vmatprep.mubr.f32.mxu0 %v2325
  %2556 = vmatmul.mubr.f32.gmra.mrb[0].mxu0 %v2324
  %v2557 = vpop.f32.mrb[0].mxu0
  %v2558 = vadd.f32 %v2371, %v2557
  %v2559 = vpop.f32.mrb[0].mxu0
  %2560 = vmatprep.mubr.f32.mxu0 %v2328
  %2561 = vmatmul.mubr.f32.gmra.mrb[0].mxu0 %v2327
  %v2562 = vpop.f32.mrb[0].mxu0
  %v2563 = vadd.f32 %v2371, %v2562
  %v2564 = vpop.f32.mrb[0].mxu0
  %2565 = vdwg.mxu0
  %2566 = vmatprep.subr.mxu0 0.0
  %2567 = vmatpush1.msra.mxu0 %v2362
  %2568 = vmatprep.subr.mxu0 0.0
  %2569 = vmatpush1.msra.mxu0 %v2363
  %2570 = vmatprep.subr.mxu0 0.0
  %2571 = vmatpush1.msra.mxu0 %v2364
  %2572 = vmatprep.subr.mxu0 0.0
  %2573 = vmatpush1.msra.mxu0 %v2365
  %2574 = vmatprep.subr.mxu0 0.0
  %2575 = vmatpush1.msra.mxu0 0.0
  %2576 = vmatprep.subr.mxu0 0.0
  %2577 = vmatpush1.msra.mxu0 0.0
  %2578 = vmatprep.subr.mxu0 0.0
  %2579 = vmatpush1.msra.mxu0 0.0
  %2580 = vmatprep.subr.mxu0 0.0
  %2581 = vmatpush1.msra.mxu0 0.0
  %2582 = vmatprep.subr.mxu0 0.0
  %2583 = vmatpush1.msra.mxu0 0.0
  %2584 = vmatprep.subr.mxu0 0.0
  %2585 = vmatpush1.msra.mxu0 0.0
  %2586 = vmatprep.subr.mxu0 0.0
  %2587 = vmatpush1.msra.mxu0 0.0
  %2588 = vmatprep.subr.mxu0 0.0
  %2589 = vmatpush1.msra.mxu0 0.0
  %2590 = vmatprep.subr.mxu0 0.0
  %2591 = vmatpush1.msra.mxu0 0.0
  %2592 = vmatprep.subr.mxu0 0.0
  %2593 = vmatpush1.msra.mxu0 0.0
  %2594 = vmatprep.subr.mxu0 0.0
  %2595 = vmatpush1.msra.mxu0 0.0
  %2596 = vmatprep.subr.mxu0 0.0
  %2597 = vmatpush1.msra.mxu0 0.0
  %2598 = vmatprep.subr.mxu0 0.0
  %2599 = vmatpush1.msra.mxu0 0.0
  %2600 = vmatprep.subr.mxu0 0.0
  %2601 = vmatpush1.msra.mxu0 0.0
  %2602 = vmatprep.subr.mxu0 0.0
  %2603 = vmatpush1.msra.mxu0 0.0
  %2604 = vmatprep.subr.mxu0 0.0
  %2605 = vmatpush1.msra.mxu0 0.0
  %2606 = vmatprep.subr.mxu0 0.0
  %2607 = vmatpush1.msra.mxu0 0.0
  %2608 = vmatprep.subr.mxu0 0.0
  %2609 = vmatpush1.msra.mxu0 0.0
  %2610 = vmatprep.subr.mxu0 0.0
  %2611 = vmatpush1.msra.mxu0 0.0
  %2612 = vmatprep.subr.mxu0 0.0
  %2613 = vmatpush1.msra.mxu0 0.0
  %2614 = vmatprep.subr.mxu0 0.0
  %2615 = vmatpush1.msra.mxu0 0.0
  %2616 = vmatprep.subr.mxu0 0.0
  %2617 = vmatpush1.msra.mxu0 0.0
  %2618 = vmatprep.subr.mxu0 0.0
  %2619 = vmatpush1.msra.mxu0 0.0
  %2620 = vmatprep.subr.mxu0 0.0
  %2621 = vmatpush1.msra.mxu0 0.0
  %2622 = vmatprep.subr.mxu0 0.0
  %2623 = vmatpush1.msra.mxu0 0.0
  %2624 = vmatprep.subr.mxu0 0.0
  %2625 = vmatpush1.msra.mxu0 0.0
  %2626 = vmatprep.subr.mxu0 0.0
  %2627 = vmatpush1.msra.mxu0 0.0
  %2628 = vmatprep.subr.mxu0 0.0
  %2629 = vmatpush1.msra.mxu0 0.0
  %2630 = vmatprep.mubr.f32.mxu0 0.0
  %2631 = vmatmul.mubr.f32.gmra.mrb[0].mxu0 %v2374
  %v2632 = vpop.f32.mrb[0].mxu0
  %v2633 = vadd.f32 %v2488, %v2632
  %v2634 = vpop.f32.mrb[0].mxu0
  %2635 = vmatprep.mubr.f32.mxu0 0.0
  %2636 = vmatmul.mubr.f32.gmra.mrb[0].mxu0 %v2377
  %v2637 = vpop.f32.mrb[0].mxu0
  %v2638 = vadd.f32 %v2493, %v2637
  %v2639 = vpop.f32.mrb[0].mxu0
  %2640 = vmatprep.mubr.f32.mxu0 0.0
  %2641 = vmatmul.mubr.f32.gmra.mrb[0].mxu0 %v2380
  %v2642 = vpop.f32.mrb[0].mxu0
  %v2643 = vadd.f32 %v2498, %v2642
  %v2644 = vpop.f32.mrb[0].mxu0
  %2645 = vmatprep.mubr.f32.mxu0 0.0
  %2646 = vmatmul.mubr.f32.gmra.mrb[0].mxu0 %v2383
  %v2647 = vpop.f32.mrb[0].mxu0
  %v2648 = vadd.f32 %v2503, %v2647
  %v2649 = vpop.f32.mrb[0].mxu0
  %2650 = vmatprep.mubr.f32.mxu0 0.0
  %2651 = vmatmul.mubr.f32.gmra.mrb[0].mxu0 %v2386
  %v2652 = vpop.f32.mrb[0].mxu0
  %v2653 = vadd.f32 %v2508, %v2652
  %v2654 = vpop.f32.mrb[0].mxu0
  %2655 = vmatprep.mubr.f32.mxu0 0.0
  %2656 = vmatmul.mubr.f32.gmra.mrb[0].mxu0 %v2389
  %v2657 = vpop.f32.mrb[0].mxu0
  %v2658 = vadd.f32 %v2513, %v2657
  %v2659 = vpop.f32.mrb[0].mxu0
  %2660 = vmatprep.mubr.f32.mxu0 0.0
  %2661 = vmatmul.mubr.f32.gmra.mrb[0].mxu0 %v2392
  %v2662 = vpop.f32.mrb[0].mxu0
  %v2663 = vadd.f32 %v2518, %v2662
  %v2664 = vpop.f32.mrb[0].mxu0
  %2665 = vmatprep.mubr.f32.mxu0 0.0
  %2666 = vmatmul.mubr.f32.gmra.mrb[0].mxu0 %v2395
  %v2667 = vpop.f32.mrb[0].mxu0
  %v2668 = vadd.f32 %v2523, %v2667
  %v2669 = vpop.f32.mrb[0].mxu0
  %2670 = vmatprep.mubr.f32.mxu0 0.0
  %2671 = vmatmul.mubr.f32.gmra.mrb[0].mxu0 %v2398
  %v2672 = vpop.f32.mrb[0].mxu0
  %v2673 = vadd.f32 %v2528, %v2672
  %v2674 = vpop.f32.mrb[0].mxu0
  %2675 = vmatprep.mubr.f32.mxu0 0.0
  %2676 = vmatmul.mubr.f32.gmra.mrb[0].mxu0 %v2401
  %v2677 = vpop.f32.mrb[0].mxu0
  %v2678 = vadd.f32 %v2533, %v2677
  %v2679 = vpop.f32.mrb[0].mxu0
  %2680 = vmatprep.mubr.f32.mxu0 0.0
  %2681 = vmatmul.mubr.f32.gmra.mrb[0].mxu0 %v2404
  %v2682 = vpop.f32.mrb[0].mxu0
  %v2683 = vadd.f32 %v2538, %v2682
  %v2684 = vpop.f32.mrb[0].mxu0
  %2685 = vmatprep.mubr.f32.mxu0 0.0
  %2686 = vmatmul.mubr.f32.gmra.mrb[0].mxu0 %v2407
  %v2687 = vpop.f32.mrb[0].mxu0
  %v2688 = vadd.f32 %v2543, %v2687
  %v2689 = vpop.f32.mrb[0].mxu0
  %2690 = vmatprep.mubr.f32.mxu0 0.0
  %2691 = vmatmul.mubr.f32.gmra.mrb[0].mxu0 %v2410
  %v2692 = vpop.f32.mrb[0].mxu0
  %v2693 = vadd.f32 %v2548, %v2692
  %v2694 = vpop.f32.mrb[0].mxu0
  %2695 = vmatprep.mubr.f32.mxu0 0.0
  %2696 = vmatmul.mubr.f32.gmra.mrb[0].mxu0 %v2413
  %v2697 = vpop.f32.mrb[0].mxu0
  %v2698 = vadd.f32 %v2553, %v2697
  %v2699 = vpop.f32.mrb[0].mxu0
  %2700 = vmatprep.mubr.f32.mxu0 0.0
  %2701 = vmatmul.mubr.f32.gmra.mrb[0].mxu0 %v2416
  %v2702 = vpop.f32.mrb[0].mxu0
  %v2703 = vadd.f32 %v2558, %v2702
  %v2704 = vpop.f32.mrb[0].mxu0
  %2705 = vmatprep.mubr.f32.mxu0 0.0
  %2706 = vmatmul.mubr.f32.gmra.mrb[0].mxu0 %v2419
  %v2707 = vpop.f32.mrb[0].mxu0
  %v2708 = vadd.f32 %v2563, %v2707
  %v2709 = vpop.f32.mrb[0].mxu0
  %2710 = vdwg.mxu0
  %v2711 = vmax.f32 %v2633, 0.0
  %v2712 = vmax.f32 %v2638, 0.0
  %v2713 = vmax.f32 %v2643, 0.0
  %v2714 = vmax.f32 %v2648, 0.0
  %v2715 = vmax.f32 %v2653, 0.0
  %v2716 = vmax.f32 %v2658, 0.0
  %v2717 = vmax.f32 %v2663, 0.0
  %v2718 = vmax.f32 %v2668, 0.0
  %v2719 = vmax.f32 %v2673, 0.0
  %v2720 = vmax.f32 %v2678, 0.0
  %v2721 = vmax.f32 %v2683, 0.0
  %v2722 = vmax.f32 %v2688, 0.0
  %v2723 = vmax.f32 %v2693, 0.0
  %v2724 = vmax.f32 %v2698, 0.0
  %v2725 = vmax.f32 %v2703, 0.0
  %v2726 = vmax.f32 %v2708, 0.0
  %2727 = vst.msk [vmem:[#allocation2] sm:$0xff] %vm324, %v2711
  %2728 = vst.msk [vmem:[#allocation2 + $0x8] sm:$0xff] %vm324, %v2712
  %2729 = vst.msk [vmem:[#allocation2 + $0x10] sm:$0xff] %vm324, %v2713
  %2730 = vst.msk [vmem:[#allocation2 + $0x18] sm:$0xff] %vm324, %v2714
  %2731 = vst.msk [vmem:[#allocation2 + $0x20] sm:$0xff] %vm324, %v2715
  %2732 = vst.msk [vmem:[#allocation2 + $0x28] sm:$0xff] %vm324, %v2716
  %2733 = vst.msk [vmem:[#allocation2 + $0x30] sm:$0xff] %vm324, %v2717
  %2734 = vst.msk [vmem:[#allocation2 + $0x38] sm:$0xff] %vm324, %v2718
  %2735 = vst.msk [vmem:[#allocation2 + $0x40] sm:$0xff] %vm324, %v2719
  %2736 = vst.msk [vmem:[#allocation2 + $0x48] sm:$0xff] %vm324, %v2720
  %2737 = vst.msk [vmem:[#allocation2 + $0x50] sm:$0xff] %vm324, %v2721
  %2738 = vst.msk [vmem:[#allocation2 + $0x58] sm:$0xff] %vm324, %v2722
  %2739 = vst.msk [vmem:[#allocation2 + $0x60] sm:$0xff] %vm324, %v2723
  %2740 = vst.msk [vmem:[#allocation2 + $0x68] sm:$0xff] %vm324, %v2724
  %2741 = vst.msk [vmem:[#allocation2 + $0x70] sm:$0xff] %vm324, %v2725
  %2742 = vst.msk [vmem:[#allocation2 + $0x78] sm:$0x3] %vm345, %v2726
  %v2743 = vld [vmem:[#allocation2] sm:$0xff]
  %v2744 = vld [vmem:[#allocation2 + $0x8] sm:$0xff]
  %v2745 = vld [vmem:[#allocation2 + $0x10] sm:$0xff]
  %v2746 = vld [vmem:[#allocation2 + $0x18] sm:$0xff]
  %v2747 = vld [vmem:[#allocation2 + $0x20] sm:$0xff]
  %v2748 = vld [vmem:[#allocation2 + $0x28] sm:$0xff]
  %v2749 = vld [vmem:[#allocation2 + $0x30] sm:$0xff]
  %v2750 = vld [vmem:[#allocation2 + $0x38] sm:$0xff]
  %v2751 = vld [vmem:[#allocation2 + $0x40] sm:$0xff]
  %v2752 = vld [vmem:[#allocation2 + $0x48] sm:$0xff]
  %v2753 = vld [vmem:[#allocation2 + $0x50] sm:$0xff]
  %v2754 = vld [vmem:[#allocation2 + $0x58] sm:$0xff]
  %v2755 = vld [vmem:[#allocation2 + $0x60] sm:$0x3f]
  %2756 = vst.msk [vmem:[#allocation3] sm:$0xff] %vm324, %v2743
  %2757 = vst.msk [vmem:[#allocation3 + $0x18] sm:$0xff] %vm324, %v2744
  %2758 = vst.msk [vmem:[#allocation3 + $0x30] sm:$0xff] %vm324, %v2745
  %2759 = vst.msk [vmem:[#allocation3 + $0x48] sm:$0xff] %vm324, %v2746
  %2760 = vst.msk [vmem:[#allocation3 + $0x60] sm:$0xff] %vm324, %v2747
  %2761 = vst.msk [vmem:[#allocation3 + $0x78] sm:$0xff] %vm324, %v2748
  %2762 = vst.msk [vmem:[#allocation3 + $0x90] sm:$0xff] %vm324, %v2749
  %2763 = vst.msk [vmem:[#allocation3 + $0xa8] sm:$0xff] %vm324, %v2750
  %2764 = vst.msk [vmem:[#allocation3 + $0xc0] sm:$0xff] %vm324, %v2751
  %2765 = vst.msk [vmem:[#allocation3 + $0xd8] sm:$0xff] %vm324, %v2752
  %2766 = vst.msk [vmem:[#allocation3 + $0xf0] sm:$0xff] %vm324, %v2753
  %2767 = vst.msk [vmem:[#allocation3 + $0x108] sm:$0xff] %vm324, %v2754
  %2768 = vst.msk [vmem:[#allocation3 + $0x120] sm:$0x3f] %vm382, %v2755
  %v2769 = vld [vmem:[#allocation2 + $0x1] sm:$0xff]
  %v2770 = vld [vmem:[#allocation2 + $0x9] sm:$0xff]
  %v2771 = vld [vmem:[#allocation2 + $0x11] sm:$0xff]
  %v2772 = vld [vmem:[#allocation2 + $0x19] sm:$0xff]
  %v2773 = vld [vmem:[#allocation2 + $0x21] sm:$0xff]
  %v2774 = vld [vmem:[#allocation2 + $0x29] sm:$0xff]
  %v2775 = vld [vmem:[#allocation2 + $0x31] sm:$0xff]
  %v2776 = vld [vmem:[#allocation2 + $0x39] sm:$0xff]
  %v2777 = vld [vmem:[#allocation2 + $0x41] sm:$0xff]
  %v2778 = vld [vmem:[#allocation2 + $0x49] sm:$0xff]
  %v2779 = vld [vmem:[#allocation2 + $0x51] sm:$0xff]
  %v2780 = vld [vmem:[#allocation2 + $0x59] sm:$0xff]
  %v2781 = vld [vmem:[#allocation2 + $0x61] sm:$0x3f]
  %2795 = vrot.lane.b32.xlu0 %v2769, 32
  %v2796 = vpop.permute.xlu0 %2795
  %2797 = vrot.lane.b32.xlu0 %v2770, 32
  %v2798 = vpop.permute.xlu0 %2797
  %2799 = vrot.lane.b32.xlu0 %v2771, 32
  %v2800 = vpop.permute.xlu0 %2799
  %2801 = vrot.lane.b32.xlu0 %v2772, 32
  %v2802 = vpop.permute.xlu0 %2801
  %2803 = vrot.lane.b32.xlu0 %v2773, 32
  %v2804 = vpop.permute.xlu0 %2803
  %2805 = vrot.lane.b32.xlu0 %v2774, 32
  %v2806 = vpop.permute.xlu0 %2805
  %2807 = vrot.lane.b32.xlu0 %v2775, 32
  %v2808 = vpop.permute.xlu0 %2807
  %2809 = vrot.lane.b32.xlu0 %v2776, 32
  %v2810 = vpop.permute.xlu0 %2809
  %2811 = vrot.lane.b32.xlu0 %v2777, 32
  %v2812 = vpop.permute.xlu0 %2811
  %2813 = vrot.lane.b32.xlu0 %v2778, 32
  %v2814 = vpop.permute.xlu0 %2813
  %2815 = vrot.lane.b32.xlu0 %v2779, 32
  %v2816 = vpop.permute.xlu0 %2815
  %2817 = vrot.lane.b32.xlu0 %v2780, 32
  %v2818 = vpop.permute.xlu0 %2817
  %2819 = vrot.lane.b32.xlu0 %v2781, 32
  %v2820 = vpop.permute.xlu0 %2819
  %2834 = vst.msk [vmem:[#allocation3] sm:$0xff] %vm474, %v2796
  %2835 = vst.msk [vmem:[#allocation3 + $0x18] sm:$0xff] %vm474, %v2798
  %2836 = vst.msk [vmem:[#allocation3 + $0x30] sm:$0xff] %vm474, %v2800
  %2837 = vst.msk [vmem:[#allocation3 + $0x48] sm:$0xff] %vm474, %v2802
  %2838 = vst.msk [vmem:[#allocation3 + $0x60] sm:$0xff] %vm474, %v2804
  %2839 = vst.msk [vmem:[#allocation3 + $0x78] sm:$0xff] %vm474, %v2806
  %2840 = vst.msk [vmem:[#allocation3 + $0x90] sm:$0xff] %vm474, %v2808
  %2841 = vst.msk [vmem:[#allocation3 + $0xa8] sm:$0xff] %vm474, %v2810
  %2842 = vst.msk [vmem:[#allocation3 + $0xc0] sm:$0xff] %vm474, %v2812
  %2843 = vst.msk [vmem:[#allocation3 + $0xd8] sm:$0xff] %vm474, %v2814
  %2844 = vst.msk [vmem:[#allocation3 + $0xf0] sm:$0xff] %vm474, %v2816
  %2845 = vst.msk [vmem:[#allocation3 + $0x108] sm:$0xff] %vm474, %v2818
  %2846 = vst.msk [vmem:[#allocation3 + $0x120] sm:$0x3f] %vm492, %v2820
  %v2847 = vld [vmem:[#allocation2 + $0x2] sm:$0xff]
  %v2848 = vld [vmem:[#allocation2 + $0xa] sm:$0xff]
  %v2849 = vld [vmem:[#allocation2 + $0x12] sm:$0xff]
  %v2850 = vld [vmem:[#allocation2 + $0x1a] sm:$0xff]
  %v2851 = vld [vmem:[#allocation2 + $0x22] sm:$0xff]
  %v2852 = vld [vmem:[#allocation2 + $0x2a] sm:$0xff]
  %v2853 = vld [vmem:[#allocation2 + $0x32] sm:$0xff]
  %v2854 = vld [vmem:[#allocation2 + $0x3a] sm:$0xff]
  %v2855 = vld [vmem:[#allocation2 + $0x42] sm:$0xff]
  %v2856 = vld [vmem:[#allocation2 + $0x4a] sm:$0xff]
  %v2857 = vld [vmem:[#allocation2 + $0x52] sm:$0xff]
  %v2858 = vld [vmem:[#allocation2 + $0x5a] sm:$0xff]
  %v2859 = vld [vmem:[#allocation2 + $0x62] sm:$0x3f]
  %2873 = vrot.lane.b32.xlu0 %v2847, 64
  %v2874 = vpop.permute.xlu0 %2873
  %2875 = vrot.lane.b32.xlu0 %v2848, 64
  %v2876 = vpop.permute.xlu0 %2875
  %2877 = vrot.lane.b32.xlu0 %v2849, 64
  %v2878 = vpop.permute.xlu0 %2877
  %2879 = vrot.lane.b32.xlu0 %v2850, 64
  %v2880 = vpop.permute.xlu0 %2879
  %2881 = vrot.lane.b32.xlu0 %v2851, 64
  %v2882 = vpop.permute.xlu0 %2881
  %2883 = vrot.lane.b32.xlu0 %v2852, 64
  %v2884 = vpop.permute.xlu0 %2883
  %2885 = vrot.lane.b32.xlu0 %v2853, 64
  %v2886 = vpop.permute.xlu0 %2885
  %2887 = vrot.lane.b32.xlu0 %v2854, 64
  %v2888 = vpop.permute.xlu0 %2887
  %2889 = vrot.lane.b32.xlu0 %v2855, 64
  %v2890 = vpop.permute.xlu0 %2889
  %2891 = vrot.lane.b32.xlu0 %v2856, 64
  %v2892 = vpop.permute.xlu0 %2891
  %2893 = vrot.lane.b32.xlu0 %v2857, 64
  %v2894 = vpop.permute.xlu0 %2893
  %2895 = vrot.lane.b32.xlu0 %v2858, 64
  %v2896 = vpop.permute.xlu0 %2895
  %2897 = vrot.lane.b32.xlu0 %v2859, 64
  %v2898 = vpop.permute.xlu0 %2897
  %2912 = vst.msk [vmem:[#allocation3] sm:$0xff] %vm584, %v2874
  %2913 = vst.msk [vmem:[#allocation3 + $0x18] sm:$0xff] %vm584, %v2876
  %2914 = vst.msk [vmem:[#allocation3 + $0x30] sm:$0xff] %vm584, %v2878
  %2915 = vst.msk [vmem:[#allocation3 + $0x48] sm:$0xff] %vm584, %v2880
  %2916 = vst.msk [vmem:[#allocation3 + $0x60] sm:$0xff] %vm584, %v2882
  %2917 = vst.msk [vmem:[#allocation3 + $0x78] sm:$0xff] %vm584, %v2884
  %2918 = vst.msk [vmem:[#allocation3 + $0x90] sm:$0xff] %vm584, %v2886
  %2919 = vst.msk [vmem:[#allocation3 + $0xa8] sm:$0xff] %vm584, %v2888
  %2920 = vst.msk [vmem:[#allocation3 + $0xc0] sm:$0xff] %vm584, %v2890
  %2921 = vst.msk [vmem:[#allocation3 + $0xd8] sm:$0xff] %vm584, %v2892
  %2922 = vst.msk [vmem:[#allocation3 + $0xf0] sm:$0xff] %vm584, %v2894
  %2923 = vst.msk [vmem:[#allocation3 + $0x108] sm:$0xff] %vm584, %v2896
  %2924 = vst.msk [vmem:[#allocation3 + $0x120] sm:$0x3f] %vm602, %v2898
  %v2925 = vld [vmem:[#allocation2 + $0x9] sm:$0xff]
  %v2926 = vld [vmem:[#allocation2 + $0x11] sm:$0xff]
  %v2927 = vld [vmem:[#allocation2 + $0x19] sm:$0xff]
  %v2928 = vld [vmem:[#allocation2 + $0x21] sm:$0xff]
  %v2929 = vld [vmem:[#allocation2 + $0x29] sm:$0xff]
  %v2930 = vld [vmem:[#allocation2 + $0x31] sm:$0xff]
  %v2931 = vld [vmem:[#allocation2 + $0x39] sm:$0xff]
  %v2932 = vld [vmem:[#allocation2 + $0x41] sm:$0xff]
  %v2933 = vld [vmem:[#allocation2 + $0x49] sm:$0xff]
  %v2934 = vld [vmem:[#allocation2 + $0x51] sm:$0xff]
  %v2935 = vld [vmem:[#allocation2 + $0x59] sm:$0xff]
  %v2936 = vld [vmem:[#allocation2 + $0x61] sm:$0xff]
  %v2937 = vld [vmem:[#allocation2 + $0x69] sm:$0x3f]
  %2951 = vrot.lane.b32.xlu0 %v2925, 96
  %v2952 = vpop.permute.xlu0 %2951
  %2953 = vrot.lane.b32.xlu0 %v2926, 96
  %v2954 = vpop.permute.xlu0 %2953
  %2955 = vrot.lane.b32.xlu0 %v2927, 96
  %v2956 = vpop.permute.xlu0 %2955
  %2957 = vrot.lane.b32.xlu0 %v2928, 96
  %v2958 = vpop.permute.xlu0 %2957
  %2959 = vrot.lane.b32.xlu0 %v2929, 96
  %v2960 = vpop.permute.xlu0 %2959
  %2961 = vrot.lane.b32.xlu0 %v2930, 96
  %v2962 = vpop.permute.xlu0 %2961
  %2963 = vrot.lane.b32.xlu0 %v2931, 96
  %v2964 = vpop.permute.xlu0 %2963
  %2965 = vrot.lane.b32.xlu0 %v2932, 96
  %v2966 = vpop.permute.xlu0 %2965
  %2967 = vrot.lane.b32.xlu0 %v2933, 96
  %v2968 = vpop.permute.xlu0 %2967
  %2969 = vrot.lane.b32.xlu0 %v2934, 96
  %v2970 = vpop.permute.xlu0 %2969
  %2971 = vrot.lane.b32.xlu0 %v2935, 96
  %v2972 = vpop.permute.xlu0 %2971
  %2973 = vrot.lane.b32.xlu0 %v2936, 96
  %v2974 = vpop.permute.xlu0 %2973
  %2975 = vrot.lane.b32.xlu0 %v2937, 96
  %v2976 = vpop.permute.xlu0 %2975
  %2990 = vst.msk [vmem:[#allocation3] sm:$0xff] %vm694, %v2952
  %2991 = vst.msk [vmem:[#allocation3 + $0x18] sm:$0xff] %vm694, %v2954
  %2992 = vst.msk [vmem:[#allocation3 + $0x30] sm:$0xff] %vm694, %v2956
  %2993 = vst.msk [vmem:[#allocation3 + $0x48] sm:$0xff] %vm694, %v2958
  %2994 = vst.msk [vmem:[#allocation3 + $0x60] sm:$0xff] %vm694, %v2960
  %2995 = vst.msk [vmem:[#allocation3 + $0x78] sm:$0xff] %vm694, %v2962
  %2996 = vst.msk [vmem:[#allocation3 + $0x90] sm:$0xff] %vm694, %v2964
  %2997 = vst.msk [vmem:[#allocation3 + $0xa8] sm:$0xff] %vm694, %v2966
  %2998 = vst.msk [vmem:[#allocation3 + $0xc0] sm:$0xff] %vm694, %v2968
  %2999 = vst.msk [vmem:[#allocation3 + $0xd8] sm:$0xff] %vm694, %v2970
  %3000 = vst.msk [vmem:[#allocation3 + $0xf0] sm:$0xff] %vm694, %v2972
  %3001 = vst.msk [vmem:[#allocation3 + $0x108] sm:$0xff] %vm694, %v2974
  %3002 = vst.msk [vmem:[#allocation3 + $0x120] sm:$0x3f] %vm712, %v2976
  %v3003 = vld [vmem:[#allocation2 + $0xa] sm:$0xff]
  %v3004 = vld [vmem:[#allocation2 + $0x12] sm:$0xff]
  %v3005 = vld [vmem:[#allocation2 + $0x1a] sm:$0xff]
  %v3006 = vld [vmem:[#allocation2 + $0x22] sm:$0xff]
  %v3007 = vld [vmem:[#allocation2 + $0x2a] sm:$0xff]
  %v3008 = vld [vmem:[#allocation2 + $0x32] sm:$0xff]
  %v3009 = vld [vmem:[#allocation2 + $0x3a] sm:$0xff]
  %v3010 = vld [vmem:[#allocation2 + $0x42] sm:$0xff]
  %v3011 = vld [vmem:[#allocation2 + $0x4a] sm:$0xff]
  %v3012 = vld [vmem:[#allocation2 + $0x52] sm:$0xff]
  %v3013 = vld [vmem:[#allocation2 + $0x5a] sm:$0xff]
  %v3014 = vld [vmem:[#allocation2 + $0x62] sm:$0xff]
  %v3015 = vld [vmem:[#allocation2 + $0x6a] sm:$0x3f]
  %3016 = vst.msk [vmem:[#allocation3 + $0x8] sm:$0xff] %vm324, %v3003
  %3017 = vst.msk [vmem:[#allocation3 + $0x20] sm:$0xff] %vm324, %v3004
  %3018 = vst.msk [vmem:[#allocation3 + $0x38] sm:$0xff] %vm324, %v3005
  %3019 = vst.msk [vmem:[#allocation3 + $0x50] sm:$0xff] %vm324, %v3006
  %3020 = vst.msk [vmem:[#allocation3 + $0x68] sm:$0xff] %vm324, %v3007
  %3021 = vst.msk [vmem:[#allocation3 + $0x80] sm:$0xff] %vm324, %v3008
  %3022 = vst.msk [vmem:[#allocation3 + $0x98] sm:$0xff] %vm324, %v3009
  %3023 = vst.msk [vmem:[#allocation3 + $0xb0] sm:$0xff] %vm324, %v3010
  %3024 = vst.msk [vmem:[#allocation3 + $0xc8] sm:$0xff] %vm324, %v3011
  %3025 = vst.msk [vmem:[#allocation3 + $0xe0] sm:$0xff] %vm324, %v3012
  %3026 = vst.msk [vmem:[#allocation3 + $0xf8] sm:$0xff] %vm324, %v3013
  %3027 = vst.msk [vmem:[#allocation3 + $0x110] sm:$0xff] %vm324, %v3014
  %3028 = vst.msk [vmem:[#allocation3 + $0x128] sm:$0x3f] %vm382, %v3015
  %v3029 = vld [vmem:[#allocation2 + $0xb] sm:$0xff]
  %v3030 = vld [vmem:[#allocation2 + $0x13] sm:$0xff]
  %v3031 = vld [vmem:[#allocation2 + $0x1b] sm:$0xff]
  %v3032 = vld [vmem:[#allocation2 + $0x23] sm:$0xff]
  %v3033 = vld [vmem:[#allocation2 + $0x2b] sm:$0xff]
  %v3034 = vld [vmem:[#allocation2 + $0x33] sm:$0xff]
  %v3035 = vld [vmem:[#allocation2 + $0x3b] sm:$0xff]
  %v3036 = vld [vmem:[#allocation2 + $0x43] sm:$0xff]
  %v3037 = vld [vmem:[#allocation2 + $0x4b] sm:$0xff]
  %v3038 = vld [vmem:[#allocation2 + $0x53] sm:$0xff]
  %v3039 = vld [vmem:[#allocation2 + $0x5b] sm:$0xff]
  %v3040 = vld [vmem:[#allocation2 + $0x63] sm:$0xff]
  %v3041 = vld [vmem:[#allocation2 + $0x6b] sm:$0x3f]
  %3055 = vrot.lane.b32.xlu0 %v3029, 32
  %v3056 = vpop.permute.xlu0 %3055
  %3057 = vrot.lane.b32.xlu0 %v3030, 32
  %v3058 = vpop.permute.xlu0 %3057
  %3059 = vrot.lane.b32.xlu0 %v3031, 32
  %v3060 = vpop.permute.xlu0 %3059
  %3061 = vrot.lane.b32.xlu0 %v3032, 32
  %v3062 = vpop.permute.xlu0 %3061
  %3063 = vrot.lane.b32.xlu0 %v3033, 32
  %v3064 = vpop.permute.xlu0 %3063
  %3065 = vrot.lane.b32.xlu0 %v3034, 32
  %v3066 = vpop.permute.xlu0 %3065
  %3067 = vrot.lane.b32.xlu0 %v3035, 32
  %v3068 = vpop.permute.xlu0 %3067
  %3069 = vrot.lane.b32.xlu0 %v3036, 32
  %v3070 = vpop.permute.xlu0 %3069
  %3071 = vrot.lane.b32.xlu0 %v3037, 32
  %v3072 = vpop.permute.xlu0 %3071
  %3073 = vrot.lane.b32.xlu0 %v3038, 32
  %v3074 = vpop.permute.xlu0 %3073
  %3075 = vrot.lane.b32.xlu0 %v3039, 32
  %v3076 = vpop.permute.xlu0 %3075
  %3077 = vrot.lane.b32.xlu0 %v3040, 32
  %v3078 = vpop.permute.xlu0 %3077
  %3079 = vrot.lane.b32.xlu0 %v3041, 32
  %v3080 = vpop.permute.xlu0 %3079
  %3094 = vst.msk [vmem:[#allocation3 + $0x8] sm:$0xff] %vm474, %v3056
  %3095 = vst.msk [vmem:[#allocation3 + $0x20] sm:$0xff] %vm474, %v3058
  %3096 = vst.msk [vmem:[#allocation3 + $0x38] sm:$0xff] %vm474, %v3060
  %3097 = vst.msk [vmem:[#allocation3 + $0x50] sm:$0xff] %vm474, %v3062
  %3098 = vst.msk [vmem:[#allocation3 + $0x68] sm:$0xff] %vm474, %v3064
  %3099 = vst.msk [vmem:[#allocation3 + $0x80] sm:$0xff] %vm474, %v3066
  %3100 = vst.msk [vmem:[#allocation3 + $0x98] sm:$0xff] %vm474, %v3068
  %3101 = vst.msk [vmem:[#allocation3 + $0xb0] sm:$0xff] %vm474, %v3070
  %3102 = vst.msk [vmem:[#allocation3 + $0xc8] sm:$0xff] %vm474, %v3072
  %3103 = vst.msk [vmem:[#allocation3 + $0xe0] sm:$0xff] %vm474, %v3074
  %3104 = vst.msk [vmem:[#allocation3 + $0xf8] sm:$0xff] %vm474, %v3076
  %3105 = vst.msk [vmem:[#allocation3 + $0x110] sm:$0xff] %vm474, %v3078
  %3106 = vst.msk [vmem:[#allocation3 + $0x128] sm:$0x3f] %vm492, %v3080
  %v3107 = vld [vmem:[#allocation2 + $0x12] sm:$0xff]
  %v3108 = vld [vmem:[#allocation2 + $0x1a] sm:$0xff]
  %v3109 = vld [vmem:[#allocation2 + $0x22] sm:$0xff]
  %v3110 = vld [vmem:[#allocation2 + $0x2a] sm:$0xff]
  %v3111 = vld [vmem:[#allocation2 + $0x32] sm:$0xff]
  %v3112 = vld [vmem:[#allocation2 + $0x3a] sm:$0xff]
  %v3113 = vld [vmem:[#allocation2 + $0x42] sm:$0xff]
  %v3114 = vld [vmem:[#allocation2 + $0x4a] sm:$0xff]
  %v3115 = vld [vmem:[#allocation2 + $0x52] sm:$0xff]
  %v3116 = vld [vmem:[#allocation2 + $0x5a] sm:$0xff]
  %v3117 = vld [vmem:[#allocation2 + $0x62] sm:$0xff]
  %v3118 = vld [vmem:[#allocation2 + $0x6a] sm:$0xff]
  %v3119 = vld [vmem:[#allocation2 + $0x72] sm:$0x3f]
  %3133 = vrot.lane.b32.xlu0 %v3107, 64
  %v3134 = vpop.permute.xlu0 %3133
  %3135 = vrot.lane.b32.xlu0 %v3108, 64
  %v3136 = vpop.permute.xlu0 %3135
  %3137 = vrot.lane.b32.xlu0 %v3109, 64
  %v3138 = vpop.permute.xlu0 %3137
  %3139 = vrot.lane.b32.xlu0 %v3110, 64
  %v3140 = vpop.permute.xlu0 %3139
  %3141 = vrot.lane.b32.xlu0 %v3111, 64
  %v3142 = vpop.permute.xlu0 %3141
  %3143 = vrot.lane.b32.xlu0 %v3112, 64
  %v3144 = vpop.permute.xlu0 %3143
  %3145 = vrot.lane.b32.xlu0 %v3113, 64
  %v3146 = vpop.permute.xlu0 %3145
  %3147 = vrot.lane.b32.xlu0 %v3114, 64
  %v3148 = vpop.permute.xlu0 %3147
  %3149 = vrot.lane.b32.xlu0 %v3115, 64
  %v3150 = vpop.permute.xlu0 %3149
  %3151 = vrot.lane.b32.xlu0 %v3116, 64
  %v3152 = vpop.permute.xlu0 %3151
  %3153 = vrot.lane.b32.xlu0 %v3117, 64
  %v3154 = vpop.permute.xlu0 %3153
  %3155 = vrot.lane.b32.xlu0 %v3118, 64
  %v3156 = vpop.permute.xlu0 %3155
  %3157 = vrot.lane.b32.xlu0 %v3119, 64
  %v3158 = vpop.permute.xlu0 %3157
  %3172 = vst.msk [vmem:[#allocation3 + $0x8] sm:$0xff] %vm584, %v3134
  %3173 = vst.msk [vmem:[#allocation3 + $0x20] sm:$0xff] %vm584, %v3136
  %3174 = vst.msk [vmem:[#allocation3 + $0x38] sm:$0xff] %vm584, %v3138
  %3175 = vst.msk [vmem:[#allocation3 + $0x50] sm:$0xff] %vm584, %v3140
  %3176 = vst.msk [vmem:[#allocation3 + $0x68] sm:$0xff] %vm584, %v3142
  %3177 = vst.msk [vmem:[#allocation3 + $0x80] sm:$0xff] %vm584, %v3144
  %3178 = vst.msk [vmem:[#allocation3 + $0x98] sm:$0xff] %vm584, %v3146
  %3179 = vst.msk [vmem:[#allocation3 + $0xb0] sm:$0xff] %vm584, %v3148
  %3180 = vst.msk [vmem:[#allocation3 + $0xc8] sm:$0xff] %vm584, %v3150
  %3181 = vst.msk [vmem:[#allocation3 + $0xe0] sm:$0xff] %vm584, %v3152
  %3182 = vst.msk [vmem:[#allocation3 + $0xf8] sm:$0xff] %vm584, %v3154
  %3183 = vst.msk [vmem:[#allocation3 + $0x110] sm:$0xff] %vm584, %v3156
  %3184 = vst.msk [vmem:[#allocation3 + $0x128] sm:$0x3f] %vm602, %v3158
  %v3185 = vld [vmem:[#allocation2 + $0x13] sm:$0xff]
  %v3186 = vld [vmem:[#allocation2 + $0x1b] sm:$0xff]
  %v3187 = vld [vmem:[#allocation2 + $0x23] sm:$0xff]
  %v3188 = vld [vmem:[#allocation2 + $0x2b] sm:$0xff]
  %v3189 = vld [vmem:[#allocation2 + $0x33] sm:$0xff]
  %v3190 = vld [vmem:[#allocation2 + $0x3b] sm:$0xff]
  %v3191 = vld [vmem:[#allocation2 + $0x43] sm:$0xff]
  %v3192 = vld [vmem:[#allocation2 + $0x4b] sm:$0xff]
  %v3193 = vld [vmem:[#allocation2 + $0x53] sm:$0xff]
  %v3194 = vld [vmem:[#allocation2 + $0x5b] sm:$0xff]
  %v3195 = vld [vmem:[#allocation2 + $0x63] sm:$0xff]
  %v3196 = vld [vmem:[#allocation2 + $0x6b] sm:$0xff]
  %v3197 = vld [vmem:[#allocation2 + $0x73] sm:$0x3f]
  %3211 = vrot.lane.b32.xlu0 %v3185, 96
  %v3212 = vpop.permute.xlu0 %3211
  %3213 = vrot.lane.b32.xlu0 %v3186, 96
  %v3214 = vpop.permute.xlu0 %3213
  %3215 = vrot.lane.b32.xlu0 %v3187, 96
  %v3216 = vpop.permute.xlu0 %3215
  %3217 = vrot.lane.b32.xlu0 %v3188, 96
  %v3218 = vpop.permute.xlu0 %3217
  %3219 = vrot.lane.b32.xlu0 %v3189, 96
  %v3220 = vpop.permute.xlu0 %3219
  %3221 = vrot.lane.b32.xlu0 %v3190, 96
  %v3222 = vpop.permute.xlu0 %3221
  %3223 = vrot.lane.b32.xlu0 %v3191, 96
  %v3224 = vpop.permute.xlu0 %3223
  %3225 = vrot.lane.b32.xlu0 %v3192, 96
  %v3226 = vpop.permute.xlu0 %3225
  %3227 = vrot.lane.b32.xlu0 %v3193, 96
  %v3228 = vpop.permute.xlu0 %3227
  %3229 = vrot.lane.b32.xlu0 %v3194, 96
  %v3230 = vpop.permute.xlu0 %3229
  %3231 = vrot.lane.b32.xlu0 %v3195, 96
  %v3232 = vpop.permute.xlu0 %3231
  %3233 = vrot.lane.b32.xlu0 %v3196, 96
  %v3234 = vpop.permute.xlu0 %3233
  %3235 = vrot.lane.b32.xlu0 %v3197, 96
  %v3236 = vpop.permute.xlu0 %3235
  %3250 = vst.msk [vmem:[#allocation3 + $0x8] sm:$0xff] %vm694, %v3212
  %3251 = vst.msk [vmem:[#allocation3 + $0x20] sm:$0xff] %vm694, %v3214
  %3252 = vst.msk [vmem:[#allocation3 + $0x38] sm:$0xff] %vm694, %v3216
  %3253 = vst.msk [vmem:[#allocation3 + $0x50] sm:$0xff] %vm694, %v3218
  %3254 = vst.msk [vmem:[#allocation3 + $0x68] sm:$0xff] %vm694, %v3220
  %3255 = vst.msk [vmem:[#allocation3 + $0x80] sm:$0xff] %vm694, %v3222
  %3256 = vst.msk [vmem:[#allocation3 + $0x98] sm:$0xff] %vm694, %v3224
  %3257 = vst.msk [vmem:[#allocation3 + $0xb0] sm:$0xff] %vm694, %v3226
  %3258 = vst.msk [vmem:[#allocation3 + $0xc8] sm:$0xff] %vm694, %v3228
  %3259 = vst.msk [vmem:[#allocation3 + $0xe0] sm:$0xff] %vm694, %v3230
  %3260 = vst.msk [vmem:[#allocation3 + $0xf8] sm:$0xff] %vm694, %v3232
  %3261 = vst.msk [vmem:[#allocation3 + $0x110] sm:$0xff] %vm694, %v3234
  %3262 = vst.msk [vmem:[#allocation3 + $0x128] sm:$0x3f] %vm712, %v3236
  %v3263 = vld [vmem:[#allocation2 + $0x14] sm:$0xff]
  %v3264 = vld [vmem:[#allocation2 + $0x1c] sm:$0xff]
  %v3265 = vld [vmem:[#allocation2 + $0x24] sm:$0xff]
  %v3266 = vld [vmem:[#allocation2 + $0x2c] sm:$0xff]
  %v3267 = vld [vmem:[#allocation2 + $0x34] sm:$0xff]
  %v3268 = vld [vmem:[#allocation2 + $0x3c] sm:$0xff]
  %v3269 = vld [vmem:[#allocation2 + $0x44] sm:$0xff]
  %v3270 = vld [vmem:[#allocation2 + $0x4c] sm:$0xff]
  %v3271 = vld [vmem:[#allocation2 + $0x54] sm:$0xff]
  %v3272 = vld [vmem:[#allocation2 + $0x5c] sm:$0xff]
  %v3273 = vld [vmem:[#allocation2 + $0x64] sm:$0xff]
  %v3274 = vld [vmem:[#allocation2 + $0x6c] sm:$0xff]
  %v3275 = vld [vmem:[#allocation2 + $0x74] sm:$0x3f]
  %3276 = vst.msk [vmem:[#allocation3 + $0x10] sm:$0xff] %vm324, %v3263
  %3277 = vst.msk [vmem:[#allocation3 + $0x28] sm:$0xff] %vm324, %v3264
  %3278 = vst.msk [vmem:[#allocation3 + $0x40] sm:$0xff] %vm324, %v3265
  %3279 = vst.msk [vmem:[#allocation3 + $0x58] sm:$0xff] %vm324, %v3266
  %3280 = vst.msk [vmem:[#allocation3 + $0x70] sm:$0xff] %vm324, %v3267
  %3281 = vst.msk [vmem:[#allocation3 + $0x88] sm:$0xff] %vm324, %v3268
  %3282 = vst.msk [vmem:[#allocation3 + $0xa0] sm:$0xff] %vm324, %v3269
  %3283 = vst.msk [vmem:[#allocation3 + $0xb8] sm:$0xff] %vm324, %v3270
  %3284 = vst.msk [vmem:[#allocation3 + $0xd0] sm:$0xff] %vm324, %v3271
  %3285 = vst.msk [vmem:[#allocation3 + $0xe8] sm:$0xff] %vm324, %v3272
  %3286 = vst.msk [vmem:[#allocation3 + $0x100] sm:$0xff] %vm324, %v3273
  %3287 = vst.msk [vmem:[#allocation3 + $0x118] sm:$0xff] %vm324, %v3274
  %3288 = vst.msk [vmem:[#allocation3 + $0x130] sm:$0x3f] %vm382, %v3275
  %v3289 = vld [vmem:[#allocation3] sm:$0xff]
  %v3290 = vld [vmem:[#allocation3 + $0x8] sm:$0xff]
  %v3291 = vld [vmem:[#allocation3 + $0x10] sm:$0xff]
  %v3292 = vld [vmem:[#allocation3 + $0x18] sm:$0xff]
  %v3293 = vld [vmem:[#allocation3 + $0x20] sm:$0xff]
  %v3294 = vld [vmem:[#allocation3 + $0x28] sm:$0xff]
  %v3295 = vld [vmem:[#allocation3 + $0x30] sm:$0xff]
  %v3296 = vld [vmem:[#allocation3 + $0x38] sm:$0xff]
  %v3297 = vld [vmem:[#allocation3 + $0x40] sm:$0xff]
  %v3298 = vld [vmem:[#allocation3 + $0x48] sm:$0xff]
  %v3299 = vld [vmem:[#allocation3 + $0x50] sm:$0xff]
  %v3300 = vld [vmem:[#allocation3 + $0x58] sm:$0xff]
  %v3301 = vld [vmem:[#allocation3 + $0x60] sm:$0xff]
  %v3302 = vld [vmem:[#allocation3 + $0x68] sm:$0xff]
  %v3303 = vld [vmem:[#allocation3 + $0x70] sm:$0xff]
  %v3304 = vld [vmem:[#allocation3 + $0x78] sm:$0xff]
  %v3305 = vld [vmem:[#allocation3 + $0x80] sm:$0xff]
  %v3306 = vld [vmem:[#allocation3 + $0x88] sm:$0xff]
  %v3307 = vld [vmem:[#allocation3 + $0x90] sm:$0xff]
  %v3308 = vld [vmem:[#allocation3 + $0x98] sm:$0xff]
  %v3309 = vld [vmem:[#allocation3 + $0xa0] sm:$0xff]
  %v3310 = vld [vmem:[#allocation3 + $0xa8] sm:$0xff]
  %v3311 = vld [vmem:[#allocation3 + $0xb0] sm:$0xff]
  %v3312 = vld [vmem:[#allocation3 + $0xb8] sm:$0xff]
  %v3313 = vld [vmem:[#allocation3 + $0xc0] sm:$0xff]
  %v3314 = vld [vmem:[#allocation3 + $0xc8] sm:$0xff]
  %v3315 = vld [vmem:[#allocation3 + $0xd0] sm:$0xff]
  %v3316 = vld [vmem:[#allocation3 + $0xd8] sm:$0xff]
  %v3317 = vld [vmem:[#allocation3 + $0xe0] sm:$0xff]
  %v3318 = vld [vmem:[#allocation3 + $0xe8] sm:$0xff]
  %v3319 = vld [vmem:[#allocation3 + $0xf0] sm:$0xff]
  %v3320 = vld [vmem:[#allocation3 + $0xf8] sm:$0xff]
  %v3321 = vld [vmem:[#allocation3 + $0x100] sm:$0xff]
  %v3322 = vld [vmem:[#allocation3 + $0x108] sm:$0xff]
  %v3323 = vld [vmem:[#allocation3 + $0x110] sm:$0xff]
  %v3324 = vld [vmem:[#allocation3 + $0x118] sm:$0xff]
  %v3325 = vld [vmem:[#allocation3 + $0x120] sm:$0x3f]
  %v3326 = vld [vmem:[#allocation3 + $0x128] sm:$0x3f]
  %v3327 = vld [vmem:[#allocation3 + $0x130] sm:$0x3f]
  %v3328 = vld [vmem:[%s7] sm:$0xff]
  %v3329 = vld [vmem:[%s7 + $0x8] sm:$0xff]
  %v3330 = vld [vmem:[%s7 + $0x10] sm:$0xff]
  %v3331 = vld [vmem:[%s7 + $0x18] sm:$0xff]
  %v3332 = vld [vmem:[%s7 + $0x20] sm:$0xff]
  %v3333 = vld [vmem:[%s7 + $0x28] sm:$0xff]
  %v3334 = vld [vmem:[%s7 + $0x30] sm:$0xff]
  %v3335 = vld [vmem:[%s7 + $0x38] sm:$0xff]
  %v3336 = vld [vmem:[%s7 + $0x40] sm:$0xff]
  %v3337 = vld [vmem:[%s7 + $0x48] sm:$0xff]
  %v3338 = vld [vmem:[%s7 + $0x50] sm:$0xff]
  %v3339 = vld [vmem:[%s7 + $0x58] sm:$0xff]
  %v3340 = vld [vmem:[%s7 + $0x60] sm:$0xff]
  %v3341 = vld [vmem:[%s7 + $0x68] sm:$0xff]
  %v3342 = vld [vmem:[%s7 + $0x70] sm:$0xff]
  %v3343 = vld [vmem:[%s7 + $0x78] sm:$0xff]
  %v3344 = vld [vmem:[%s7 + $0x80] sm:$0xff]
  %v3345 = vld [vmem:[%s7 + $0x88] sm:$0xff]
  %v3346 = vld [vmem:[%s7 + $0x90] sm:$0xff]
  %v3347 = vld [vmem:[%s7 + $0x98] sm:$0xff]
  %v3348 = vld [vmem:[%s7 + $0xa0] sm:$0xff]
  %v3349 = vld [vmem:[%s7 + $0xa8] sm:$0xff]
  %v3350 = vld [vmem:[%s7 + $0xb0] sm:$0xff]
  %v3351 = vld [vmem:[%s7 + $0xb8] sm:$0xff]
  %v3352 = vld [vmem:[%s7 + $0xc0] sm:$0xff]
  %v3353 = vld [vmem:[%s7 + $0xc8] sm:$0xff]
  %v3354 = vld [vmem:[%s7 + $0xd0] sm:$0xff]
  %v3355 = vld [vmem:[%s7 + $0xd8] sm:$0xff]
  %v3356 = vld [vmem:[%s7 + $0xe0] sm:$0xff]
  %v3357 = vld [vmem:[%s7 + $0xe8] sm:$0xff]
  %v3358 = vld [vmem:[%s7 + $0xf0] sm:$0xff]
  %v3359 = vld [vmem:[%s7 + $0xf8] sm:$0xff]
  %v3360 = vld [vmem:[%s7 + $0x100] sm:$0xff]
  %v3361 = vld [vmem:[%s7 + $0x108] sm:$0xff]
  %v3362 = vld [vmem:[%s7 + $0x110] sm:$0xff]
  %v3363 = vld [vmem:[%s7 + $0x118] sm:$0xff]
  %v3364 = vld [vmem:[%s8] sm:$0x1]
  %v3366 = vlaneseq
  %v3367 = vshrl.u32 %v3366, 7
  %v3368 = vsub.s32 0, %v3367
  %v3369 = vrot.slane %v3364, %v3368
  %v3372 = vsel %vm324, %v3291, 0
  %v3375 = vsel %vm324, %v3294, 0
  %v3378 = vsel %vm324, %v3297, 0
  %v3381 = vsel %vm324, %v3300, 0
  %v3384 = vsel %vm324, %v3303, 0
  %v3387 = vsel %vm324, %v3306, 0
  %v3390 = vsel %vm324, %v3309, 0
  %v3393 = vsel %vm324, %v3312, 0
  %v3396 = vsel %vm324, %v3315, 0
  %v3399 = vsel %vm324, %v3318, 0
  %v3402 = vsel %vm324, %v3321, 0
  %v3405 = vsel %vm324, %v3324, 0
  %v3408 = vsel %vm324, %v3327, 0
  %3410 = vmatprep.subr.mxu0 0.0
  %3411 = vmatpush1.msra.mxu0 %v3328
  %3412 = vmatprep.subr.mxu0 0.0
  %3413 = vmatpush1.msra.mxu0 %v3329
  %3414 = vmatprep.subr.mxu0 0.0
  %3415 = vmatpush1.msra.mxu0 %v3330
  %3416 = vmatprep.subr.mxu0 0.0
  %3417 = vmatpush1.msra.mxu0 %v3331
  %3418 = vmatprep.subr.mxu0 0.0
  %3419 = vmatpush1.msra.mxu0 %v3332
  %3420 = vmatprep.subr.mxu0 0.0
  %3421 = vmatpush1.msra.mxu0 %v3333
  %3422 = vmatprep.subr.mxu0 0.0
  %3423 = vmatpush1.msra.mxu0 %v3334
  %3424 = vmatprep.subr.mxu0 0.0
  %3425 = vmatpush1.msra.mxu0 %v3335
  %3426 = vmatprep.subr.mxu0 0.0
  %3427 = vmatpush1.msra.mxu0 %v3336
  %3428 = vmatprep.subr.mxu0 0.0
  %3429 = vmatpush1.msra.mxu0 %v3337
  %3430 = vmatprep.subr.mxu0 0.0
  %3431 = vmatpush1.msra.mxu0 %v3338
  %3432 = vmatprep.subr.mxu0 0.0
  %3433 = vmatpush1.msra.mxu0 %v3339
  %3434 = vmatprep.subr.mxu0 0.0
  %3435 = vmatpush1.msra.mxu0 %v3340
  %3436 = vmatprep.subr.mxu0 0.0
  %3437 = vmatpush1.msra.mxu0 %v3341
  %3438 = vmatprep.subr.mxu0 0.0
  %3439 = vmatpush1.msra.mxu0 %v3342
  %3440 = vmatprep.subr.mxu0 0.0
  %3441 = vmatpush1.msra.mxu0 %v3343
  %3442 = vmatprep.subr.mxu0 0.0
  %3443 = vmatpush1.msra.mxu0 %v3344
  %3444 = vmatprep.subr.mxu0 0.0
  %3445 = vmatpush1.msra.mxu0 %v3345
  %3446 = vmatprep.subr.mxu0 0.0
  %3447 = vmatpush1.msra.mxu0 %v3346
  %3448 = vmatprep.subr.mxu0 0.0
  %3449 = vmatpush1.msra.mxu0 %v3347
  %3450 = vmatprep.subr.mxu0 0.0
  %3451 = vmatpush1.msra.mxu0 %v3348
  %3452 = vmatprep.subr.mxu0 0.0
  %3453 = vmatpush1.msra.mxu0 %v3349
  %3454 = vmatprep.subr.mxu0 0.0
  %3455 = vmatpush1.msra.mxu0 %v3350
  %3456 = vmatprep.subr.mxu0 0.0
  %3457 = vmatpush1.msra.mxu0 %v3351
  %3458 = vmatprep.subr.mxu0 0.0
  %3459 = vmatpush1.msra.mxu0 %v3352
  %3460 = vmatprep.subr.mxu0 0.0
  %3461 = vmatpush1.msra.mxu0 %v3353
  %3462 = vmatprep.subr.mxu0 0.0
  %3463 = vmatpush1.msra.mxu0 %v3354
  %3464 = vmatprep.subr.mxu0 0.0
  %3465 = vmatpush1.msra.mxu0 %v3355
  %3466 = vmatprep.subr.mxu0 0.0
  %3467 = vmatpush1.msra.mxu0 %v3356
  %3468 = vmatprep.subr.mxu0 0.0
  %3469 = vmatpush1.msra.mxu0 %v3357
  %3470 = vmatprep.subr.mxu0 0.0
  %3471 = vmatpush1.msra.mxu0 %v3358
  %3472 = vmatprep.subr.mxu0 0.0
  %3473 = vmatpush1.msra.mxu0 %v3359
  %3474 = vmatprep.mubr.f32.mxu0 %v3290
  %3475 = vmatmul.mubr.f32.gmra.mrb[0].mxu0 %v3289
  %v3476 = vpop.f32.mrb[0].mxu0
  %v3477 = vadd.f32 %v3369, %v3476
  %v3478 = vpop.f32.mrb[0].mxu0
  %3479 = vmatprep.mubr.f32.mxu0 %v3293
  %3480 = vmatmul.mubr.f32.gmra.mrb[0].mxu0 %v3292
  %v3481 = vpop.f32.mrb[0].mxu0
  %v3482 = vadd.f32 %v3369, %v3481
  %v3483 = vpop.f32.mrb[0].mxu0
  %3484 = vmatprep.mubr.f32.mxu0 %v3296
  %3485 = vmatmul.mubr.f32.gmra.mrb[0].mxu0 %v3295
  %v3486 = vpop.f32.mrb[0].mxu0
  %v3487 = vadd.f32 %v3369, %v3486
  %v3488 = vpop.f32.mrb[0].mxu0
  %3489 = vmatprep.mubr.f32.mxu0 %v3299
  %3490 = vmatmul.mubr.f32.gmra.mrb[0].mxu0 %v3298
  %v3491 = vpop.f32.mrb[0].mxu0
  %v3492 = vpop.f32.mrb[0].mxu0
  %3493 = vmatprep.mubr.f32.mxu0 %v3302
  %3494 = vmatmul.mubr.f32.gmra.mrb[0].mxu0 %v3301
  %v3495 = vpop.f32.mrb[0].mxu0
  %v3496 = vpop.f32.mrb[0].mxu0
  %3497 = vmatprep.mubr.f32.mxu0 %v3305
  %3498 = vmatmul.mubr.f32.gmra.mrb[0].mxu0 %v3304
  %v3499 = vpop.f32.mrb[0].mxu0
  %v3500 = vpop.f32.mrb[0].mxu0
  %3501 = vmatprep.mubr.f32.mxu0 %v3308
  %3502 = vmatmul.mubr.f32.gmra.mrb[0].mxu0 %v3307
  %v3503 = vpop.f32.mrb[0].mxu0
  %v3504 = vpop.f32.mrb[0].mxu0
  %3505 = vmatprep.mubr.f32.mxu0 %v3311
  %3506 = vmatmul.mubr.f32.gmra.mrb[0].mxu0 %v3310
  %v3507 = vpop.f32.mrb[0].mxu0
  %v3508 = vpop.f32.mrb[0].mxu0
  %3509 = vmatprep.mubr.f32.mxu0 %v3314
  %3510 = vmatmul.mubr.f32.gmra.mrb[0].mxu0 %v3313
  %v3511 = vpop.f32.mrb[0].mxu0
  %v3512 = vpop.f32.mrb[0].mxu0
  %3513 = vmatprep.mubr.f32.mxu0 %v3317
  %3514 = vmatmul.mubr.f32.gmra.mrb[0].mxu0 %v3316
  %v3515 = vpop.f32.mrb[0].mxu0
  %v3516 = vpop.f32.mrb[0].mxu0
  %3517 = vmatprep.mubr.f32.mxu0 %v3320
  %3518 = vmatmul.mubr.f32.gmra.mrb[0].mxu0 %v3319
  %v3519 = vpop.f32.mrb[0].mxu0
  %v3520 = vadd.f32 %v3369, %v3519
  %v3521 = vpop.f32.mrb[0].mxu0
  %3522 = vmatprep.mubr.f32.mxu0 %v3323
  %3523 = vmatmul.mubr.f32.gmra.mrb[0].mxu0 %v3322
  %v3524 = vpop.f32.mrb[0].mxu0
  %v3525 = vadd.f32 %v3369, %v3524
  %v3526 = vpop.f32.mrb[0].mxu0
  %3527 = vmatprep.mubr.f32.mxu0 %v3326
  %3528 = vmatmul.mubr.f32.gmra.mrb[0].mxu0 %v3325
  %v3529 = vpop.f32.mrb[0].mxu0
  %v3530 = vadd.f32 %v3369, %v3529
  %v3531 = vpop.f32.mrb[0].mxu0
  %3532 = vdwg.mxu0
  %3533 = vmatprep.subr.mxu0 0.0
  %3534 = vmatpush1.msra.mxu0 %v3360
  %3535 = vmatprep.subr.mxu0 0.0
  %3536 = vmatpush1.msra.mxu0 %v3361
  %3537 = vmatprep.subr.mxu0 0.0
  %3538 = vmatpush1.msra.mxu0 %v3362
  %3539 = vmatprep.subr.mxu0 0.0
  %3540 = vmatpush1.msra.mxu0 %v3363
  %3541 = vmatprep.subr.mxu0 0.0
  %3542 = vmatpush1.msra.mxu0 0.0
  %3543 = vmatprep.subr.mxu0 0.0
  %3544 = vmatpush1.msra.mxu0 0.0
  %3545 = vmatprep.subr.mxu0 0.0
  %3546 = vmatpush1.msra.mxu0 0.0
  %3547 = vmatprep.subr.mxu0 0.0
  %3548 = vmatpush1.msra.mxu0 0.0
  %3549 = vmatprep.subr.mxu0 0.0
  %3550 = vmatpush1.msra.mxu0 0.0
  %3551 = vmatprep.subr.mxu0 0.0
  %3552 = vmatpush1.msra.mxu0 0.0
  %3553 = vmatprep.subr.mxu0 0.0
  %3554 = vmatpush1.msra.mxu0 0.0
  %3555 = vmatprep.subr.mxu0 0.0
  %3556 = vmatpush1.msra.mxu0 0.0
  %3557 = vmatprep.subr.mxu0 0.0
  %3558 = vmatpush1.msra.mxu0 0.0
  %3559 = vmatprep.subr.mxu0 0.0
  %3560 = vmatpush1.msra.mxu0 0.0
  %3561 = vmatprep.subr.mxu0 0.0
  %3562 = vmatpush1.msra.mxu0 0.0
  %3563 = vmatprep.subr.mxu0 0.0
  %3564 = vmatpush1.msra.mxu0 0.0
  %3565 = vmatprep.subr.mxu0 0.0
  %3566 = vmatpush1.msra.mxu0 0.0
  %3567 = vmatprep.subr.mxu0 0.0
  %3568 = vmatpush1.msra.mxu0 0.0
  %3569 = vmatprep.subr.mxu0 0.0
  %3570 = vmatpush1.msra.mxu0 0.0
  %3571 = vmatprep.subr.mxu0 0.0
  %3572 = vmatpush1.msra.mxu0 0.0
  %3573 = vmatprep.subr.mxu0 0.0
  %3574 = vmatpush1.msra.mxu0 0.0
  %3575 = vmatprep.subr.mxu0 0.0
  %3576 = vmatpush1.msra.mxu0 0.0
  %3577 = vmatprep.subr.mxu0 0.0
  %3578 = vmatpush1.msra.mxu0 0.0
  %3579 = vmatprep.subr.mxu0 0.0
  %3580 = vmatpush1.msra.mxu0 0.0
  %3581 = vmatprep.subr.mxu0 0.0
  %3582 = vmatpush1.msra.mxu0 0.0
  %3583 = vmatprep.subr.mxu0 0.0
  %3584 = vmatpush1.msra.mxu0 0.0
  %3585 = vmatprep.subr.mxu0 0.0
  %3586 = vmatpush1.msra.mxu0 0.0
  %3587 = vmatprep.subr.mxu0 0.0
  %3588 = vmatpush1.msra.mxu0 0.0
  %3589 = vmatprep.subr.mxu0 0.0
  %3590 = vmatpush1.msra.mxu0 0.0
  %3591 = vmatprep.subr.mxu0 0.0
  %3592 = vmatpush1.msra.mxu0 0.0
  %3593 = vmatprep.subr.mxu0 0.0
  %3594 = vmatpush1.msra.mxu0 0.0
  %3595 = vmatprep.subr.mxu0 0.0
  %3596 = vmatpush1.msra.mxu0 0.0
  %3597 = vmatprep.mubr.f32.mxu0 0.0
  %3598 = vmatmul.mubr.f32.gmra.mrb[0].mxu0 %v3372
  %v3599 = vpop.f32.mrb[0].mxu0
  %v3600 = vadd.f32 %v3477, %v3599
  %v3601 = vpop.f32.mrb[0].mxu0
  %3602 = vmatprep.mubr.f32.mxu0 0.0
  %3603 = vmatmul.mubr.f32.gmra.mrb[0].mxu0 %v3375
  %v3604 = vpop.f32.mrb[0].mxu0
  %v3605 = vadd.f32 %v3482, %v3604
  %v3606 = vpop.f32.mrb[0].mxu0
  %3607 = vmatprep.mubr.f32.mxu0 0.0
  %3608 = vmatmul.mubr.f32.gmra.mrb[0].mxu0 %v3378
  %v3609 = vpop.f32.mrb[0].mxu0
  %v3610 = vadd.f32 %v3487, %v3609
  %v3611 = vpop.f32.mrb[0].mxu0
  %3612 = vmatprep.mubr.f32.mxu0 0.0
  %3613 = vmatmul.mubr.f32.gmra.mrb[0].mxu0 %v3381
  %v3614 = vpop.f32.mrb[0].mxu0
  %v3615 = vpop.f32.mrb[0].mxu0
  %3616 = vmatprep.mubr.f32.mxu0 0.0
  %3617 = vmatmul.mubr.f32.gmra.mrb[0].mxu0 %v3384
  %v3618 = vpop.f32.mrb[0].mxu0
  %v3619 = vpop.f32.mrb[0].mxu0
  %3620 = vmatprep.mubr.f32.mxu0 0.0
  %3621 = vmatmul.mubr.f32.gmra.mrb[0].mxu0 %v3387
  %v3622 = vpop.f32.mrb[0].mxu0
  %v3623 = vpop.f32.mrb[0].mxu0
  %3624 = vmatprep.mubr.f32.mxu0 0.0
  %3625 = vmatmul.mubr.f32.gmra.mrb[0].mxu0 %v3390
  %v3626 = vpop.f32.mrb[0].mxu0
  %v3627 = vpop.f32.mrb[0].mxu0
  %3628 = vmatprep.mubr.f32.mxu0 0.0
  %3629 = vmatmul.mubr.f32.gmra.mrb[0].mxu0 %v3393
  %v3630 = vpop.f32.mrb[0].mxu0
  %v3631 = vpop.f32.mrb[0].mxu0
  %3632 = vmatprep.mubr.f32.mxu0 0.0
  %3633 = vmatmul.mubr.f32.gmra.mrb[0].mxu0 %v3396
  %v3634 = vpop.f32.mrb[0].mxu0
  %v3635 = vpop.f32.mrb[0].mxu0
  %3636 = vmatprep.mubr.f32.mxu0 0.0
  %3637 = vmatmul.mubr.f32.gmra.mrb[0].mxu0 %v3399
  %v3638 = vpop.f32.mrb[0].mxu0
  %v3639 = vpop.f32.mrb[0].mxu0
  %3640 = vmatprep.mubr.f32.mxu0 0.0
  %3641 = vmatmul.mubr.f32.gmra.mrb[0].mxu0 %v3402
  %v3642 = vpop.f32.mrb[0].mxu0
  %v3643 = vadd.f32 %v3520, %v3642
  %v3644 = vpop.f32.mrb[0].mxu0
  %3645 = vmatprep.mubr.f32.mxu0 0.0
  %3646 = vmatmul.mubr.f32.gmra.mrb[0].mxu0 %v3405
  %v3647 = vpop.f32.mrb[0].mxu0
  %v3648 = vadd.f32 %v3525, %v3647
  %v3649 = vpop.f32.mrb[0].mxu0
  %3650 = vmatprep.mubr.f32.mxu0 0.0
  %3651 = vmatmul.mubr.f32.gmra.mrb[0].mxu0 %v3408
  %v3652 = vpop.f32.mrb[0].mxu0
  %v3653 = vadd.f32 %v3530, %v3652
  %v3654 = vpop.f32.mrb[0].mxu0
  %3655 = vdwg.mxu0
  %v3656 = vmax.f32 %v3600, 0.0
  %v3657 = vmax.f32 %v3605, 0.0
  %v3658 = vmax.f32 %v3610, 0.0
  %v3659 = vmax.f32 %v3643, 0.0
  %v3660 = vmax.f32 %v3648, 0.0
  %v3661 = vmax.f32 %v3653, 0.0
  %3662 = vst.msk [vmem:[%s9] sm:$0xff] %vm324, %v3656
  %3663 = vst.msk [vmem:[%s9 + $0x8] sm:$0xff] %vm324, %v3657
  %vm3664 = vcmask 258048
  %3665 = vst.msk [vmem:[%s9 + $0x10] sm:$0x1f] %vm3664, %v3658
  %s3666 = scalar_lea.vmem %s9, 24
  %vm3667 = vcmask 261121
  %3668 = vst.msk [vmem:[%s3666 - $0x1] sm:$0xfe] %vm3667, %v3659
  %3669 = vst.msk [vmem:[%s3666 + $0x7] sm:$0xff] %vm324, %v3660
  %3670 = vst.msk [vmem:[%s3666 + $0xf] sm:$0x3f] %vm382, %v3661
  // Predicated region
  $region38: #{critic_forward.2} parent=0 // pred_check
    _
  $region39: #{critic_forward.2} parent=0 // pred_check_branch
    %3672 = sbr.rel (0) target = $region41
  $region40: #{critic_forward.2} parent=0 // pred_region
    _
  $region41: #{critic_forward.2} parent=0 // pred_fallthru
    _
  // Predicated region
  $region42: #{critic_forward.2} parent=0 // pred_check
    _
  $region43: #{critic_forward.2} parent=0 // pred_check_branch
    %3674 = sbr.rel (0) target = $region45
  $region44: #{critic_forward.2} parent=0 // pred_region
    _
  $region45: #{critic_forward.2} parent=0 // pred_fallthru
    _

</llo_original>
